<compile_context>
chip_gen: v6e
topology: v6e:2x2x1
jax: 0.10.0
libtpu: 0.0.40
codegen_flags: <defaults>
</compile_context>

<pallas_src>
from functools import partial

import jax
import jax.numpy as jnp
from jax.experimental import pallas as pl
from jax.experimental.pallas import tpu as pltpu


# ---------------------------------------------------------------------------
# Fused Pallas kernel: all layers, both directions, FC epilogue
# ---------------------------------------------------------------------------
def fused_rnn_kernel(*refs, T, B, H, n_layers, bidirectional, n_pp):
    """Ref layout (inputs, output, scratch — must match the wrapper):

      refs[0]              length  (B, 1)  int32      (B is already sublane-padded)
      refs[1]              x       (T*B, E) f32       row t*B + b = token t of seq b
      per layer l:         wih_f (Din,H), whh_f (H,H), b_f (1,H)
                           [wih_b (Din,H), whh_b (H,H), b_b (1,H)]  if bidir
      fc_w (num_dir*H, O), fc_b (1, O)
      out  (B, O)
      scratch: xw_f (T*B,H), [xw_b (T*B,H)],
               then n_pp ping-pong activation buffers per direction (T*B, H)
    """
    f32 = jnp.float32
    idx = 0
    len_ref = refs[idx]; idx += 1
    x_ref = refs[idx]; idx += 1

    layers = []
    for _ in range(n_layers):
        if bidirectional:
            layers.append(tuple(refs[idx:idx + 6])); idx += 6
        else:
            wih_f, whh_f, b_f = refs[idx:idx + 3]; idx += 3
            layers.append((wih_f, whh_f, b_f, None, None, None))

    fc_w_ref = refs[idx]; fc_b_ref = refs[idx + 1]; idx += 2
    out_ref = refs[idx]; idx += 1

    xw_f_ref = refs[idx]; idx += 1
    xw_b_ref = None
    if bidirectional:
        xw_b_ref = refs[idx]; idx += 1
    act_f, act_b = [], []
    for _ in range(n_pp):
        act_f.append(refs[idx]); idx += 1
        if bidirectional:
            act_b.append(refs[idx]); idx += 1

    lenb = len_ref[...]                       # (B, 1) int32 — mask source

    h_f = jnp.zeros((B, H), f32)
    h_b = jnp.zeros((B, H), f32)

    for l in range(n_layers):
        wih_f_r, whh_f_r, b_f_r, wih_b_r, whh_b_r, b_b_r = layers[l]

        # ---- hoisted input projection: one/two big (T*B, Din) matmuls ------
        if l == 0:
            x2d = x_ref[...]                                    # (T*B, E)
            pf = jnp.dot(x2d, wih_f_r[...],
                         preferred_element_type=f32) + b_f_r[...]
            if bidirectional:
                pb = jnp.dot(x2d, wih_b_r[...],
                             preferred_element_type=f32) + b_b_r[...]
        else:
            src_f = act_f[(l - 1) % n_pp][...]                  # (T*B, H)
            if bidirectional:
                src_b = act_b[(l - 1) % n_pp][...]              # (T*B, H)
                # input = concat(out_f, out_b); realized by splitting W rows
                pf = (jnp.dot(src_f, wih_f_r[0:H, :], preferred_element_type=f32)
                      + jnp.dot(src_b, wih_f_r[H:2 * H, :], preferred_element_type=f32)
                      + b_f_r[...])
                pb = (jnp.dot(src_f, wih_b_r[0:H, :], preferred_element_type=f32)
                      + jnp.dot(src_b, wih_b_r[H:2 * H, :], preferred_element_type=f32)
                      + b_b_r[...])
            else:
                pf = jnp.dot(src_f, wih_f_r[...],
                             preferred_element_type=f32) + b_f_r[...]
        xw_f_ref[...] = pf
        if bidirectional:
            xw_b_ref[...] = pb

        # ---- hoist recurrent weights into vregs -----------------------------
        whh_f_v = whh_f_r[...]
        if bidirectional:
            whh_b_v = whh_b_r[...]

        write_out = l < (n_layers - 1)
        if write_out:
            dst_f = act_f[l % n_pp]
            if bidirectional:
                dst_b = act_b[l % n_pp]

        h_f = jnp.zeros((B, H), f32)
        if bidirectional:
            h_b = jnp.zeros((B, H), f32)

        # ---- serial recurrence, fully unrolled (T is static) ---------------
        # Every row slice below starts at t*B with B a multiple of 8, so loads
        # and stores are sublane-aligned (no masked partial accesses).
        for step in range(T):
            tf = step
            rs = tf * B
            h_f_new = jnp.tanh(
                xw_f_ref[rs:rs + B, :]
                + jnp.dot(h_f, whh_f_v, preferred_element_type=f32))
            m_f = lenb > tf                                     # (B, 1) bool
            h_f = jnp.where(m_f, h_f_new, h_f)                  # freeze past end
            if write_out:
                dst_f[rs:rs + B, :] = jnp.where(m_f, h_f_new, 0.0)

            if bidirectional:
                tb = T - 1 - step
                rb = tb * B
                h_b_new = jnp.tanh(
                    xw_b_ref[rb:rb + B, :]
                    + jnp.dot(h_b, whh_b_v, preferred_element_type=f32))
                m_b = lenb > tb
                h_b = jnp.where(m_b, h_b_new, h_b)
                if write_out:
                    dst_b[rb:rb + B, :] = jnp.where(m_b, h_b_new, 0.0)

    # ---- FC epilogue: hidden = cat(h_f, h_b) via split weight rows ----------
    pred = jnp.dot(h_f, fc_w_ref[0:H, :],
                   preferred_element_type=f32) + fc_b_ref[...]
    if bidirectional:
        pred = pred + jnp.dot(h_b, fc_w_ref[H:2 * H, :],
                              preferred_element_type=f32)
    out_ref[...] = pred


# ---------------------------------------------------------------------------
# Wrapper
# ---------------------------------------------------------------------------
_VMEM = pl.BlockSpec(memory_space=pltpu.MemorySpace.VMEM)


def rnn_forward(params, ids, length, *, n_layers, bidirectional):
    """Full forward pass matching the PyTorch module in eval mode."""
    B, T = ids.shape
    H = params["layers"][0]["whh_f"].shape[0]
    out_dim = params["fc_w_t"].shape[1]

    # Embedding lookup + dropout (identity in eval).
    # TODO(synk): embedding gather stays in plain JAX (data-dependent gather,
    #             no hot-path matmul here).
    embedded = jnp.take(params["embedding"], ids, axis=0)            # (B, T, E)

    # Pad batch to a multiple of 8 so every per-step sublane slice in the
    # kernel is aligned.  Padded rows get length 0 -> frozen at zero.
    Bp = max(8, ((B + 7) // 8) * 8)
    pad = Bp - B

    x_tbe = jnp.transpose(embedded, (1, 0, 2)).astype(jnp.float32)   # (T, B, E)
    if pad:
        x_tbe = jnp.pad(x_tbe, ((0, 0), (0, pad), (0, 0)))
    x_tb = x_tbe.reshape(T * Bp, -1)                                 # (T*Bp, E)

    len_b1 = length.astype(jnp.int32).reshape(B, 1)
    if pad:
        len_b1 = jnp.pad(len_b1, ((0, pad), (0, 0)))                 # (Bp, 1)

    args = [len_b1, x_tb]
    for l in range(n_layers):
        lp = params["layers"][l]
        args += [lp["wih_f"], lp["whh_f"], lp["b_f"]]
        if bidirectional:
            args += [lp["wih_b"], lp["whh_b"], lp["b_b"]]
    args += [params["fc_w_t"], params["fc_b"]]

    n_pp = 0 if n_layers == 1 else min(2, n_layers - 1)   # ping-pong act bufs
    scratch_shapes = [pltpu.VMEM((T * Bp, H), jnp.float32)]            # xw_f
    if bidirectional:
        scratch_shapes.append(pltpu.VMEM((T * Bp, H), jnp.float32))    # xw_b
    for _ in range(n_pp):
        scratch_shapes.append(pltpu.VMEM((T * Bp, H), jnp.float32))    # act_f[i]
        if bidirectional:
            scratch_shapes.append(pltpu.VMEM((T * Bp, H), jnp.float32))  # act_b[i]

    kernel = partial(fused_rnn_kernel, T=T, B=Bp, H=H,
                     n_layers=n_layers, bidirectional=bidirectional, n_pp=n_pp)

    out = pl.pallas_call(
        kernel,
        out_shape=jax.ShapeDtypeStruct((Bp, out_dim), jnp.float32),
        in_specs=[_VMEM] * len(args),
        out_specs=_VMEM,
        scratch_shapes=scratch_shapes,
    )(*args)
    return out[:B]


# ---------------------------------------------------------------------------
# Pure-JAX reference (same math, used only for the correctness assert)
# ---------------------------------------------------------------------------
def rnn_reference(params, ids, length, *, n_layers, bidirectional):
    B, T = ids.shape
    H = params["layers"][0]["whh_f"].shape[0]
    emb = jnp.take(params["embedding"], ids, axis=0).astype(jnp.float32)
    x = jnp.transpose(emb, (1, 0, 2))                                  # (T,B,E)
    mask = (jnp.arange(T)[:, None] < length[None, :]).astype(jnp.float32)

    h_f = h_b = None
    for l in range(n_layers):
        lp = params["layers"][l]

        def run_dir(wih_t, whh_t, b, reverse):
            h = jnp.zeros((B, H), jnp.float32)
            outs = [None] * T
            order = range(T - 1, -1, -1) if reverse else range(T)
            for t in order:
                h_new = jnp.tanh(x[t] @ wih_t + h @ whh_t + b)
                m = mask[t][:, None]
                h = m * h_new + (1.0 - m) * h
                outs[t] = m * h_new
            return jnp.stack(outs, axis=0), h

        out_f, h_f = run_dir(lp["wih_f"], lp["whh_f"], lp["b_f"], False)
        if bidirectional:
            out_b, h_b = run_dir(lp["wih_b"], lp["whh_b"], lp["b_b"], True)
            x = jnp.concatenate([out_f, out_b], axis=-1)
        else:
            x = out_f

    hidden = jnp.concatenate([h_f, h_b], axis=-1) if bidirectional else h_f
    return hidden @ params["fc_w_t"] + params["fc_b"]


# ---------------------------------------------------------------------------
# Deterministic parameter construction (shapes follow the PyTorch __init__)
# ---------------------------------------------------------------------------
def init_params(key, vocab_size, embedding_dim, hidden_dim, output_dim,
                n_layers, bidirectional, pad_index):
    num_dir = 2 if bidirectional else 1
    k_emb, k_fc, k_rnn = jax.random.split(key, 3)

    emb = 0.1 * jax.random.normal(k_emb, (vocab_size, embedding_dim), jnp.float32)
    emb = emb.at[pad_index].set(0.0)           # padding_idx row is zero

    bound = 1.0 / jnp.sqrt(hidden_dim)
    dir_keys = jax.random.split(k_rnn, n_layers * num_dir)
    layers = []
    ki = 0
    for l in range(n_layers):
        in_dim = embedding_dim if l == 0 else hidden_dim * num_dir
        layer = {}
        for tag in ["f", "b"][:num_dir]:
            k1, k2, k3, k4 = jax.random.split(dir_keys[ki], 4); ki += 1
            w_ih = jax.random.uniform(k1, (hidden_dim, in_dim), jnp.float32,
                                      -bound, bound)
            w_hh = jax.random.uniform(k2, (hidden_dim, hidden_dim), jnp.float32,
                                      -bound, bound)
            b_ih = jax.random.uniform(k3, (hidden_dim,), jnp.float32, -bound, bound)
            b_hh = jax.random.uniform(k4, (hidden_dim,), jnp.float32, -bound, bound)
            layer["wih_" + tag] = w_ih.T                              # (in_dim, H)
            layer["whh_" + tag] = w_hh.T                              # (H, H)
            layer["b_" + tag] = (b_ih + b_hh).reshape(1, hidden_dim)  # (1, H)
        layers.append(layer)

    fc_in = hidden_dim * num_dir
    fbound = 1.0 / jnp.sqrt(fc_in)
    kf1, kf2 = jax.random.split(k_fc)
    w_fc = jax.random.uniform(kf1, (output_dim, fc_in), jnp.float32,
                              -fbound, fbound)
    b_fc = jax.random.uniform(kf2, (output_dim,), jnp.float32, -fbound, fbound)

    return {"embedding": emb, "layers": layers,
            "fc_w_t": w_fc.T, "fc_b": b_fc.reshape(1, output_dim)}


# ---------------------------------------------------------------------------
if __name__ == "__main__":
    vocab_size = 50
    embedding_dim = 16
    hidden_dim = 32
    output_dim = 4
    n_layers = 2
    bidirectional = True
    dropout_rate = 0.0          # eval mode -> dropout is identity anyway
    pad_index = 0

    B, T = 2, 8
    key = jax.random.PRNGKey(0)
    kp, kid = jax.random.split(key)

    params = init_params(kp, vocab_size, embedding_dim, hidden_dim, output_dim,
                         n_layers, bidirectional, pad_index)

    length = jnp.array([8, 5], dtype=jnp.int32)
    ids = jax.random.randint(kid, (B, T), 1, vocab_size, dtype=jnp.int32)
    # zero-out (pad) positions beyond each sequence's length
    valid = jnp.arange(T, dtype=jnp.int32)[None, :] < length[:, None]
    ids = jnp.where(valid, ids, pad_index)

    prediction = rnn_forward(params, ids, length,
                             n_layers=n_layers, bidirectional=bidirectional)
    prediction = jax.block_until_ready(prediction)

    ref = rnn_reference(params, ids, length,
                        n_layers=n_layers, bidirectional=bidirectional)
    ref = jax.block_until_ready(ref)

    assert prediction.shape == (B, output_dim)
    assert jnp.all(jnp.isfinite(prediction))
    assert jnp.allclose(prediction, ref, atol=1e-4, rtol=1e-4)
    print("KERNEL_OK")
</pallas_src>

<mosaic_0001>
module attributes {stable_mosaic.version = 11 : i64} {
  func.func @fused_rnn_kernel(%arg0: memref<8x1xi32, #tpu.memory_space<vmem>>, %arg1: memref<64x16xf32, #tpu.memory_space<vmem>>, %arg2: memref<16x32xf32, #tpu.memory_space<vmem>>, %arg3: memref<32x32xf32, #tpu.memory_space<vmem>>, %arg4: memref<1x32xf32, #tpu.memory_space<vmem>>, %arg5: memref<16x32xf32, #tpu.memory_space<vmem>>, %arg6: memref<32x32xf32, #tpu.memory_space<vmem>>, %arg7: memref<1x32xf32, #tpu.memory_space<vmem>>, %arg8: memref<64x32xf32, #tpu.memory_space<vmem>>, %arg9: memref<32x32xf32, #tpu.memory_space<vmem>>, %arg10: memref<1x32xf32, #tpu.memory_space<vmem>>, %arg11: memref<64x32xf32, #tpu.memory_space<vmem>>, %arg12: memref<32x32xf32, #tpu.memory_space<vmem>>, %arg13: memref<1x32xf32, #tpu.memory_space<vmem>>, %arg14: memref<64x4xf32, #tpu.memory_space<vmem>>, %arg15: memref<1x4xf32, #tpu.memory_space<vmem>>, %arg16: memref<8x4xf32, #tpu.memory_space<vmem>>, %arg17: memref<64x32xf32, #tpu.memory_space<vmem>>, %arg18: memref<64x32xf32, #tpu.memory_space<vmem>>, %arg19: memref<64x32xf32, #tpu.memory_space<vmem>>, %arg20: memref<64x32xf32, #tpu.memory_space<vmem>>) attributes {dimension_semantics = [], scalar_prefetch = 0 : i64, scratch_operands = 4 : i64, tpu.core_type = #tpu.core_type<tc>} {
    %c0 = arith.constant 0 : index
    %c0_0 = arith.constant 0 : index
    %0 = vector.load %arg0[%c0, %c0_0] : memref<8x1xi32, #tpu.memory_space<vmem>>, vector<8x1xi32>
    %c0_1 = arith.constant 0 : index
    %c0_2 = arith.constant 0 : index
    %1 = vector.load %arg1[%c0_1, %c0_2] : memref<64x16xf32, #tpu.memory_space<vmem>>, vector<64x16xf32>
    %c0_3 = arith.constant 0 : index
    %c0_4 = arith.constant 0 : index
    %2 = vector.load %arg2[%c0_3, %c0_4] : memref<16x32xf32, #tpu.memory_space<vmem>>, vector<16x32xf32>
    %cst = arith.constant dense<0.000000e+00> : vector<64x32xf32>
    %3 = tpu.matmul %1, %2, %cst {dimension_numbers = #tpu.dot_dimension_numbers<[1], [0], [0], [1], [0, 0, 1, 1], [], []>} : vector<64x16xf32>, vector<16x32xf32>, vector<64x32xf32> -> vector<64x32xf32>
    %c0_5 = arith.constant 0 : index
    %c0_6 = arith.constant 0 : index
    %4 = vector.load %arg4[%c0_5, %c0_6] : memref<1x32xf32, #tpu.memory_space<vmem>>, vector<1x32xf32>
    %5 = vector.broadcast %4 : vector<1x32xf32> to vector<64x32xf32>
    %6 = arith.addf %3, %5 : vector<64x32xf32>
    %c0_7 = arith.constant 0 : index
    %c0_8 = arith.constant 0 : index
    %7 = vector.load %arg5[%c0_7, %c0_8] : memref<16x32xf32, #tpu.memory_space<vmem>>, vector<16x32xf32>
    %cst_9 = arith.constant dense<0.000000e+00> : vector<64x32xf32>
    %8 = tpu.matmul %1, %7, %cst_9 {dimension_numbers = #tpu.dot_dimension_numbers<[1], [0], [0], [1], [0, 0, 1, 1], [], []>} : vector<64x16xf32>, vector<16x32xf32>, vector<64x32xf32> -> vector<64x32xf32>
    %c0_10 = arith.constant 0 : index
    %c0_11 = arith.constant 0 : index
    %9 = vector.load %arg7[%c0_10, %c0_11] : memref<1x32xf32, #tpu.memory_space<vmem>>, vector<1x32xf32>
    %10 = vector.broadcast %9 : vector<1x32xf32> to vector<64x32xf32>
    %11 = arith.addf %8, %10 : vector<64x32xf32>
    %c0_12 = arith.constant 0 : index
    %c0_13 = arith.constant 0 : index
    %12 = vector.load %arg17[%c0_12, %c0_13] : memref<64x32xf32, #tpu.memory_space<vmem>>, vector<64x32xf32>
    tpu.vector_store %arg17[%c0_12, %c0_13], %6 {strides = array<i32>} : memref<64x32xf32, #tpu.memory_space<vmem>>, vector<64x32xf32>,
    %c0_14 = arith.constant 0 : index
    %c0_15 = arith.constant 0 : index
    %13 = vector.load %arg18[%c0_14, %c0_15] : memref<64x32xf32, #tpu.memory_space<vmem>>, vector<64x32xf32>
    tpu.vector_store %arg18[%c0_14, %c0_15], %11 {strides = array<i32>} : memref<64x32xf32, #tpu.memory_space<vmem>>, vector<64x32xf32>,
    %c0_16 = arith.constant 0 : index
    %c0_17 = arith.constant 0 : index
    %14 = vector.load %arg3[%c0_16, %c0_17] : memref<32x32xf32, #tpu.memory_space<vmem>>, vector<32x32xf32>
    %c0_18 = arith.constant 0 : index
    %c0_19 = arith.constant 0 : index
    %15 = vector.load %arg6[%c0_18, %c0_19] : memref<32x32xf32, #tpu.memory_space<vmem>>, vector<32x32xf32>
    %cst_20 = arith.constant 0.000000e+00 : f32
    %16 = vector.broadcast %cst_20 : f32 to vector<8x32xf32>
    %cst_21 = arith.constant 0.000000e+00 : f32
    %17 = vector.broadcast %cst_21 : f32 to vector<8x32xf32>
    %c0_22 = arith.constant 0 : index
    %c0_23 = arith.constant 0 : index
    %18 = vector.load %arg17[%c0_22, %c0_23] : memref<64x32xf32, #tpu.memory_space<vmem>>, vector<8x32xf32>
    %cst_24 = arith.constant dense<0.000000e+00> : vector<8x32xf32>
    %19 = tpu.matmul %16, %14, %cst_24 {dimension_numbers = #tpu.dot_dimension_numbers<[1], [0], [0], [1], [0, 0, 1, 1], [], []>} : vector<8x32xf32>, vector<32x32xf32>, vector<8x32xf32> -> vector<8x32xf32>
    %20 = arith.addf %18, %19 : vector<8x32xf32>
    %21 = math.tanh %20 : vector<8x32xf32>
    %c0_i32 = arith.constant 0 : i32
    %22 = vector.broadcast %c0_i32 : i32 to vector<8x1xi32>
    %23 = arith.cmpi sgt, %0, %22 : vector<8x1xi32>
    %24 = vector.shape_cast %23 : vector<8x1xi1> to vector<8x1xi1>
    %25 = vector.broadcast %24 : vector<8x1xi1> to vector<8x32xi1>
    %26 = arith.select %25, %21, %16 : vector<8x32xi1>, vector<8x32xf32>
    %cst_25 = arith.constant 0.000000e+00 : f32
    %27 = vector.shape_cast %23 : vector<8x1xi1> to vector<8x1xi1>
    %28 = vector.broadcast %27 : vector<8x1xi1> to vector<8x32xi1>
    %29 = vector.broadcast %cst_25 : f32 to vector<8x32xf32>
    %30 = arith.select %28, %21, %29 : vector<8x32xi1>, vector<8x32xf32>
    %c0_26 = arith.constant 0 : index
    %c0_27 = arith.constant 0 : index
    %31 = vector.load %arg19[%c0_26, %c0_27] : memref<64x32xf32, #tpu.memory_space<vmem>>, vector<8x32xf32>
    tpu.vector_store %arg19[%c0_26, %c0_27], %30 {strides = array<i32>} : memref<64x32xf32, #tpu.memory_space<vmem>>, vector<8x32xf32>,
    %c56 = arith.constant 56 : index
    %c0_28 = arith.constant 0 : index
    %32 = vector.load %arg18[%c56, %c0_28] : memref<64x32xf32, #tpu.memory_space<vmem>>, vector<8x32xf32>
    %cst_29 = arith.constant dense<0.000000e+00> : vector<8x32xf32>
    %33 = tpu.matmul %17, %15, %cst_29 {dimension_numbers = #tpu.dot_dimension_numbers<[1], [0], [0], [1], [0, 0, 1, 1], [], []>} : vector<8x32xf32>, vector<32x32xf32>, vector<8x32xf32> -> vector<8x32xf32>
    %34 = arith.addf %32, %33 : vector<8x32xf32>
    %35 = math.tanh %34 : vector<8x32xf32>
    %c7_i32 = arith.constant 7 : i32
    %36 = vector.broadcast %c7_i32 : i32 to vector<8x1xi32>
    %37 = arith.cmpi sgt, %0, %36 : vector<8x1xi32>
    %38 = vector.shape_cast %37 : vector<8x1xi1> to vector<8x1xi1>
    %39 = vector.broadcast %38 : vector<8x1xi1> to vector<8x32xi1>
    %40 = arith.select %39, %35, %17 : vector<8x32xi1>, vector<8x32xf32>
    %cst_30 = arith.constant 0.000000e+00 : f32
    %41 = vector.shape_cast %37 : vector<8x1xi1> to vector<8x1xi1>
    %42 = vector.broadcast %41 : vector<8x1xi1> to vector<8x32xi1>
    %43 = vector.broadcast %cst_30 : f32 to vector<8x32xf32>
    %44 = arith.select %42, %35, %43 : vector<8x32xi1>, vector<8x32xf32>
    %c56_31 = arith.constant 56 : index
    %c0_32 = arith.constant 0 : index
    %45 = vector.load %arg20[%c56_31, %c0_32] : memref<64x32xf32, #tpu.memory_space<vmem>>, vector<8x32xf32>
    tpu.vector_store %arg20[%c56_31, %c0_32], %44 {strides = array<i32>} : memref<64x32xf32, #tpu.memory_space<vmem>>, vector<8x32xf32>,
    %c8 = arith.constant 8 : index
    %c0_33 = arith.constant 0 : index
    %46 = vector.load %arg17[%c8, %c0_33] : memref<64x32xf32, #tpu.memory_space<vmem>>, vector<8x32xf32>
    %cst_34 = arith.constant dense<0.000000e+00> : vector<8x32xf32>
    %47 = tpu.matmul %26, %14, %cst_34 {dimension_numbers = #tpu.dot_dimension_numbers<[1], [0], [0], [1], [0, 0, 1, 1], [], []>} : vector<8x32xf32>, vector<32x32xf32>, vector<8x32xf32> -> vector<8x32xf32>
    %48 = arith.addf %46, %47 : vector<8x32xf32>
    %49 = math.tanh %48 : vector<8x32xf32>
    %c1_i32 = arith.constant 1 : i32
    %50 = vector.broadcast %c1_i32 : i32 to vector<8x1xi32>
    %51 = arith.cmpi sgt, %0, %50 : vector<8x1xi32>
    %52 = vector.shape_cast %51 : vector<8x1xi1> to vector<8x1xi1>
    %53 = vector.broadcast %52 : vector<8x1xi1> to vector<8x32xi1>
    %54 = arith.select %53, %49, %26 : vector<8x32xi1>, vector<8x32xf32>
    %cst_35 = arith.constant 0.000000e+00 : f32
    %55 = vector.shape_cast %51 : vector<8x1xi1> to vector<8x1xi1>
    %56 = vector.broadcast %55 : vector<8x1xi1> to vector<8x32xi1>
    %57 = vector.broadcast %cst_35 : f32 to vector<8x32xf32>
    %58 = arith.select %56, %49, %57 : vector<8x32xi1>, vector<8x32xf32>
    %c8_36 = arith.constant 8 : index
    %c0_37 = arith.constant 0 : index
    %59 = vector.load %arg19[%c8_36, %c0_37] : memref<64x32xf32, #tpu.memory_space<vmem>>, vector<8x32xf32>
    tpu.vector_store %arg19[%c8_36, %c0_37], %58 {strides = array<i32>} : memref<64x32xf32, #tpu.memory_space<vmem>>, vector<8x32xf32>,
    %c48 = arith.constant 48 : index
    %c0_38 = arith.constant 0 : index
    %60 = vector.load %arg18[%c48, %c0_38] : memref<64x32xf32, #tpu.memory_space<vmem>>, vector<8x32xf32>
    %cst_39 = arith.constant dense<0.000000e+00> : vector<8x32xf32>
    %61 = tpu.matmul %40, %15, %cst_39 {dimension_numbers = #tpu.dot_dimension_numbers<[1], [0], [0], [1], [0, 0, 1, 1], [], []>} : vector<8x32xf32>, vector<32x32xf32>, vector<8x32xf32> -> vector<8x32xf32>
    %62 = arith.addf %60, %61 : vector<8x32xf32>
    %63 = math.tanh %62 : vector<8x32xf32>
    %c6_i32 = arith.constant 6 : i32
    %64 = vector.broadcast %c6_i32 : i32 to vector<8x1xi32>
    %65 = arith.cmpi sgt, %0, %64 : vector<8x1xi32>
    %66 = vector.shape_cast %65 : vector<8x1xi1> to vector<8x1xi1>
    %67 = vector.broadcast %66 : vector<8x1xi1> to vector<8x32xi1>
    %68 = arith.select %67, %63, %40 : vector<8x32xi1>, vector<8x32xf32>
    %cst_40 = arith.constant 0.000000e+00 : f32
    %69 = vector.shape_cast %65 : vector<8x1xi1> to vector<8x1xi1>
    %70 = vector.broadcast %69 : vector<8x1xi1> to vector<8x32xi1>
    %71 = vector.broadcast %cst_40 : f32 to vector<8x32xf32>
    %72 = arith.select %70, %63, %71 : vector<8x32xi1>, vector<8x32xf32>
    %c48_41 = arith.constant 48 : index
    %c0_42 = arith.constant 0 : index
    %73 = vector.load %arg20[%c48_41, %c0_42] : memref<64x32xf32, #tpu.memory_space<vmem>>, vector<8x32xf32>
    tpu.vector_store %arg20[%c48_41, %c0_42], %72 {strides = array<i32>} : memref<64x32xf32, #tpu.memory_space<vmem>>, vector<8x32xf32>,
    %c16 = arith.constant 16 : index
    %c0_43 = arith.constant 0 : index
    %74 = vector.load %arg17[%c16, %c0_43] : memref<64x32xf32, #tpu.memory_space<vmem>>, vector<8x32xf32>
    %cst_44 = arith.constant dense<0.000000e+00> : vector<8x32xf32>
    %75 = tpu.matmul %54, %14, %cst_44 {dimension_numbers = #tpu.dot_dimension_numbers<[1], [0], [0], [1], [0, 0, 1, 1], [], []>} : vector<8x32xf32>, vector<32x32xf32>, vector<8x32xf32> -> vector<8x32xf32>
    %76 = arith.addf %74, %75 : vector<8x32xf32>
    %77 = math.tanh %76 : vector<8x32xf32>
    %c2_i32 = arith.constant 2 : i32
    %78 = vector.broadcast %c2_i32 : i32 to vector<8x1xi32>
    %79 = arith.cmpi sgt, %0, %78 : vector<8x1xi32>
    %80 = vector.shape_cast %79 : vector<8x1xi1> to vector<8x1xi1>
    %81 = vector.broadcast %80 : vector<8x1xi1> to vector<8x32xi1>
    %82 = arith.select %81, %77, %54 : vector<8x32xi1>, vector<8x32xf32>
    %cst_45 = arith.constant 0.000000e+00 : f32
    %83 = vector.shape_cast %79 : vector<8x1xi1> to vector<8x1xi1>
    %84 = vector.broadcast %83 : vector<8x1xi1> to vector<8x32xi1>
    %85 = vector.broadcast %cst_45 : f32 to vector<8x32xf32>
    %86 = arith.select %84, %77, %85 : vector<8x32xi1>, vector<8x32xf32>
    %c16_46 = arith.constant 16 : index
    %c0_47 = arith.constant 0 : index
    %87 = vector.load %arg19[%c16_46, %c0_47] : memref<64x32xf32, #tpu.memory_space<vmem>>, vector<8x32xf32>
    tpu.vector_store %arg19[%c16_46, %c0_47], %86 {strides = array<i32>} : memref<64x32xf32, #tpu.memory_space<vmem>>, vector<8x32xf32>,
    %c40 = arith.constant 40 : index
    %c0_48 = arith.constant 0 : index
    %88 = vector.load %arg18[%c40, %c0_48] : memref<64x32xf32, #tpu.memory_space<vmem>>, vector<8x32xf32>
    %cst_49 = arith.constant dense<0.000000e+00> : vector<8x32xf32>
    %89 = tpu.matmul %68, %15, %cst_49 {dimension_numbers = #tpu.dot_dimension_numbers<[1], [0], [0], [1], [0, 0, 1, 1], [], []>} : vector<8x32xf32>, vector<32x32xf32>, vector<8x32xf32> -> vector<8x32xf32>
    %90 = arith.addf %88, %89 : vector<8x32xf32>
    %91 = math.tanh %90 : vector<8x32xf32>
    %c5_i32 = arith.constant 5 : i32
    %92 = vector.broadcast %c5_i32 : i32 to vector<8x1xi32>
    %93 = arith.cmpi sgt, %0, %92 : vector<8x1xi32>
    %94 = vector.shape_cast %93 : vector<8x1xi1> to vector<8x1xi1>
    %95 = vector.broadcast %94 : vector<8x1xi1> to vector<8x32xi1>
    %96 = arith.select %95, %91, %68 : vector<8x32xi1>, vector<8x32xf32>
    %cst_50 = arith.constant 0.000000e+00 : f32
    %97 = vector.shape_cast %93 : vector<8x1xi1> to vector<8x1xi1>
    %98 = vector.broadcast %97 : vector<8x1xi1> to vector<8x32xi1>
    %99 = vector.broadcast %cst_50 : f32 to vector<8x32xf32>
    %100 = arith.select %98, %91, %99 : vector<8x32xi1>, vector<8x32xf32>
    %c40_51 = arith.constant 40 : index
    %c0_52 = arith.constant 0 : index
    %101 = vector.load %arg20[%c40_51, %c0_52] : memref<64x32xf32, #tpu.memory_space<vmem>>, vector<8x32xf32>
    tpu.vector_store %arg20[%c40_51, %c0_52], %100 {strides = array<i32>} : memref<64x32xf32, #tpu.memory_space<vmem>>, vector<8x32xf32>,
    %c24 = arith.constant 24 : index
    %c0_53 = arith.constant 0 : index
    %102 = vector.load %arg17[%c24, %c0_53] : memref<64x32xf32, #tpu.memory_space<vmem>>, vector<8x32xf32>
    %cst_54 = arith.constant dense<0.000000e+00> : vector<8x32xf32>
    %103 = tpu.matmul %82, %14, %cst_54 {dimension_numbers = #tpu.dot_dimension_numbers<[1], [0], [0], [1], [0, 0, 1, 1], [], []>} : vector<8x32xf32>, vector<32x32xf32>, vector<8x32xf32> -> vector<8x32xf32>
    %104 = arith.addf %102, %103 : vector<8x32xf32>
    %105 = math.tanh %104 : vector<8x32xf32>
    %c3_i32 = arith.constant 3 : i32
    %106 = vector.broadcast %c3_i32 : i32 to vector<8x1xi32>
    %107 = arith.cmpi sgt, %0, %106 : vector<8x1xi32>
    %108 = vector.shape_cast %107 : vector<8x1xi1> to vector<8x1xi1>
    %109 = vector.broadcast %108 : vector<8x1xi1> to vector<8x32xi1>
    %110 = arith.select %109, %105, %82 : vector<8x32xi1>, vector<8x32xf32>
    %cst_55 = arith.constant 0.000000e+00 : f32
    %111 = vector.shape_cast %107 : vector<8x1xi1> to vector<8x1xi1>
    %112 = vector.broadcast %111 : vector<8x1xi1> to vector<8x32xi1>
    %113 = vector.broadcast %cst_55 : f32 to vector<8x32xf32>
    %114 = arith.select %112, %105, %113 : vector<8x32xi1>, vector<8x32xf32>
    %c24_56 = arith.constant 24 : index
    %c0_57 = arith.constant 0 : index
    %115 = vector.load %arg19[%c24_56, %c0_57] : memref<64x32xf32, #tpu.memory_space<vmem>>, vector<8x32xf32>
    tpu.vector_store %arg19[%c24_56, %c0_57], %114 {strides = array<i32>} : memref<64x32xf32, #tpu.memory_space<vmem>>, vector<8x32xf32>,
    %c32 = arith.constant 32 : index
    %c0_58 = arith.constant 0 : index
    %116 = vector.load %arg18[%c32, %c0_58] : memref<64x32xf32, #tpu.memory_space<vmem>>, vector<8x32xf32>
    %cst_59 = arith.constant dense<0.000000e+00> : vector<8x32xf32>
    %117 = tpu.matmul %96, %15, %cst_59 {dimension_numbers = #tpu.dot_dimension_numbers<[1], [0], [0], [1], [0, 0, 1, 1], [], []>} : vector<8x32xf32>, vector<32x32xf32>, vector<8x32xf32> -> vector<8x32xf32>
    %118 = arith.addf %116, %117 : vector<8x32xf32>
    %119 = math.tanh %118 : vector<8x32xf32>
    %c4_i32 = arith.constant 4 : i32
    %120 = vector.broadcast %c4_i32 : i32 to vector<8x1xi32>
    %121 = arith.cmpi sgt, %0, %120 : vector<8x1xi32>
    %122 = vector.shape_cast %121 : vector<8x1xi1> to vector<8x1xi1>
    %123 = vector.broadcast %122 : vector<8x1xi1> to vector<8x32xi1>
    %124 = arith.select %123, %119, %96 : vector<8x32xi1>, vector<8x32xf32>
    %cst_60 = arith.constant 0.000000e+00 : f32
    %125 = vector.shape_cast %121 : vector<8x1xi1> to vector<8x1xi1>
    %126 = vector.broadcast %125 : vector<8x1xi1> to vector<8x32xi1>
    %127 = vector.broadcast %cst_60 : f32 to vector<8x32xf32>
    %128 = arith.select %126, %119, %127 : vector<8x32xi1>, vector<8x32xf32>
    %c32_61 = arith.constant 32 : index
    %c0_62 = arith.constant 0 : index
    %129 = vector.load %arg20[%c32_61, %c0_62] : memref<64x32xf32, #tpu.memory_space<vmem>>, vector<8x32xf32>
    tpu.vector_store %arg20[%c32_61, %c0_62], %128 {strides = array<i32>} : memref<64x32xf32, #tpu.memory_space<vmem>>, vector<8x32xf32>,
    %c32_63 = arith.constant 32 : index
    %c0_64 = arith.constant 0 : index
    %130 = vector.load %arg17[%c32_63, %c0_64] : memref<64x32xf32, #tpu.memory_space<vmem>>, vector<8x32xf32>
    %cst_65 = arith.constant dense<0.000000e+00> : vector<8x32xf32>
    %131 = tpu.matmul %110, %14, %cst_65 {dimension_numbers = #tpu.dot_dimension_numbers<[1], [0], [0], [1], [0, 0, 1, 1], [], []>} : vector<8x32xf32>, vector<32x32xf32>, vector<8x32xf32> -> vector<8x32xf32>
    %132 = arith.addf %130, %131 : vector<8x32xf32>
    %133 = math.tanh %132 : vector<8x32xf32>
    %c4_i32_66 = arith.constant 4 : i32
    %134 = vector.broadcast %c4_i32_66 : i32 to vector<8x1xi32>
    %135 = arith.cmpi sgt, %0, %134 : vector<8x1xi32>
    %136 = vector.shape_cast %135 : vector<8x1xi1> to vector<8x1xi1>
    %137 = vector.broadcast %136 : vector<8x1xi1> to vector<8x32xi1>
    %138 = arith.select %137, %133, %110 : vector<8x32xi1>, vector<8x32xf32>
    %cst_67 = arith.constant 0.000000e+00 : f32
    %139 = vector.shape_cast %135 : vector<8x1xi1> to vector<8x1xi1>
    %140 = vector.broadcast %139 : vector<8x1xi1> to vector<8x32xi1>
    %141 = vector.broadcast %cst_67 : f32 to vector<8x32xf32>
    %142 = arith.select %140, %133, %141 : vector<8x32xi1>, vector<8x32xf32>
    %c32_68 = arith.constant 32 : index
    %c0_69 = arith.constant 0 : index
    %143 = vector.load %arg19[%c32_68, %c0_69] : memref<64x32xf32, #tpu.memory_space<vmem>>, vector<8x32xf32>
    tpu.vector_store %arg19[%c32_68, %c0_69], %142 {strides = array<i32>} : memref<64x32xf32, #tpu.memory_space<vmem>>, vector<8x32xf32>,
    %c24_70 = arith.constant 24 : index
    %c0_71 = arith.constant 0 : index
    %144 = vector.load %arg18[%c24_70, %c0_71] : memref<64x32xf32, #tpu.memory_space<vmem>>, vector<8x32xf32>
    %cst_72 = arith.constant dense<0.000000e+00> : vector<8x32xf32>
    %145 = tpu.matmul %124, %15, %cst_72 {dimension_numbers = #tpu.dot_dimension_numbers<[1], [0], [0], [1], [0, 0, 1, 1], [], []>} : vector<8x32xf32>, vector<32x32xf32>, vector<8x32xf32> -> vector<8x32xf32>
    %146 = arith.addf %144, %145 : vector<8x32xf32>
    %147 = math.tanh %146 : vector<8x32xf32>
    %c3_i32_73 = arith.constant 3 : i32
    %148 = vector.broadcast %c3_i32_73 : i32 to vector<8x1xi32>
    %149 = arith.cmpi sgt, %0, %148 : vector<8x1xi32>
    %150 = vector.shape_cast %149 : vector<8x1xi1> to vector<8x1xi1>
    %151 = vector.broadcast %150 : vector<8x1xi1> to vector<8x32xi1>
    %152 = arith.select %151, %147, %124 : vector<8x32xi1>, vector<8x32xf32>
    %cst_74 = arith.constant 0.000000e+00 : f32
    %153 = vector.shape_cast %149 : vector<8x1xi1> to vector<8x1xi1>
    %154 = vector.broadcast %153 : vector<8x1xi1> to vector<8x32xi1>
    %155 = vector.broadcast %cst_74 : f32 to vector<8x32xf32>
    %156 = arith.select %154, %147, %155 : vector<8x32xi1>, vector<8x32xf32>
    %c24_75 = arith.constant 24 : index
    %c0_76 = arith.constant 0 : index
    %157 = vector.load %arg20[%c24_75, %c0_76] : memref<64x32xf32, #tpu.memory_space<vmem>>, vector<8x32xf32>
    tpu.vector_store %arg20[%c24_75, %c0_76], %156 {strides = array<i32>} : memref<64x32xf32, #tpu.memory_space<vmem>>, vector<8x32xf32>,
    %c40_77 = arith.constant 40 : index
    %c0_78 = arith.constant 0 : index
    %158 = vector.load %arg17[%c40_77, %c0_78] : memref<64x32xf32, #tpu.memory_space<vmem>>, vector<8x32xf32>
    %cst_79 = arith.constant dense<0.000000e+00> : vector<8x32xf32>
    %159 = tpu.matmul %138, %14, %cst_79 {dimension_numbers = #tpu.dot_dimension_numbers<[1], [0], [0], [1], [0, 0, 1, 1], [], []>} : vector<8x32xf32>, vector<32x32xf32>, vector<8x32xf32> -> vector<8x32xf32>
    %160 = arith.addf %158, %159 : vector<8x32xf32>
    %161 = math.tanh %160 : vector<8x32xf32>
    %c5_i32_80 = arith.constant 5 : i32
    %162 = vector.broadcast %c5_i32_80 : i32 to vector<8x1xi32>
    %163 = arith.cmpi sgt, %0, %162 : vector<8x1xi32>
    %164 = vector.shape_cast %163 : vector<8x1xi1> to vector<8x1xi1>
    %165 = vector.broadcast %164 : vector<8x1xi1> to vector<8x32xi1>
    %166 = arith.select %165, %161, %138 : vector<8x32xi1>, vector<8x32xf32>
    %cst_81 = arith.constant 0.000000e+00 : f32
    %167 = vector.shape_cast %163 : vector<8x1xi1> to vector<8x1xi1>
    %168 = vector.broadcast %167 : vector<8x1xi1> to vector<8x32xi1>
    %169 = vector.broadcast %cst_81 : f32 to vector<8x32xf32>
    %170 = arith.select %168, %161, %169 : vector<8x32xi1>, vector<8x32xf32>
    %c40_82 = arith.constant 40 : index
    %c0_83 = arith.constant 0 : index
    %171 = vector.load %arg19[%c40_82, %c0_83] : memref<64x32xf32, #tpu.memory_space<vmem>>, vector<8x32xf32>
    tpu.vector_store %arg19[%c40_82, %c0_83], %170 {strides = array<i32>} : memref<64x32xf32, #tpu.memory_space<vmem>>, vector<8x32xf32>,
    %c16_84 = arith.constant 16 : index
    %c0_85 = arith.constant 0 : index
    %172 = vector.load %arg18[%c16_84, %c0_85] : memref<64x32xf32, #tpu.memory_space<vmem>>, vector<8x32xf32>
    %cst_86 = arith.constant dense<0.000000e+00> : vector<8x32xf32>
    %173 = tpu.matmul %152, %15, %cst_86 {dimension_numbers = #tpu.dot_dimension_numbers<[1], [0], [0], [1], [0, 0, 1, 1], [], []>} : vector<8x32xf32>, vector<32x32xf32>, vector<8x32xf32> -> vector<8x32xf32>
    %174 = arith.addf %172, %173 : vector<8x32xf32>
    %175 = math.tanh %174 : vector<8x32xf32>
    %c2_i32_87 = arith.constant 2 : i32
    %176 = vector.broadcast %c2_i32_87 : i32 to vector<8x1xi32>
    %177 = arith.cmpi sgt, %0, %176 : vector<8x1xi32>
    %178 = vector.shape_cast %177 : vector<8x1xi1> to vector<8x1xi1>
    %179 = vector.broadcast %178 : vector<8x1xi1> to vector<8x32xi1>
    %180 = arith.select %179, %175, %152 : vector<8x32xi1>, vector<8x32xf32>
    %cst_88 = arith.constant 0.000000e+00 : f32
    %181 = vector.shape_cast %177 : vector<8x1xi1> to vector<8x1xi1>
    %182 = vector.broadcast %181 : vector<8x1xi1> to vector<8x32xi1>
    %183 = vector.broadcast %cst_88 : f32 to vector<8x32xf32>
    %184 = arith.select %182, %175, %183 : vector<8x32xi1>, vector<8x32xf32>
    %c16_89 = arith.constant 16 : index
    %c0_90 = arith.constant 0 : index
    %185 = vector.load %arg20[%c16_89, %c0_90] : memref<64x32xf32, #tpu.memory_space<vmem>>, vector<8x32xf32>
    tpu.vector_store %arg20[%c16_89, %c0_90], %184 {strides = array<i32>} : memref<64x32xf32, #tpu.memory_space<vmem>>, vector<8x32xf32>,
    %c48_91 = arith.constant 48 : index
    %c0_92 = arith.constant 0 : index
    %186 = vector.load %arg17[%c48_91, %c0_92] : memref<64x32xf32, #tpu.memory_space<vmem>>, vector<8x32xf32>
    %cst_93 = arith.constant dense<0.000000e+00> : vector<8x32xf32>
    %187 = tpu.matmul %166, %14, %cst_93 {dimension_numbers = #tpu.dot_dimension_numbers<[1], [0], [0], [1], [0, 0, 1, 1], [], []>} : vector<8x32xf32>, vector<32x32xf32>, vector<8x32xf32> -> vector<8x32xf32>
    %188 = arith.addf %186, %187 : vector<8x32xf32>
    %189 = math.tanh %188 : vector<8x32xf32>
    %c6_i32_94 = arith.constant 6 : i32
    %190 = vector.broadcast %c6_i32_94 : i32 to vector<8x1xi32>
    %191 = arith.cmpi sgt, %0, %190 : vector<8x1xi32>
    %192 = vector.shape_cast %191 : vector<8x1xi1> to vector<8x1xi1>
    %193 = vector.broadcast %192 : vector<8x1xi1> to vector<8x32xi1>
    %194 = arith.select %193, %189, %166 : vector<8x32xi1>, vector<8x32xf32>
    %cst_95 = arith.constant 0.000000e+00 : f32
    %195 = vector.shape_cast %191 : vector<8x1xi1> to vector<8x1xi1>
    %196 = vector.broadcast %195 : vector<8x1xi1> to vector<8x32xi1>
    %197 = vector.broadcast %cst_95 : f32 to vector<8x32xf32>
    %198 = arith.select %196, %189, %197 : vector<8x32xi1>, vector<8x32xf32>
    %c48_96 = arith.constant 48 : index
    %c0_97 = arith.constant 0 : index
    %199 = vector.load %arg19[%c48_96, %c0_97] : memref<64x32xf32, #tpu.memory_space<vmem>>, vector<8x32xf32>
    tpu.vector_store %arg19[%c48_96, %c0_97], %198 {strides = array<i32>} : memref<64x32xf32, #tpu.memory_space<vmem>>, vector<8x32xf32>,
    %c8_98 = arith.constant 8 : index
    %c0_99 = arith.constant 0 : index
    %200 = vector.load %arg18[%c8_98, %c0_99] : memref<64x32xf32, #tpu.memory_space<vmem>>, vector<8x32xf32>
    %cst_100 = arith.constant dense<0.000000e+00> : vector<8x32xf32>
    %201 = tpu.matmul %180, %15, %cst_100 {dimension_numbers = #tpu.dot_dimension_numbers<[1], [0], [0], [1], [0, 0, 1, 1], [], []>} : vector<8x32xf32>, vector<32x32xf32>, vector<8x32xf32> -> vector<8x32xf32>
    %202 = arith.addf %200, %201 : vector<8x32xf32>
    %203 = math.tanh %202 : vector<8x32xf32>
    %c1_i32_101 = arith.constant 1 : i32
    %204 = vector.broadcast %c1_i32_101 : i32 to vector<8x1xi32>
    %205 = arith.cmpi sgt, %0, %204 : vector<8x1xi32>
    %206 = vector.shape_cast %205 : vector<8x1xi1> to vector<8x1xi1>
    %207 = vector.broadcast %206 : vector<8x1xi1> to vector<8x32xi1>
    %208 = arith.select %207, %203, %180 : vector<8x32xi1>, vector<8x32xf32>
    %cst_102 = arith.constant 0.000000e+00 : f32
    %209 = vector.shape_cast %205 : vector<8x1xi1> to vector<8x1xi1>
    %210 = vector.broadcast %209 : vector<8x1xi1> to vector<8x32xi1>
    %211 = vector.broadcast %cst_102 : f32 to vector<8x32xf32>
    %212 = arith.select %210, %203, %211 : vector<8x32xi1>, vector<8x32xf32>
    %c8_103 = arith.constant 8 : index
    %c0_104 = arith.constant 0 : index
    %213 = vector.load %arg20[%c8_103, %c0_104] : memref<64x32xf32, #tpu.memory_space<vmem>>, vector<8x32xf32>
    tpu.vector_store %arg20[%c8_103, %c0_104], %212 {strides = array<i32>} : memref<64x32xf32, #tpu.memory_space<vmem>>, vector<8x32xf32>,
    %c56_105 = arith.constant 56 : index
    %c0_106 = arith.constant 0 : index
    %214 = vector.load %arg17[%c56_105, %c0_106] : memref<64x32xf32, #tpu.memory_space<vmem>>, vector<8x32xf32>
    %cst_107 = arith.constant dense<0.000000e+00> : vector<8x32xf32>
    %215 = tpu.matmul %194, %14, %cst_107 {dimension_numbers = #tpu.dot_dimension_numbers<[1], [0], [0], [1], [0, 0, 1, 1], [], []>} : vector<8x32xf32>, vector<32x32xf32>, vector<8x32xf32> -> vector<8x32xf32>
    %216 = arith.addf %214, %215 : vector<8x32xf32>
    %217 = math.tanh %216 : vector<8x32xf32>
    %c7_i32_108 = arith.constant 7 : i32
    %218 = vector.broadcast %c7_i32_108 : i32 to vector<8x1xi32>
    %219 = arith.cmpi sgt, %0, %218 : vector<8x1xi32>
    %cst_109 = arith.constant 0.000000e+00 : f32
    %220 = vector.shape_cast %219 : vector<8x1xi1> to vector<8x1xi1>
    %221 = vector.broadcast %220 : vector<8x1xi1> to vector<8x32xi1>
    %222 = vector.broadcast %cst_109 : f32 to vector<8x32xf32>
    %223 = arith.select %221, %217, %222 : vector<8x32xi1>, vector<8x32xf32>
    %c56_110 = arith.constant 56 : index
    %c0_111 = arith.constant 0 : index
    %224 = vector.load %arg19[%c56_110, %c0_111] : memref<64x32xf32, #tpu.memory_space<vmem>>, vector<8x32xf32>
    tpu.vector_store %arg19[%c56_110, %c0_111], %223 {strides = array<i32>} : memref<64x32xf32, #tpu.memory_space<vmem>>, vector<8x32xf32>,
    %c0_112 = arith.constant 0 : index
    %c0_113 = arith.constant 0 : index
    %225 = vector.load %arg18[%c0_112, %c0_113] : memref<64x32xf32, #tpu.memory_space<vmem>>, vector<8x32xf32>
    %cst_114 = arith.constant dense<0.000000e+00> : vector<8x32xf32>
    %226 = tpu.matmul %208, %15, %cst_114 {dimension_numbers = #tpu.dot_dimension_numbers<[1], [0], [0], [1], [0, 0, 1, 1], [], []>} : vector<8x32xf32>, vector<32x32xf32>, vector<8x32xf32> -> vector<8x32xf32>
    %227 = arith.addf %225, %226 : vector<8x32xf32>
    %228 = math.tanh %227 : vector<8x32xf32>
    %c0_i32_115 = arith.constant 0 : i32
    %229 = vector.broadcast %c0_i32_115 : i32 to vector<8x1xi32>
    %230 = arith.cmpi sgt, %0, %229 : vector<8x1xi32>
    %cst_116 = arith.constant 0.000000e+00 : f32
    %231 = vector.shape_cast %230 : vector<8x1xi1> to vector<8x1xi1>
    %232 = vector.broadcast %231 : vector<8x1xi1> to vector<8x32xi1>
    %233 = vector.broadcast %cst_116 : f32 to vector<8x32xf32>
    %234 = arith.select %232, %228, %233 : vector<8x32xi1>, vector<8x32xf32>
    %c0_117 = arith.constant 0 : index
    %c0_118 = arith.constant 0 : index
    %235 = vector.load %arg20[%c0_117, %c0_118] : memref<64x32xf32, #tpu.memory_space<vmem>>, vector<8x32xf32>
    tpu.vector_store %arg20[%c0_117, %c0_118], %234 {strides = array<i32>} : memref<64x32xf32, #tpu.memory_space<vmem>>, vector<8x32xf32>,
    %c0_119 = arith.constant 0 : index
    %c0_120 = arith.constant 0 : index
    %236 = vector.load %arg19[%c0_119, %c0_120] : memref<64x32xf32, #tpu.memory_space<vmem>>, vector<64x32xf32>
    %c0_121 = arith.constant 0 : index
    %c0_122 = arith.constant 0 : index
    %237 = vector.load %arg20[%c0_121, %c0_122] : memref<64x32xf32, #tpu.memory_space<vmem>>, vector<64x32xf32>
    %c0_123 = arith.constant 0 : index
    %c0_124 = arith.constant 0 : index
    %238 = vector.load %arg8[%c0_123, %c0_124] : memref<64x32xf32, #tpu.memory_space<vmem>>, vector<32x32xf32>
    %cst_125 = arith.constant dense<0.000000e+00> : vector<64x32xf32>
    %239 = tpu.matmul %236, %238, %cst_125 {dimension_numbers = #tpu.dot_dimension_numbers<[1], [0], [0], [1], [0, 0, 1, 1], [], []>} : vector<64x32xf32>, vector<32x32xf32>, vector<64x32xf32> -> vector<64x32xf32>
    %c32_126 = arith.constant 32 : index
    %c0_127 = arith.constant 0 : index
    %240 = vector.load %arg8[%c32_126, %c0_127] : memref<64x32xf32, #tpu.memory_space<vmem>>, vector<32x32xf32>
    %cst_128 = arith.constant dense<0.000000e+00> : vector<64x32xf32>
    %241 = tpu.matmul %237, %240, %cst_128 {dimension_numbers = #tpu.dot_dimension_numbers<[1], [0], [0], [1], [0, 0, 1, 1], [], []>} : vector<64x32xf32>, vector<32x32xf32>, vector<64x32xf32> -> vector<64x32xf32>
    %242 = arith.addf %239, %241 : vector<64x32xf32>
    %c0_129 = arith.constant 0 : index
    %c0_130 = arith.constant 0 : index
    %243 = vector.load %arg10[%c0_129, %c0_130] : memref<1x32xf32, #tpu.memory_space<vmem>>, vector<1x32xf32>
    %244 = vector.broadcast %243 : vector<1x32xf32> to vector<64x32xf32>
    %245 = arith.addf %242, %244 : vector<64x32xf32>
    %c0_131 = arith.constant 0 : index
    %c0_132 = arith.constant 0 : index
    %246 = vector.load %arg11[%c0_131, %c0_132] : memref<64x32xf32, #tpu.memory_space<vmem>>, vector<32x32xf32>
    %cst_133 = arith.constant dense<0.000000e+00> : vector<64x32xf32>
    %247 = tpu.matmul %236, %246, %cst_133 {dimension_numbers = #tpu.dot_dimension_numbers<[1], [0], [0], [1], [0, 0, 1, 1], [], []>} : vector<64x32xf32>, vector<32x32xf32>, vector<64x32xf32> -> vector<64x32xf32>
    %c32_134 = arith.constant 32 : index
    %c0_135 = arith.constant 0 : index
    %248 = vector.load %arg11[%c32_134, %c0_135] : memref<64x32xf32, #tpu.memory_space<vmem>>, vector<32x32xf32>
    %cst_136 = arith.constant dense<0.000000e+00> : vector<64x32xf32>
    %249 = tpu.matmul %237, %248, %cst_136 {dimension_numbers = #tpu.dot_dimension_numbers<[1], [0], [0], [1], [0, 0, 1, 1], [], []>} : vector<64x32xf32>, vector<32x32xf32>, vector<64x32xf32> -> vector<64x32xf32>
    %250 = arith.addf %247, %249 : vector<64x32xf32>
    %c0_137 = arith.constant 0 : index
    %c0_138 = arith.constant 0 : index
    %251 = vector.load %arg13[%c0_137, %c0_138] : memref<1x32xf32, #tpu.memory_space<vmem>>, vector<1x32xf32>
    %252 = vector.broadcast %251 : vector<1x32xf32> to vector<64x32xf32>
    %253 = arith.addf %250, %252 : vector<64x32xf32>
    %c0_139 = arith.constant 0 : index
    %c0_140 = arith.constant 0 : index
    %254 = vector.load %arg17[%c0_139, %c0_140] : memref<64x32xf32, #tpu.memory_space<vmem>>, vector<64x32xf32>
    tpu.vector_store %arg17[%c0_139, %c0_140], %245 {strides = array<i32>} : memref<64x32xf32, #tpu.memory_space<vmem>>, vector<64x32xf32>,
    %c0_141 = arith.constant 0 : index
    %c0_142 = arith.constant 0 : index
    %255 = vector.load %arg18[%c0_141, %c0_142] : memref<64x32xf32, #tpu.memory_space<vmem>>, vector<64x32xf32>
    tpu.vector_store %arg18[%c0_141, %c0_142], %253 {strides = array<i32>} : memref<64x32xf32, #tpu.memory_space<vmem>>, vector<64x32xf32>,
    %c0_143 = arith.constant 0 : index
    %c0_144 = arith.constant 0 : index
    %256 = vector.load %arg9[%c0_143, %c0_144] : memref<32x32xf32, #tpu.memory_space<vmem>>, vector<32x32xf32>
    %c0_145 = arith.constant 0 : index
    %c0_146 = arith.constant 0 : index
    %257 = vector.load %arg12[%c0_145, %c0_146] : memref<32x32xf32, #tpu.memory_space<vmem>>, vector<32x32xf32>
    %cst_147 = arith.constant 0.000000e+00 : f32
    %258 = vector.broadcast %cst_147 : f32 to vector<8x32xf32>
    %cst_148 = arith.constant 0.000000e+00 : f32
    %259 = vector.broadcast %cst_148 : f32 to vector<8x32xf32>
    %c0_149 = arith.constant 0 : index
    %c0_150 = arith.constant 0 : index
    %260 = vector.load %arg17[%c0_149, %c0_150] : memref<64x32xf32, #tpu.memory_space<vmem>>, vector<8x32xf32>
    %cst_151 = arith.constant dense<0.000000e+00> : vector<8x32xf32>
    %261 = tpu.matmul %258, %256, %cst_151 {dimension_numbers = #tpu.dot_dimension_numbers<[1], [0], [0], [1], [0, 0, 1, 1], [], []>} : vector<8x32xf32>, vector<32x32xf32>, vector<8x32xf32> -> vector<8x32xf32>
    %262 = arith.addf %260, %261 : vector<8x32xf32>
    %263 = math.tanh %262 : vector<8x32xf32>
    %c0_i32_152 = arith.constant 0 : i32
    %264 = vector.broadcast %c0_i32_152 : i32 to vector<8x1xi32>
    %265 = arith.cmpi sgt, %0, %264 : vector<8x1xi32>
    %266 = vector.shape_cast %265 : vector<8x1xi1> to vector<8x1xi1>
    %267 = vector.broadcast %266 : vector<8x1xi1> to vector<8x32xi1>
    %268 = arith.select %267, %263, %258 : vector<8x32xi1>, vector<8x32xf32>
    %c56_153 = arith.constant 56 : index
    %c0_154 = arith.constant 0 : index
    %269 = vector.load %arg18[%c56_153, %c0_154] : memref<64x32xf32, #tpu.memory_space<vmem>>, vector<8x32xf32>
    %cst_155 = arith.constant dense<0.000000e+00> : vector<8x32xf32>
    %270 = tpu.matmul %259, %257, %cst_155 {dimension_numbers = #tpu.dot_dimension_numbers<[1], [0], [0], [1], [0, 0, 1, 1], [], []>} : vector<8x32xf32>, vector<32x32xf32>, vector<8x32xf32> -> vector<8x32xf32>
    %271 = arith.addf %269, %270 : vector<8x32xf32>
    %272 = math.tanh %271 : vector<8x32xf32>
    %c7_i32_156 = arith.constant 7 : i32
    %273 = vector.broadcast %c7_i32_156 : i32 to vector<8x1xi32>
    %274 = arith.cmpi sgt, %0, %273 : vector<8x1xi32>
    %275 = vector.shape_cast %274 : vector<8x1xi1> to vector<8x1xi1>
    %276 = vector.broadcast %275 : vector<8x1xi1> to vector<8x32xi1>
    %277 = arith.select %276, %272, %259 : vector<8x32xi1>, vector<8x32xf32>
    %c8_157 = arith.constant 8 : index
    %c0_158 = arith.constant 0 : index
    %278 = vector.load %arg17[%c8_157, %c0_158] : memref<64x32xf32, #tpu.memory_space<vmem>>, vector<8x32xf32>
    %cst_159 = arith.constant dense<0.000000e+00> : vector<8x32xf32>
    %279 = tpu.matmul %268, %256, %cst_159 {dimension_numbers = #tpu.dot_dimension_numbers<[1], [0], [0], [1], [0, 0, 1, 1], [], []>} : vector<8x32xf32>, vector<32x32xf32>, vector<8x32xf32> -> vector<8x32xf32>
    %280 = arith.addf %278, %279 : vector<8x32xf32>
    %281 = math.tanh %280 : vector<8x32xf32>
    %c1_i32_160 = arith.constant 1 : i32
    %282 = vector.broadcast %c1_i32_160 : i32 to vector<8x1xi32>
    %283 = arith.cmpi sgt, %0, %282 : vector<8x1xi32>
    %284 = vector.shape_cast %283 : vector<8x1xi1> to vector<8x1xi1>
    %285 = vector.broadcast %284 : vector<8x1xi1> to vector<8x32xi1>
    %286 = arith.select %285, %281, %268 : vector<8x32xi1>, vector<8x32xf32>
    %c48_161 = arith.constant 48 : index
    %c0_162 = arith.constant 0 : index
    %287 = vector.load %arg18[%c48_161, %c0_162] : memref<64x32xf32, #tpu.memory_space<vmem>>, vector<8x32xf32>
    %cst_163 = arith.constant dense<0.000000e+00> : vector<8x32xf32>
    %288 = tpu.matmul %277, %257, %cst_163 {dimension_numbers = #tpu.dot_dimension_numbers<[1], [0], [0], [1], [0, 0, 1, 1], [], []>} : vector<8x32xf32>, vector<32x32xf32>, vector<8x32xf32> -> vector<8x32xf32>
    %289 = arith.addf %287, %288 : vector<8x32xf32>
    %290 = math.tanh %289 : vector<8x32xf32>
    %c6_i32_164 = arith.constant 6 : i32
    %291 = vector.broadcast %c6_i32_164 : i32 to vector<8x1xi32>
    %292 = arith.cmpi sgt, %0, %291 : vector<8x1xi32>
    %293 = vector.shape_cast %292 : vector<8x1xi1> to vector<8x1xi1>
    %294 = vector.broadcast %293 : vector<8x1xi1> to vector<8x32xi1>
    %295 = arith.select %294, %290, %277 : vector<8x32xi1>, vector<8x32xf32>
    %c16_165 = arith.constant 16 : index
    %c0_166 = arith.constant 0 : index
    %296 = vector.load %arg17[%c16_165, %c0_166] : memref<64x32xf32, #tpu.memory_space<vmem>>, vector<8x32xf32>
    %cst_167 = arith.constant dense<0.000000e+00> : vector<8x32xf32>
    %297 = tpu.matmul %286, %256, %cst_167 {dimension_numbers = #tpu.dot_dimension_numbers<[1], [0], [0], [1], [0, 0, 1, 1], [], []>} : vector<8x32xf32>, vector<32x32xf32>, vector<8x32xf32> -> vector<8x32xf32>
    %298 = arith.addf %296, %297 : vector<8x32xf32>
    %299 = math.tanh %298 : vector<8x32xf32>
    %c2_i32_168 = arith.constant 2 : i32
    %300 = vector.broadcast %c2_i32_168 : i32 to vector<8x1xi32>
    %301 = arith.cmpi sgt, %0, %300 : vector<8x1xi32>
    %302 = vector.shape_cast %301 : vector<8x1xi1> to vector<8x1xi1>
    %303 = vector.broadcast %302 : vector<8x1xi1> to vector<8x32xi1>
    %304 = arith.select %303, %299, %286 : vector<8x32xi1>, vector<8x32xf32>
    %c40_169 = arith.constant 40 : index
    %c0_170 = arith.constant 0 : index
    %305 = vector.load %arg18[%c40_169, %c0_170] : memref<64x32xf32, #tpu.memory_space<vmem>>, vector<8x32xf32>
    %cst_171 = arith.constant dense<0.000000e+00> : vector<8x32xf32>
    %306 = tpu.matmul %295, %257, %cst_171 {dimension_numbers = #tpu.dot_dimension_numbers<[1], [0], [0], [1], [0, 0, 1, 1], [], []>} : vector<8x32xf32>, vector<32x32xf32>, vector<8x32xf32> -> vector<8x32xf32>
    %307 = arith.addf %305, %306 : vector<8x32xf32>
    %308 = math.tanh %307 : vector<8x32xf32>
    %c5_i32_172 = arith.constant 5 : i32
    %309 = vector.broadcast %c5_i32_172 : i32 to vector<8x1xi32>
    %310 = arith.cmpi sgt, %0, %309 : vector<8x1xi32>
    %311 = vector.shape_cast %310 : vector<8x1xi1> to vector<8x1xi1>
    %312 = vector.broadcast %311 : vector<8x1xi1> to vector<8x32xi1>
    %313 = arith.select %312, %308, %295 : vector<8x32xi1>, vector<8x32xf32>
    %c24_173 = arith.constant 24 : index
    %c0_174 = arith.constant 0 : index
    %314 = vector.load %arg17[%c24_173, %c0_174] : memref<64x32xf32, #tpu.memory_space<vmem>>, vector<8x32xf32>
    %cst_175 = arith.constant dense<0.000000e+00> : vector<8x32xf32>
    %315 = tpu.matmul %304, %256, %cst_175 {dimension_numbers = #tpu.dot_dimension_numbers<[1], [0], [0], [1], [0, 0, 1, 1], [], []>} : vector<8x32xf32>, vector<32x32xf32>, vector<8x32xf32> -> vector<8x32xf32>
    %316 = arith.addf %314, %315 : vector<8x32xf32>
    %317 = math.tanh %316 : vector<8x32xf32>
    %c3_i32_176 = arith.constant 3 : i32
    %318 = vector.broadcast %c3_i32_176 : i32 to vector<8x1xi32>
    %319 = arith.cmpi sgt, %0, %318 : vector<8x1xi32>
    %320 = vector.shape_cast %319 : vector<8x1xi1> to vector<8x1xi1>
    %321 = vector.broadcast %320 : vector<8x1xi1> to vector<8x32xi1>
    %322 = arith.select %321, %317, %304 : vector<8x32xi1>, vector<8x32xf32>
    %c32_177 = arith.constant 32 : index
    %c0_178 = arith.constant 0 : index
    %323 = vector.load %arg18[%c32_177, %c0_178] : memref<64x32xf32, #tpu.memory_space<vmem>>, vector<8x32xf32>
    %cst_179 = arith.constant dense<0.000000e+00> : vector<8x32xf32>
    %324 = tpu.matmul %313, %257, %cst_179 {dimension_numbers = #tpu.dot_dimension_numbers<[1], [0], [0], [1], [0, 0, 1, 1], [], []>} : vector<8x32xf32>, vector<32x32xf32>, vector<8x32xf32> -> vector<8x32xf32>
    %325 = arith.addf %323, %324 : vector<8x32xf32>
    %326 = math.tanh %325 : vector<8x32xf32>
    %c4_i32_180 = arith.constant 4 : i32
    %327 = vector.broadcast %c4_i32_180 : i32 to vector<8x1xi32>
    %328 = arith.cmpi sgt, %0, %327 : vector<8x1xi32>
    %329 = vector.shape_cast %328 : vector<8x1xi1> to vector<8x1xi1>
    %330 = vector.broadcast %329 : vector<8x1xi1> to vector<8x32xi1>
    %331 = arith.select %330, %326, %313 : vector<8x32xi1>, vector<8x32xf32>
    %c32_181 = arith.constant 32 : index
    %c0_182 = arith.constant 0 : index
    %332 = vector.load %arg17[%c32_181, %c0_182] : memref<64x32xf32, #tpu.memory_space<vmem>>, vector<8x32xf32>
    %cst_183 = arith.constant dense<0.000000e+00> : vector<8x32xf32>
    %333 = tpu.matmul %322, %256, %cst_183 {dimension_numbers = #tpu.dot_dimension_numbers<[1], [0], [0], [1], [0, 0, 1, 1], [], []>} : vector<8x32xf32>, vector<32x32xf32>, vector<8x32xf32> -> vector<8x32xf32>
    %334 = arith.addf %332, %333 : vector<8x32xf32>
    %335 = math.tanh %334 : vector<8x32xf32>
    %c4_i32_184 = arith.constant 4 : i32
    %336 = vector.broadcast %c4_i32_184 : i32 to vector<8x1xi32>
    %337 = arith.cmpi sgt, %0, %336 : vector<8x1xi32>
    %338 = vector.shape_cast %337 : vector<8x1xi1> to vector<8x1xi1>
    %339 = vector.broadcast %338 : vector<8x1xi1> to vector<8x32xi1>
    %340 = arith.select %339, %335, %322 : vector<8x32xi1>, vector<8x32xf32>
    %c24_185 = arith.constant 24 : index
    %c0_186 = arith.constant 0 : index
    %341 = vector.load %arg18[%c24_185, %c0_186] : memref<64x32xf32, #tpu.memory_space<vmem>>, vector<8x32xf32>
    %cst_187 = arith.constant dense<0.000000e+00> : vector<8x32xf32>
    %342 = tpu.matmul %331, %257, %cst_187 {dimension_numbers = #tpu.dot_dimension_numbers<[1], [0], [0], [1], [0, 0, 1, 1], [], []>} : vector<8x32xf32>, vector<32x32xf32>, vector<8x32xf32> -> vector<8x32xf32>
    %343 = arith.addf %341, %342 : vector<8x32xf32>
    %344 = math.tanh %343 : vector<8x32xf32>
    %c3_i32_188 = arith.constant 3 : i32
    %345 = vector.broadcast %c3_i32_188 : i32 to vector<8x1xi32>
    %346 = arith.cmpi sgt, %0, %345 : vector<8x1xi32>
    %347 = vector.shape_cast %346 : vector<8x1xi1> to vector<8x1xi1>
    %348 = vector.broadcast %347 : vector<8x1xi1> to vector<8x32xi1>
    %349 = arith.select %348, %344, %331 : vector<8x32xi1>, vector<8x32xf32>
    %c40_189 = arith.constant 40 : index
    %c0_190 = arith.constant 0 : index
    %350 = vector.load %arg17[%c40_189, %c0_190] : memref<64x32xf32, #tpu.memory_space<vmem>>, vector<8x32xf32>
    %cst_191 = arith.constant dense<0.000000e+00> : vector<8x32xf32>
    %351 = tpu.matmul %340, %256, %cst_191 {dimension_numbers = #tpu.dot_dimension_numbers<[1], [0], [0], [1], [0, 0, 1, 1], [], []>} : vector<8x32xf32>, vector<32x32xf32>, vector<8x32xf32> -> vector<8x32xf32>
    %352 = arith.addf %350, %351 : vector<8x32xf32>
    %353 = math.tanh %352 : vector<8x32xf32>
    %c5_i32_192 = arith.constant 5 : i32
    %354 = vector.broadcast %c5_i32_192 : i32 to vector<8x1xi32>
    %355 = arith.cmpi sgt, %0, %354 : vector<8x1xi32>
    %356 = vector.shape_cast %355 : vector<8x1xi1> to vector<8x1xi1>
    %357 = vector.broadcast %356 : vector<8x1xi1> to vector<8x32xi1>
    %358 = arith.select %357, %353, %340 : vector<8x32xi1>, vector<8x32xf32>
    %c16_193 = arith.constant 16 : index
    %c0_194 = arith.constant 0 : index
    %359 = vector.load %arg18[%c16_193, %c0_194] : memref<64x32xf32, #tpu.memory_space<vmem>>, vector<8x32xf32>
    %cst_195 = arith.constant dense<0.000000e+00> : vector<8x32xf32>
    %360 = tpu.matmul %349, %257, %cst_195 {dimension_numbers = #tpu.dot_dimension_numbers<[1], [0], [0], [1], [0, 0, 1, 1], [], []>} : vector<8x32xf32>, vector<32x32xf32>, vector<8x32xf32> -> vector<8x32xf32>
    %361 = arith.addf %359, %360 : vector<8x32xf32>
    %362 = math.tanh %361 : vector<8x32xf32>
    %c2_i32_196 = arith.constant 2 : i32
    %363 = vector.broadcast %c2_i32_196 : i32 to vector<8x1xi32>
    %364 = arith.cmpi sgt, %0, %363 : vector<8x1xi32>
    %365 = vector.shape_cast %364 : vector<8x1xi1> to vector<8x1xi1>
    %366 = vector.broadcast %365 : vector<8x1xi1> to vector<8x32xi1>
    %367 = arith.select %366, %362, %349 : vector<8x32xi1>, vector<8x32xf32>
    %c48_197 = arith.constant 48 : index
    %c0_198 = arith.constant 0 : index
    %368 = vector.load %arg17[%c48_197, %c0_198] : memref<64x32xf32, #tpu.memory_space<vmem>>, vector<8x32xf32>
    %cst_199 = arith.constant dense<0.000000e+00> : vector<8x32xf32>
    %369 = tpu.matmul %358, %256, %cst_199 {dimension_numbers = #tpu.dot_dimension_numbers<[1], [0], [0], [1], [0, 0, 1, 1], [], []>} : vector<8x32xf32>, vector<32x32xf32>, vector<8x32xf32> -> vector<8x32xf32>
    %370 = arith.addf %368, %369 : vector<8x32xf32>
    %371 = math.tanh %370 : vector<8x32xf32>
    %c6_i32_200 = arith.constant 6 : i32
    %372 = vector.broadcast %c6_i32_200 : i32 to vector<8x1xi32>
    %373 = arith.cmpi sgt, %0, %372 : vector<8x1xi32>
    %374 = vector.shape_cast %373 : vector<8x1xi1> to vector<8x1xi1>
    %375 = vector.broadcast %374 : vector<8x1xi1> to vector<8x32xi1>
    %376 = arith.select %375, %371, %358 : vector<8x32xi1>, vector<8x32xf32>
    %c8_201 = arith.constant 8 : index
    %c0_202 = arith.constant 0 : index
    %377 = vector.load %arg18[%c8_201, %c0_202] : memref<64x32xf32, #tpu.memory_space<vmem>>, vector<8x32xf32>
    %cst_203 = arith.constant dense<0.000000e+00> : vector<8x32xf32>
    %378 = tpu.matmul %367, %257, %cst_203 {dimension_numbers = #tpu.dot_dimension_numbers<[1], [0], [0], [1], [0, 0, 1, 1], [], []>} : vector<8x32xf32>, vector<32x32xf32>, vector<8x32xf32> -> vector<8x32xf32>
    %379 = arith.addf %377, %378 : vector<8x32xf32>
    %380 = math.tanh %379 : vector<8x32xf32>
    %c1_i32_204 = arith.constant 1 : i32
    %381 = vector.broadcast %c1_i32_204 : i32 to vector<8x1xi32>
    %382 = arith.cmpi sgt, %0, %381 : vector<8x1xi32>
    %383 = vector.shape_cast %382 : vector<8x1xi1> to vector<8x1xi1>
    %384 = vector.broadcast %383 : vector<8x1xi1> to vector<8x32xi1>
    %385 = arith.select %384, %380, %367 : vector<8x32xi1>, vector<8x32xf32>
    %c56_205 = arith.constant 56 : index
    %c0_206 = arith.constant 0 : index
    %386 = vector.load %arg17[%c56_205, %c0_206] : memref<64x32xf32, #tpu.memory_space<vmem>>, vector<8x32xf32>
    %cst_207 = arith.constant dense<0.000000e+00> : vector<8x32xf32>
    %387 = tpu.matmul %376, %256, %cst_207 {dimension_numbers = #tpu.dot_dimension_numbers<[1], [0], [0], [1], [0, 0, 1, 1], [], []>} : vector<8x32xf32>, vector<32x32xf32>, vector<8x32xf32> -> vector<8x32xf32>
    %388 = arith.addf %386, %387 : vector<8x32xf32>
    %389 = math.tanh %388 : vector<8x32xf32>
    %c7_i32_208 = arith.constant 7 : i32
    %390 = vector.broadcast %c7_i32_208 : i32 to vector<8x1xi32>
    %391 = arith.cmpi sgt, %0, %390 : vector<8x1xi32>
    %392 = vector.shape_cast %391 : vector<8x1xi1> to vector<8x1xi1>
    %393 = vector.broadcast %392 : vector<8x1xi1> to vector<8x32xi1>
    %394 = arith.select %393, %389, %376 : vector<8x32xi1>, vector<8x32xf32>
    %c0_209 = arith.constant 0 : index
    %c0_210 = arith.constant 0 : index
    %395 = vector.load %arg18[%c0_209, %c0_210] : memref<64x32xf32, #tpu.memory_space<vmem>>, vector<8x32xf32>
    %cst_211 = arith.constant dense<0.000000e+00> : vector<8x32xf32>
    %396 = tpu.matmul %385, %257, %cst_211 {dimension_numbers = #tpu.dot_dimension_numbers<[1], [0], [0], [1], [0, 0, 1, 1], [], []>} : vector<8x32xf32>, vector<32x32xf32>, vector<8x32xf32> -> vector<8x32xf32>
    %397 = arith.addf %395, %396 : vector<8x32xf32>
    %398 = math.tanh %397 : vector<8x32xf32>
    %c0_i32_212 = arith.constant 0 : i32
    %399 = vector.broadcast %c0_i32_212 : i32 to vector<8x1xi32>
    %400 = arith.cmpi sgt, %0, %399 : vector<8x1xi32>
    %401 = vector.shape_cast %400 : vector<8x1xi1> to vector<8x1xi1>
    %402 = vector.broadcast %401 : vector<8x1xi1> to vector<8x32xi1>
    %403 = arith.select %402, %398, %385 : vector<8x32xi1>, vector<8x32xf32>
    %c0_213 = arith.constant 0 : index
    %c0_214 = arith.constant 0 : index
    %404 = vector.load %arg14[%c0_213, %c0_214] : memref<64x4xf32, #tpu.memory_space<vmem>>, vector<32x4xf32>
    %cst_215 = arith.constant dense<0.000000e+00> : vector<8x4xf32>
    %405 = tpu.matmul %394, %404, %cst_215 {dimension_numbers = #tpu.dot_dimension_numbers<[1], [0], [0], [1], [0, 0, 1, 1], [], []>} : vector<8x32xf32>, vector<32x4xf32>, vector<8x4xf32> -> vector<8x4xf32>
    %c0_216 = arith.constant 0 : index
    %c0_217 = arith.constant 0 : index
    %406 = vector.load %arg15[%c0_216, %c0_217] : memref<1x4xf32, #tpu.memory_space<vmem>>, vector<1x4xf32>
    %407 = vector.broadcast %406 : vector<1x4xf32> to vector<8x4xf32>
    %408 = arith.addf %405, %407 : vector<8x4xf32>
    %c32_218 = arith.constant 32 : index
    %c0_219 = arith.constant 0 : index
    %409 = vector.load %arg14[%c32_218, %c0_219] : memref<64x4xf32, #tpu.memory_space<vmem>>, vector<32x4xf32>
    %cst_220 = arith.constant dense<0.000000e+00> : vector<8x4xf32>
    %410 = tpu.matmul %403, %409, %cst_220 {dimension_numbers = #tpu.dot_dimension_numbers<[1], [0], [0], [1], [0, 0, 1, 1], [], []>} : vector<8x32xf32>, vector<32x4xf32>, vector<8x4xf32> -> vector<8x4xf32>
    %411 = arith.addf %408, %410 : vector<8x4xf32>
    %c0_221 = arith.constant 0 : index
    %c0_222 = arith.constant 0 : index
    %412 = vector.load %arg16[%c0_221, %c0_222] : memref<8x4xf32, #tpu.memory_space<vmem>>, vector<8x4xf32>
    tpu.vector_store %arg16[%c0_221, %c0_222], %411 {strides = array<i32>} : memref<8x4xf32, #tpu.memory_space<vmem>>, vector<8x4xf32>,
    return
  }
}

</mosaic_0001>

<llo_original>
// kernel: tpu_custom_call.1
$region0: #{tpu_custom_call.1}
  #allocation0 [shape = 'u32[]', space=smem, size = 0x4, offset = 0x4, fixed_abs, tag = 'smem constant byte address 0x4 - core index']
  #allocation1 [shape = 'u32[144,128]{1,0:T(1,128)}', space=vmem, size = 0x12000, scoped, tag = 'internal scratch']
  #allocation2 [shape = 'f32[64,32]{1,0:T(8,128)}', space=vmem, size = 0x8000, scoped, tag = 'scratch operand']
  #allocation3 [shape = 'f32[64,32]{1,0:T(8,128)}', space=vmem, size = 0x8000, scoped, tag = 'scratch operand']
  #allocation4 [shape = 'f32[64,32]{1,0:T(8,128)}', space=vmem, size = 0x8000, scoped, tag = 'scratch operand']
  #allocation5 [shape = 'f32[64,32]{1,0:T(8,128)}', space=vmem, size = 0x8000, scoped, tag = 'scratch operand']
  %s0 = inlined_call_operand.vmem [shape: s32[8,1], index: 0, kind: input, shape index: {}]
  %s1 = inlined_call_operand.vmem [shape: f32[64,16], index: 1, kind: input, shape index: {}]
  %s2 = inlined_call_operand.vmem [shape: f32[16,32], index: 2, kind: input, shape index: {}]
  %s3 = inlined_call_operand.vmem [shape: f32[32,32], index: 3, kind: input, shape index: {}]
  %s4 = inlined_call_operand.vmem [shape: f32[1,32], index: 4, kind: input, shape index: {}]
  %s5 = inlined_call_operand.vmem [shape: f32[16,32], index: 5, kind: input, shape index: {}]
  %s6 = inlined_call_operand.vmem [shape: f32[32,32], index: 6, kind: input, shape index: {}]
  %s7 = inlined_call_operand.vmem [shape: f32[1,32], index: 7, kind: input, shape index: {}]
  %s8 = inlined_call_operand.vmem [shape: f32[64,32], index: 8, kind: input, shape index: {}]
  %s9 = inlined_call_operand.vmem [shape: f32[32,32], index: 9, kind: input, shape index: {}]
  %s10 = inlined_call_operand.vmem [shape: f32[1,32], index: 10, kind: input, shape index: {}]
  %s11 = inlined_call_operand.vmem [shape: f32[64,32], index: 11, kind: input, shape index: {}]
  %s12 = inlined_call_operand.vmem [shape: f32[32,32], index: 12, kind: input, shape index: {}]
  %s13 = inlined_call_operand.vmem [shape: f32[1,32], index: 13, kind: input, shape index: {}]
  %s14 = inlined_call_operand.vmem [shape: f32[64,4], index: 14, kind: input, shape index: {}]
  %s15 = inlined_call_operand.vmem [shape: f32[1,4], index: 15, kind: input, shape index: {}]
  %s16 = inlined_call_operand.vmem [shape: f32[8,4], index: 16, kind: output, shape index: {}]
  %s17 = sld [smem:[#allocation0]]
  $region74: #{tpu_custom_call.1} parent=0
    _
  %s19 = ssub.s32 1, %s17
  %s20 = scalar_select 0, %s19, %s17
  // Predicated region
  $region2: #{tpu_custom_call.1} parent=0 // pred_check
    _
  $region3: #{tpu_custom_call.1} parent=0 // pred_check_branch
    %22 = sbr.rel (0) target = $region5
  $region4: #{tpu_custom_call.1} parent=0 // pred_region
    _
  $region5: #{tpu_custom_call.1} parent=0 // pred_fallthru
    _
  // Predicated region
  $region6: #{tpu_custom_call.1} parent=0 // pred_check
    _
  $region7: #{tpu_custom_call.1} parent=0 // pred_check_branch
    %24 = sbr.rel (0) target = $region9
  $region8: #{tpu_custom_call.1} parent=0 // pred_region
    _
  $region9: #{tpu_custom_call.1} parent=0 // pred_fallthru
    _
  // Predicated region
  $region10: #{tpu_custom_call.1} parent=0 // pred_check
    _
  $region11: #{tpu_custom_call.1} parent=0 // pred_check_branch
    %26 = sbr.rel (0) target = $region13
  $region12: #{tpu_custom_call.1} parent=0 // pred_region
    _
  $region13: #{tpu_custom_call.1} parent=0 // pred_fallthru
    _
  // Predicated region
  $region14: #{tpu_custom_call.1} parent=0 // pred_check
    _
  $region15: #{tpu_custom_call.1} parent=0 // pred_check_branch
    %28 = sbr.rel (0) target = $region17
  $region16: #{tpu_custom_call.1} parent=0 // pred_region
    _
  $region17: #{tpu_custom_call.1} parent=0 // pred_fallthru
    _
  // Predicated region
  $region18: #{tpu_custom_call.1} parent=0 // pred_check
    _
  $region19: #{tpu_custom_call.1} parent=0 // pred_check_branch
    %30 = sbr.rel (0) target = $region21
  $region20: #{tpu_custom_call.1} parent=0 // pred_region
    _
  $region21: #{tpu_custom_call.1} parent=0 // pred_fallthru
    _
  // Predicated region
  $region22: #{tpu_custom_call.1} parent=0 // pred_check
    _
  $region23: #{tpu_custom_call.1} parent=0 // pred_check_branch
    %32 = sbr.rel (0) target = $region25
  $region24: #{tpu_custom_call.1} parent=0 // pred_region
    _
  $region25: #{tpu_custom_call.1} parent=0 // pred_fallthru
    _
  // Predicated region
  $region26: #{tpu_custom_call.1} parent=0 // pred_check
    _
  $region27: #{tpu_custom_call.1} parent=0 // pred_check_branch
    %34 = sbr.rel (0) target = $region29
  $region28: #{tpu_custom_call.1} parent=0 // pred_region
    _
  $region29: #{tpu_custom_call.1} parent=0 // pred_fallthru
    _
  // Predicated region
  $region30: #{tpu_custom_call.1} parent=0 // pred_check
    _
  $region31: #{tpu_custom_call.1} parent=0 // pred_check_branch
    %36 = sbr.rel (0) target = $region33
  $region32: #{tpu_custom_call.1} parent=0 // pred_region
    _
  $region33: #{tpu_custom_call.1} parent=0 // pred_fallthru
    _
  // Predicated region
  $region34: #{tpu_custom_call.1} parent=0 // pred_check
    _
  $region35: #{tpu_custom_call.1} parent=0 // pred_check_branch
    %38 = sbr.rel (0) target = $region37
  $region36: #{tpu_custom_call.1} parent=0 // pred_region
    _
  $region37: #{tpu_custom_call.1} parent=0 // pred_fallthru
    _
  // Predicated region
  $region38: #{tpu_custom_call.1} parent=0 // pred_check
    _
  $region39: #{tpu_custom_call.1} parent=0 // pred_check_branch
    %40 = sbr.rel (0) target = $region41
  $region40: #{tpu_custom_call.1} parent=0 // pred_region
    _
  $region41: #{tpu_custom_call.1} parent=0 // pred_fallthru
    _
  // Predicated region
  $region42: #{tpu_custom_call.1} parent=0 // pred_check
    _
  $region43: #{tpu_custom_call.1} parent=0 // pred_check_branch
    %42 = sbr.rel (0) target = $region45
  $region44: #{tpu_custom_call.1} parent=0 // pred_region
    _
  $region45: #{tpu_custom_call.1} parent=0 // pred_fallthru
    _
  // Predicated region
  $region46: #{tpu_custom_call.1} parent=0 // pred_check
    _
  $region47: #{tpu_custom_call.1} parent=0 // pred_check_branch
    %44 = sbr.rel (0) target = $region49
  $region48: #{tpu_custom_call.1} parent=0 // pred_region
    _
  $region49: #{tpu_custom_call.1} parent=0 // pred_fallthru
    _
  // Predicated region
  $region50: #{tpu_custom_call.1} parent=0 // pred_check
    _
  $region51: #{tpu_custom_call.1} parent=0 // pred_check_branch
    %46 = sbr.rel (0) target = $region53
  $region52: #{tpu_custom_call.1} parent=0 // pred_region
    _
  $region53: #{tpu_custom_call.1} parent=0 // pred_fallthru
    _
  // Predicated region
  $region54: #{tpu_custom_call.1} parent=0 // pred_check
    _
  $region55: #{tpu_custom_call.1} parent=0 // pred_check_branch
    %48 = sbr.rel (0) target = $region57
  $region56: #{tpu_custom_call.1} parent=0 // pred_region
    _
  $region57: #{tpu_custom_call.1} parent=0 // pred_fallthru
    _
  // Predicated region
  $region58: #{tpu_custom_call.1} parent=0 // pred_check
    _
  $region59: #{tpu_custom_call.1} parent=0 // pred_check_branch
    %50 = sbr.rel (0) target = $region61
  $region60: #{tpu_custom_call.1} parent=0 // pred_region
    _
  $region61: #{tpu_custom_call.1} parent=0 // pred_fallthru
    _
  // Predicated region
  $region62: #{tpu_custom_call.1} parent=0 // pred_check
    _
  $region63: #{tpu_custom_call.1} parent=0 // pred_check_branch
    %52 = sbr.rel (0) target = $region65
  $region64: #{tpu_custom_call.1} parent=0 // pred_region
    _
  $region65: #{tpu_custom_call.1} parent=0 // pred_fallthru
    _
  %v53 = vld [vmem:[%s0] sm:$0xff]
  %v54 = vld [vmem:[%s1] sm:$0xff]
  %v55 = vld [vmem:[%s1 + $0x8] sm:$0xff]
  %v56 = vld [vmem:[%s1 + $0x10] sm:$0xff]
  %v57 = vld [vmem:[%s1 + $0x18] sm:$0xff]
  %v58 = vld [vmem:[%s1 + $0x20] sm:$0xff]
  %v59 = vld [vmem:[%s1 + $0x28] sm:$0xff]
  %v60 = vld [vmem:[%s1 + $0x30] sm:$0xff]
  %v61 = vld [vmem:[%s1 + $0x38] sm:$0xff]
  %v62 = vld [vmem:[%s2] sm:$0xff]
  %v63 = vld [vmem:[%s2 + $0x8] sm:$0xff]
  %v64 = vld [vmem:[%s4] sm:$0x1]
  %v66 = vlaneseq
  %v67 = vshrl.u32 %v66, 7
  %v68 = vsub.s32 0, %v67
  %v69 = vrot.slane %v64, %v68
  %vm71 = vcmask 130048
  %v73 = vsel %vm71, %v54, 0
  %v76 = vsel %vm71, %v55, 0
  %v79 = vsel %vm71, %v56, 0
  %v82 = vsel %vm71, %v57, 0
  %v85 = vsel %vm71, %v58, 0
  %v88 = vsel %vm71, %v59, 0
  %v91 = vsel %vm71, %v60, 0
  %v94 = vsel %vm71, %v61, 0
  %96 = vmatprep.subr.mxu0 0.0
  %97 = vmatpush1.msra.mxu0 0.0
  %98 = vmatprep.subr.mxu0 0.0
  %99 = vmatpush1.msra.mxu0 0.0
  %100 = vmatprep.subr.mxu0 0.0
  %101 = vmatpush1.msra.mxu0 0.0
  %102 = vmatprep.subr.mxu0 0.0
  %103 = vmatpush1.msra.mxu0 0.0
  %104 = vmatprep.subr.mxu0 0.0
  %105 = vmatpush1.msra.mxu0 0.0
  %106 = vmatprep.subr.mxu0 0.0
  %107 = vmatpush1.msra.mxu0 0.0
  %108 = vmatprep.subr.mxu0 0.0
  %109 = vmatpush1.msra.mxu0 0.0
  %110 = vmatprep.subr.mxu0 0.0
  %111 = vmatpush1.msra.mxu0 0.0
  %112 = vmatprep.subr.mxu0 0.0
  %113 = vmatpush1.msra.mxu0 0.0
  %114 = vmatprep.subr.mxu0 0.0
  %115 = vmatpush1.msra.mxu0 0.0
  %116 = vmatprep.subr.mxu0 0.0
  %117 = vmatpush1.msra.mxu0 0.0
  %118 = vmatprep.subr.mxu0 0.0
  %119 = vmatpush1.msra.mxu0 0.0
  %120 = vmatprep.subr.mxu0 0.0
  %121 = vmatpush1.msra.mxu0 0.0
  %122 = vmatprep.subr.mxu0 0.0
  %123 = vmatpush1.msra.mxu0 0.0
  %124 = vmatprep.subr.mxu0 0.0
  %125 = vmatpush1.msra.mxu0 %v63
  %126 = vmatprep.subr.mxu0 0.0
  %127 = vmatpush1.msra.mxu0 %v62
  %128 = vmatprep.subr.mxu0 0.0
  %129 = vmatpush2.msra.mxu0 0.0
  %130 = vmatprep.subr.mxu0 0.0
  %131 = vmatpush2.msra.mxu0 0.0
  %132 = vmatprep.subr.mxu0 0.0
  %133 = vmatpush2.msra.mxu0 0.0
  %134 = vmatprep.subr.mxu0 0.0
  %135 = vmatpush2.msra.mxu0 0.0
  %136 = vmatprep.subr.mxu0 0.0
  %137 = vmatpush2.msra.mxu0 0.0
  %138 = vmatprep.subr.mxu0 0.0
  %139 = vmatpush2.msra.mxu0 0.0
  %140 = vmatprep.subr.mxu0 0.0
  %141 = vmatpush2.msra.mxu0 0.0
  %142 = vmatprep.subr.mxu0 0.0
  %143 = vmatpush2.msra.mxu0 0.0
  %144 = vmatprep.subr.mxu0 0.0
  %145 = vmatpush2.msra.mxu0 0.0
  %146 = vmatprep.subr.mxu0 0.0
  %147 = vmatpush2.msra.mxu0 0.0
  %148 = vmatprep.subr.mxu0 0.0
  %149 = vmatpush2.msra.mxu0 0.0
  %150 = vmatprep.subr.mxu0 0.0
  %151 = vmatpush2.msra.mxu0 0.0
  %152 = vmatprep.subr.mxu0 0.0
  %153 = vmatpush2.msra.mxu0 0.0
  %154 = vmatprep.subr.mxu0 0.0
  %155 = vmatpush2.msra.mxu0 0.0
  %156 = vmatprep.subr.mxu0 0.0
  %157 = vmatpush2.msra.mxu0 0.0
  %158 = vmatprep.subr.mxu0 0.0
  %159 = vmatpush2.msra.mxu0 0.0
  %160 = vmatprep.mubr.f32.mxu0 0.0
  %161 = vmatmul.mubr.f32.gmra.mxu0 %v73
  %v162 = vpop.f32.mrf.mxu0
  %v163 = vadd.f32 %v69, %v162
  %v164 = vpop.f32.mrf.mxu0
  %165 = vmatprep.mubr.f32.mxu0 0.0
  %166 = vmatmul.mubr.f32.gmra.mxu0 %v76
  %v167 = vpop.f32.mrf.mxu0
  %v168 = vadd.f32 %v69, %v167
  %v169 = vpop.f32.mrf.mxu0
  %170 = vmatprep.mubr.f32.mxu0 0.0
  %171 = vmatmul.mubr.f32.gmra.mxu0 %v79
  %v172 = vpop.f32.mrf.mxu0
  %v173 = vadd.f32 %v69, %v172
  %v174 = vpop.f32.mrf.mxu0
  %175 = vmatprep.mubr.f32.mxu0 0.0
  %176 = vmatmul.mubr.f32.gmra.mxu0 %v82
  %v177 = vpop.f32.mrf.mxu0
  %v178 = vadd.f32 %v69, %v177
  %v179 = vpop.f32.mrf.mxu0
  %180 = vmatprep.mubr.f32.mxu0 0.0
  %181 = vmatmul.mubr.f32.gmra.mxu0 %v85
  %v182 = vpop.f32.mrf.mxu0
  %v183 = vadd.f32 %v69, %v182
  %v184 = vpop.f32.mrf.mxu0
  %185 = vmatprep.mubr.f32.mxu0 0.0
  %186 = vmatmul.mubr.f32.gmra.mxu0 %v88
  %v187 = vpop.f32.mrf.mxu0
  %v188 = vadd.f32 %v69, %v187
  %v189 = vpop.f32.mrf.mxu0
  %190 = vmatprep.mubr.f32.mxu0 0.0
  %191 = vmatmul.mubr.f32.gmra.mxu0 %v91
  %v192 = vpop.f32.mrf.mxu0
  %v193 = vadd.f32 %v69, %v192
  %v194 = vpop.f32.mrf.mxu0
  %195 = vmatprep.mubr.f32.mxu0 0.0
  %196 = vmatmul.mubr.f32.gmra.mxu0 %v94
  %v197 = vpop.f32.mrf.mxu0
  %v198 = vadd.f32 %v69, %v197
  %v199 = vpop.f32.mrf.mxu0
  %200 = vdwg.mxu0
  %v201 = vld [vmem:[%s5] sm:$0xff]
  %v202 = vld [vmem:[%s5 + $0x8] sm:$0xff]
  %v203 = vld [vmem:[%s7] sm:$0x1]
  %v205 = vlaneseq
  %v206 = vshrl.u32 %v205, 7
  %v207 = vsub.s32 0, %v206
  %v208 = vrot.slane %v203, %v207
  %210 = vmatprep.subr.mxu0 0.0
  %211 = vmatpush1.msra.mxu0 0.0
  %212 = vmatprep.subr.mxu0 0.0
  %213 = vmatpush1.msra.mxu0 0.0
  %214 = vmatprep.subr.mxu0 0.0
  %215 = vmatpush1.msra.mxu0 0.0
  %216 = vmatprep.subr.mxu0 0.0
  %217 = vmatpush1.msra.mxu0 0.0
  %218 = vmatprep.subr.mxu0 0.0
  %219 = vmatpush1.msra.mxu0 0.0
  %220 = vmatprep.subr.mxu0 0.0
  %221 = vmatpush1.msra.mxu0 0.0
  %222 = vmatprep.subr.mxu0 0.0
  %223 = vmatpush1.msra.mxu0 0.0
  %224 = vmatprep.subr.mxu0 0.0
  %225 = vmatpush1.msra.mxu0 0.0
  %226 = vmatprep.subr.mxu0 0.0
  %227 = vmatpush1.msra.mxu0 0.0
  %228 = vmatprep.subr.mxu0 0.0
  %229 = vmatpush1.msra.mxu0 0.0
  %230 = vmatprep.subr.mxu0 0.0
  %231 = vmatpush1.msra.mxu0 0.0
  %232 = vmatprep.subr.mxu0 0.0
  %233 = vmatpush1.msra.mxu0 0.0
  %234 = vmatprep.subr.mxu0 0.0
  %235 = vmatpush1.msra.mxu0 0.0
  %236 = vmatprep.subr.mxu0 0.0
  %237 = vmatpush1.msra.mxu0 0.0
  %238 = vmatprep.subr.mxu0 0.0
  %239 = vmatpush1.msra.mxu0 %v202
  %240 = vmatprep.subr.mxu0 0.0
  %241 = vmatpush1.msra.mxu0 %v201
  %242 = vmatprep.subr.mxu0 0.0
  %243 = vmatpush2.msra.mxu0 0.0
  %244 = vmatprep.subr.mxu0 0.0
  %245 = vmatpush2.msra.mxu0 0.0
  %246 = vmatprep.subr.mxu0 0.0
  %247 = vmatpush2.msra.mxu0 0.0
  %248 = vmatprep.subr.mxu0 0.0
  %249 = vmatpush2.msra.mxu0 0.0
  %250 = vmatprep.subr.mxu0 0.0
  %251 = vmatpush2.msra.mxu0 0.0
  %252 = vmatprep.subr.mxu0 0.0
  %253 = vmatpush2.msra.mxu0 0.0
  %254 = vmatprep.subr.mxu0 0.0
  %255 = vmatpush2.msra.mxu0 0.0
  %256 = vmatprep.subr.mxu0 0.0
  %257 = vmatpush2.msra.mxu0 0.0
  %258 = vmatprep.subr.mxu0 0.0
  %259 = vmatpush2.msra.mxu0 0.0
  %260 = vmatprep.subr.mxu0 0.0
  %261 = vmatpush2.msra.mxu0 0.0
  %262 = vmatprep.subr.mxu0 0.0
  %263 = vmatpush2.msra.mxu0 0.0
  %264 = vmatprep.subr.mxu0 0.0
  %265 = vmatpush2.msra.mxu0 0.0
  %266 = vmatprep.subr.mxu0 0.0
  %267 = vmatpush2.msra.mxu0 0.0
  %268 = vmatprep.subr.mxu0 0.0
  %269 = vmatpush2.msra.mxu0 0.0
  %270 = vmatprep.subr.mxu0 0.0
  %271 = vmatpush2.msra.mxu0 0.0
  %272 = vmatprep.subr.mxu0 0.0
  %273 = vmatpush2.msra.mxu0 0.0
  %274 = vmatprep.mubr.f32.mxu0 0.0
  %275 = vmatmul.mubr.f32.gmra.mxu0 %v73
  %v276 = vpop.f32.mrf.mxu0
  %v277 = vadd.f32 %v208, %v276
  %v278 = vpop.f32.mrf.mxu0
  %279 = vmatprep.mubr.f32.mxu0 0.0
  %280 = vmatmul.mubr.f32.gmra.mxu0 %v76
  %v281 = vpop.f32.mrf.mxu0
  %v282 = vadd.f32 %v208, %v281
  %v283 = vpop.f32.mrf.mxu0
  %284 = vmatprep.mubr.f32.mxu0 0.0
  %285 = vmatmul.mubr.f32.gmra.mxu0 %v79
  %v286 = vpop.f32.mrf.mxu0
  %v287 = vadd.f32 %v208, %v286
  %v288 = vpop.f32.mrf.mxu0
  %289 = vmatprep.mubr.f32.mxu0 0.0
  %290 = vmatmul.mubr.f32.gmra.mxu0 %v82
  %v291 = vpop.f32.mrf.mxu0
  %v292 = vadd.f32 %v208, %v291
  %v293 = vpop.f32.mrf.mxu0
  %294 = vmatprep.mubr.f32.mxu0 0.0
  %295 = vmatmul.mubr.f32.gmra.mxu0 %v85
  %v296 = vpop.f32.mrf.mxu0
  %v297 = vadd.f32 %v208, %v296
  %v298 = vpop.f32.mrf.mxu0
  %299 = vmatprep.mubr.f32.mxu0 0.0
  %300 = vmatmul.mubr.f32.gmra.mxu0 %v88
  %v301 = vpop.f32.mrf.mxu0
  %v302 = vadd.f32 %v208, %v301
  %v303 = vpop.f32.mrf.mxu0
  %304 = vmatprep.mubr.f32.mxu0 0.0
  %305 = vmatmul.mubr.f32.gmra.mxu0 %v91
  %v306 = vpop.f32.mrf.mxu0
  %v307 = vadd.f32 %v208, %v306
  %v308 = vpop.f32.mrf.mxu0
  %309 = vmatprep.mubr.f32.mxu0 0.0
  %310 = vmatmul.mubr.f32.gmra.mxu0 %v94
  %v311 = vpop.f32.mrf.mxu0
  %v312 = vadd.f32 %v208, %v311
  %v313 = vpop.f32.mrf.mxu0
  %314 = vdwg.mxu0
  %vm315 = vcmask 261120
  %316 = vst.msk [vmem:[#allocation2] sm:$0xff] %vm315, %v163
  %317 = vst.msk [vmem:[#allocation2 + $0x8] sm:$0xff] %vm315, %v168
  %318 = vst.msk [vmem:[#allocation2 + $0x10] sm:$0xff] %vm315, %v173
  %319 = vst.msk [vmem:[#allocation2 + $0x18] sm:$0xff] %vm315, %v178
  %320 = vst.msk [vmem:[#allocation2 + $0x20] sm:$0xff] %vm315, %v183
  %321 = vst.msk [vmem:[#allocation2 + $0x28] sm:$0xff] %vm315, %v188
  %322 = vst.msk [vmem:[#allocation2 + $0x30] sm:$0xff] %vm315, %v193
  %323 = vst.msk [vmem:[#allocation2 + $0x38] sm:$0xff] %vm315, %v198
  %324 = vst.msk [vmem:[#allocation3] sm:$0xff] %vm315, %v277
  %325 = vst.msk [vmem:[#allocation3 + $0x8] sm:$0xff] %vm315, %v282
  %326 = vst.msk [vmem:[#allocation3 + $0x10] sm:$0xff] %vm315, %v287
  %327 = vst.msk [vmem:[#allocation3 + $0x18] sm:$0xff] %vm315, %v292
  %328 = vst.msk [vmem:[#allocation3 + $0x20] sm:$0xff] %vm315, %v297
  %329 = vst.msk [vmem:[#allocation3 + $0x28] sm:$0xff] %vm315, %v302
  %330 = vst.msk [vmem:[#allocation3 + $0x30] sm:$0xff] %vm315, %v307
  %331 = vst.msk [vmem:[#allocation3 + $0x38] sm:$0xff] %vm315, %v312
  %v332 = vld [vmem:[%s3] sm:$0xff]
  %v333 = vld [vmem:[%s3 + $0x8] sm:$0xff]
  %v334 = vld [vmem:[%s3 + $0x10] sm:$0xff]
  %v335 = vld [vmem:[%s3 + $0x18] sm:$0xff]
  %v336 = vld [vmem:[%s6] sm:$0xff]
  %v337 = vld [vmem:[%s6 + $0x8] sm:$0xff]
  %v338 = vld [vmem:[%s6 + $0x10] sm:$0xff]
  %v339 = vld [vmem:[%s6 + $0x18] sm:$0xff]
  %v340 = vld [vmem:[#allocation2] sm:$0xff]
  %v342 = vsel %vm315, 0.0, 0
  %344 = vmatprep.subr.mxu0 0.0
  %345 = vmatpush1.msra.mxu0 0.0
  %346 = vmatprep.subr.mxu0 0.0
  %347 = vmatpush1.msra.mxu0 0.0
  %348 = vmatprep.subr.mxu0 0.0
  %349 = vmatpush1.msra.mxu0 0.0
  %350 = vmatprep.subr.mxu0 0.0
  %351 = vmatpush1.msra.mxu0 0.0
  %352 = vmatprep.subr.mxu0 0.0
  %353 = vmatpush1.msra.mxu0 0.0
  %354 = vmatprep.subr.mxu0 0.0
  %355 = vmatpush1.msra.mxu0 0.0
  %356 = vmatprep.subr.mxu0 0.0
  %357 = vmatpush1.msra.mxu0 0.0
  %358 = vmatprep.subr.mxu0 0.0
  %359 = vmatpush1.msra.mxu0 0.0
  %360 = vmatprep.subr.mxu0 0.0
  %361 = vmatpush1.msra.mxu0 0.0
  %362 = vmatprep.subr.mxu0 0.0
  %363 = vmatpush1.msra.mxu0 0.0
  %364 = vmatprep.subr.mxu0 0.0
  %365 = vmatpush1.msra.mxu0 0.0
  %366 = vmatprep.subr.mxu0 0.0
  %367 = vmatpush1.msra.mxu0 0.0
  %368 = vmatprep.subr.mxu0 0.0
  %369 = vmatpush1.msra.mxu0 %v335
  %370 = vmatprep.subr.mxu0 0.0
  %371 = vmatpush1.msra.mxu0 %v334
  %372 = vmatprep.subr.mxu0 0.0
  %373 = vmatpush1.msra.mxu0 %v333
  %374 = vmatprep.subr.mxu0 0.0
  %375 = vmatpush1.msra.mxu0 %v332
  %376 = vmatprep.subr.mxu0 0.0
  %377 = vmatpush2.msra.mxu0 0.0
  %378 = vmatprep.subr.mxu0 0.0
  %379 = vmatpush2.msra.mxu0 0.0
  %380 = vmatprep.subr.mxu0 0.0
  %381 = vmatpush2.msra.mxu0 0.0
  %382 = vmatprep.subr.mxu0 0.0
  %383 = vmatpush2.msra.mxu0 0.0
  %384 = vmatprep.subr.mxu0 0.0
  %385 = vmatpush2.msra.mxu0 0.0
  %386 = vmatprep.subr.mxu0 0.0
  %387 = vmatpush2.msra.mxu0 0.0
  %388 = vmatprep.subr.mxu0 0.0
  %389 = vmatpush2.msra.mxu0 0.0
  %390 = vmatprep.subr.mxu0 0.0
  %391 = vmatpush2.msra.mxu0 0.0
  %392 = vmatprep.subr.mxu0 0.0
  %393 = vmatpush2.msra.mxu0 0.0
  %394 = vmatprep.subr.mxu0 0.0
  %395 = vmatpush2.msra.mxu0 0.0
  %396 = vmatprep.subr.mxu0 0.0
  %397 = vmatpush2.msra.mxu0 0.0
  %398 = vmatprep.subr.mxu0 0.0
  %399 = vmatpush2.msra.mxu0 0.0
  %400 = vmatprep.subr.mxu0 0.0
  %401 = vmatpush2.msra.mxu0 0.0
  %402 = vmatprep.subr.mxu0 0.0
  %403 = vmatpush2.msra.mxu0 0.0
  %404 = vmatprep.subr.mxu0 0.0
  %405 = vmatpush2.msra.mxu0 0.0
  %406 = vmatprep.subr.mxu0 0.0
  %407 = vmatpush2.msra.mxu0 0.0
  %408 = vmatprep.mubr.f32.mxu0 0.0
  %409 = vmatmul.mubr.f32.gmra.mxu0 %v342
  %v410 = vpop.f32.mrf.mxu0
  %v411 = vadd.f32 0.0, %v410
  %v412 = vpop.f32.mrf.mxu0
  %413 = vdwg.mxu0
  %v414 = vadd.f32 %v340, %v411
  %v415 = vtanh.pop %v414
  %vm416 = vcmp.gt.s32.totalorder %v53, 0
  %v417 = vsel %vm416, 1, 0
  %418 = vset.pattern.permute.xlu0 0
  %419 = vperm.xlu0 %418, %v417
  %v420 = vpop.permute.xlu0 %419
  %vm421 = vcmp.eq.s32.totalorder %v420, 1
  %v422 = vsel %vm421, %v415, 0.0
  %423 = vst.msk [vmem:[#allocation4] sm:$0xff] %vm315, %v422
  %v424 = vld [vmem:[#allocation3 + $0x38] sm:$0xff]
  %425 = vmatprep.subr.mxu0 0.0
  %426 = vmatpush1.msra.mxu0 0.0
  %427 = vmatprep.subr.mxu0 0.0
  %428 = vmatpush1.msra.mxu0 0.0
  %429 = vmatprep.subr.mxu0 0.0
  %430 = vmatpush1.msra.mxu0 0.0
  %431 = vmatprep.subr.mxu0 0.0
  %432 = vmatpush1.msra.mxu0 0.0
  %433 = vmatprep.subr.mxu0 0.0
  %434 = vmatpush1.msra.mxu0 0.0
  %435 = vmatprep.subr.mxu0 0.0
  %436 = vmatpush1.msra.mxu0 0.0
  %437 = vmatprep.subr.mxu0 0.0
  %438 = vmatpush1.msra.mxu0 0.0
  %439 = vmatprep.subr.mxu0 0.0
  %440 = vmatpush1.msra.mxu0 0.0
  %441 = vmatprep.subr.mxu0 0.0
  %442 = vmatpush1.msra.mxu0 0.0
  %443 = vmatprep.subr.mxu0 0.0
  %444 = vmatpush1.msra.mxu0 0.0
  %445 = vmatprep.subr.mxu0 0.0
  %446 = vmatpush1.msra.mxu0 0.0
  %447 = vmatprep.subr.mxu0 0.0
  %448 = vmatpush1.msra.mxu0 0.0
  %449 = vmatprep.subr.mxu0 0.0
  %450 = vmatpush1.msra.mxu0 %v339
  %451 = vmatprep.subr.mxu0 0.0
  %452 = vmatpush1.msra.mxu0 %v338
  %453 = vmatprep.subr.mxu0 0.0
  %454 = vmatpush1.msra.mxu0 %v337
  %455 = vmatprep.subr.mxu0 0.0
  %456 = vmatpush1.msra.mxu0 %v336
  %457 = vmatprep.subr.mxu0 0.0
  %458 = vmatpush2.msra.mxu0 0.0
  %459 = vmatprep.subr.mxu0 0.0
  %460 = vmatpush2.msra.mxu0 0.0
  %461 = vmatprep.subr.mxu0 0.0
  %462 = vmatpush2.msra.mxu0 0.0
  %463 = vmatprep.subr.mxu0 0.0
  %464 = vmatpush2.msra.mxu0 0.0
  %465 = vmatprep.subr.mxu0 0.0
  %466 = vmatpush2.msra.mxu0 0.0
  %467 = vmatprep.subr.mxu0 0.0
  %468 = vmatpush2.msra.mxu0 0.0
  %469 = vmatprep.subr.mxu0 0.0
  %470 = vmatpush2.msra.mxu0 0.0
  %471 = vmatprep.subr.mxu0 0.0
  %472 = vmatpush2.msra.mxu0 0.0
  %473 = vmatprep.subr.mxu0 0.0
  %474 = vmatpush2.msra.mxu0 0.0
  %475 = vmatprep.subr.mxu0 0.0
  %476 = vmatpush2.msra.mxu0 0.0
  %477 = vmatprep.subr.mxu0 0.0
  %478 = vmatpush2.msra.mxu0 0.0
  %479 = vmatprep.subr.mxu0 0.0
  %480 = vmatpush2.msra.mxu0 0.0
  %481 = vmatprep.subr.mxu0 0.0
  %482 = vmatpush2.msra.mxu0 0.0
  %483 = vmatprep.subr.mxu0 0.0
  %484 = vmatpush2.msra.mxu0 0.0
  %485 = vmatprep.subr.mxu0 0.0
  %486 = vmatpush2.msra.mxu0 0.0
  %487 = vmatprep.subr.mxu0 0.0
  %488 = vmatpush2.msra.mxu0 0.0
  %489 = vmatprep.mubr.f32.mxu0 0.0
  %490 = vmatmul.mubr.f32.gmra.mxu0 %v342
  %v491 = vpop.f32.mrf.mxu0
  %v492 = vadd.f32 0.0, %v491
  %v493 = vpop.f32.mrf.mxu0
  %494 = vdwg.mxu0
  %v495 = vadd.f32 %v424, %v492
  %v496 = vtanh.pop %v495
  %vm497 = vcmp.gt.s32.totalorder %v53, 7
  %v498 = vsel %vm497, 1, 0
  %499 = vset.pattern.permute.xlu0 0
  %500 = vperm.xlu0 %499, %v498
  %v501 = vpop.permute.xlu0 %500
  %vm502 = vcmp.eq.s32.totalorder %v501, 1
  %v503 = vsel %vm502, %v496, 0.0
  %504 = vst.msk [vmem:[#allocation5 + $0x38] sm:$0xff] %vm315, %v503
  %v505 = vld [vmem:[#allocation2 + $0x8] sm:$0xff]
  %v507 = vsel %vm315, %v422, 0
  %509 = vmatprep.subr.mxu0 0.0
  %510 = vmatpush1.msra.mxu0 0.0
  %511 = vmatprep.subr.mxu0 0.0
  %512 = vmatpush1.msra.mxu0 0.0
  %513 = vmatprep.subr.mxu0 0.0
  %514 = vmatpush1.msra.mxu0 0.0
  %515 = vmatprep.subr.mxu0 0.0
  %516 = vmatpush1.msra.mxu0 0.0
  %517 = vmatprep.subr.mxu0 0.0
  %518 = vmatpush1.msra.mxu0 0.0
  %519 = vmatprep.subr.mxu0 0.0
  %520 = vmatpush1.msra.mxu0 0.0
  %521 = vmatprep.subr.mxu0 0.0
  %522 = vmatpush1.msra.mxu0 0.0
  %523 = vmatprep.subr.mxu0 0.0
  %524 = vmatpush1.msra.mxu0 0.0
  %525 = vmatprep.subr.mxu0 0.0
  %526 = vmatpush1.msra.mxu0 0.0
  %527 = vmatprep.subr.mxu0 0.0
  %528 = vmatpush1.msra.mxu0 0.0
  %529 = vmatprep.subr.mxu0 0.0
  %530 = vmatpush1.msra.mxu0 0.0
  %531 = vmatprep.subr.mxu0 0.0
  %532 = vmatpush1.msra.mxu0 0.0
  %533 = vmatprep.subr.mxu0 0.0
  %534 = vmatpush1.msra.mxu0 %v335
  %535 = vmatprep.subr.mxu0 0.0
  %536 = vmatpush1.msra.mxu0 %v334
  %537 = vmatprep.subr.mxu0 0.0
  %538 = vmatpush1.msra.mxu0 %v333
  %539 = vmatprep.subr.mxu0 0.0
  %540 = vmatpush1.msra.mxu0 %v332
  %541 = vmatprep.subr.mxu0 0.0
  %542 = vmatpush2.msra.mxu0 0.0
  %543 = vmatprep.subr.mxu0 0.0
  %544 = vmatpush2.msra.mxu0 0.0
  %545 = vmatprep.subr.mxu0 0.0
  %546 = vmatpush2.msra.mxu0 0.0
  %547 = vmatprep.subr.mxu0 0.0
  %548 = vmatpush2.msra.mxu0 0.0
  %549 = vmatprep.subr.mxu0 0.0
  %550 = vmatpush2.msra.mxu0 0.0
  %551 = vmatprep.subr.mxu0 0.0
  %552 = vmatpush2.msra.mxu0 0.0
  %553 = vmatprep.subr.mxu0 0.0
  %554 = vmatpush2.msra.mxu0 0.0
  %555 = vmatprep.subr.mxu0 0.0
  %556 = vmatpush2.msra.mxu0 0.0
  %557 = vmatprep.subr.mxu0 0.0
  %558 = vmatpush2.msra.mxu0 0.0
  %559 = vmatprep.subr.mxu0 0.0
  %560 = vmatpush2.msra.mxu0 0.0
  %561 = vmatprep.subr.mxu0 0.0
  %562 = vmatpush2.msra.mxu0 0.0
  %563 = vmatprep.subr.mxu0 0.0
  %564 = vmatpush2.msra.mxu0 0.0
  %565 = vmatprep.subr.mxu0 0.0
  %566 = vmatpush2.msra.mxu0 0.0
  %567 = vmatprep.subr.mxu0 0.0
  %568 = vmatpush2.msra.mxu0 0.0
  %569 = vmatprep.subr.mxu0 0.0
  %570 = vmatpush2.msra.mxu0 0.0
  %571 = vmatprep.subr.mxu0 0.0
  %572 = vmatpush2.msra.mxu0 0.0
  %573 = vmatprep.mubr.f32.mxu0 0.0
  %574 = vmatmul.mubr.f32.gmra.mxu0 %v507
  %v575 = vpop.f32.mrf.mxu0
  %v576 = vadd.f32 0.0, %v575
  %v577 = vpop.f32.mrf.mxu0
  %578 = vdwg.mxu0
  %v579 = vadd.f32 %v505, %v576
  %v580 = vtanh.pop %v579
  %vm581 = vcmp.gt.s32.totalorder %v53, 1
  %v582 = vsel %vm581, 1, 0
  %583 = vset.pattern.permute.xlu0 0
  %584 = vperm.xlu0 %583, %v582
  %v585 = vpop.permute.xlu0 %584
  %vm586 = vcmp.eq.s32.totalorder %v585, 1
  %v587 = vsel %vm586, %v580, %v422
  %v588 = vsel %vm586, %v580, 0.0
  %589 = vst.msk [vmem:[#allocation4 + $0x8] sm:$0xff] %vm315, %v588
  %v590 = vld [vmem:[#allocation3 + $0x30] sm:$0xff]
  %v592 = vsel %vm315, %v503, 0
  %594 = vmatprep.subr.mxu0 0.0
  %595 = vmatpush1.msra.mxu0 0.0
  %596 = vmatprep.subr.mxu0 0.0
  %597 = vmatpush1.msra.mxu0 0.0
  %598 = vmatprep.subr.mxu0 0.0
  %599 = vmatpush1.msra.mxu0 0.0
  %600 = vmatprep.subr.mxu0 0.0
  %601 = vmatpush1.msra.mxu0 0.0
  %602 = vmatprep.subr.mxu0 0.0
  %603 = vmatpush1.msra.mxu0 0.0
  %604 = vmatprep.subr.mxu0 0.0
  %605 = vmatpush1.msra.mxu0 0.0
  %606 = vmatprep.subr.mxu0 0.0
  %607 = vmatpush1.msra.mxu0 0.0
  %608 = vmatprep.subr.mxu0 0.0
  %609 = vmatpush1.msra.mxu0 0.0
  %610 = vmatprep.subr.mxu0 0.0
  %611 = vmatpush1.msra.mxu0 0.0
  %612 = vmatprep.subr.mxu0 0.0
  %613 = vmatpush1.msra.mxu0 0.0
  %614 = vmatprep.subr.mxu0 0.0
  %615 = vmatpush1.msra.mxu0 0.0
  %616 = vmatprep.subr.mxu0 0.0
  %617 = vmatpush1.msra.mxu0 0.0
  %618 = vmatprep.subr.mxu0 0.0
  %619 = vmatpush1.msra.mxu0 %v339
  %620 = vmatprep.subr.mxu0 0.0
  %621 = vmatpush1.msra.mxu0 %v338
  %622 = vmatprep.subr.mxu0 0.0
  %623 = vmatpush1.msra.mxu0 %v337
  %624 = vmatprep.subr.mxu0 0.0
  %625 = vmatpush1.msra.mxu0 %v336
  %626 = vmatprep.subr.mxu0 0.0
  %627 = vmatpush2.msra.mxu0 0.0
  %628 = vmatprep.subr.mxu0 0.0
  %629 = vmatpush2.msra.mxu0 0.0
  %630 = vmatprep.subr.mxu0 0.0
  %631 = vmatpush2.msra.mxu0 0.0
  %632 = vmatprep.subr.mxu0 0.0
  %633 = vmatpush2.msra.mxu0 0.0
  %634 = vmatprep.subr.mxu0 0.0
  %635 = vmatpush2.msra.mxu0 0.0
  %636 = vmatprep.subr.mxu0 0.0
  %637 = vmatpush2.msra.mxu0 0.0
  %638 = vmatprep.subr.mxu0 0.0
  %639 = vmatpush2.msra.mxu0 0.0
  %640 = vmatprep.subr.mxu0 0.0
  %641 = vmatpush2.msra.mxu0 0.0
  %642 = vmatprep.subr.mxu0 0.0
  %643 = vmatpush2.msra.mxu0 0.0
  %644 = vmatprep.subr.mxu0 0.0
  %645 = vmatpush2.msra.mxu0 0.0
  %646 = vmatprep.subr.mxu0 0.0
  %647 = vmatpush2.msra.mxu0 0.0
  %648 = vmatprep.subr.mxu0 0.0
  %649 = vmatpush2.msra.mxu0 0.0
  %650 = vmatprep.subr.mxu0 0.0
  %651 = vmatpush2.msra.mxu0 0.0
  %652 = vmatprep.subr.mxu0 0.0
  %653 = vmatpush2.msra.mxu0 0.0
  %654 = vmatprep.subr.mxu0 0.0
  %655 = vmatpush2.msra.mxu0 0.0
  %656 = vmatprep.subr.mxu0 0.0
  %657 = vmatpush2.msra.mxu0 0.0
  %658 = vmatprep.mubr.f32.mxu0 0.0
  %659 = vmatmul.mubr.f32.gmra.mxu0 %v592
  %v660 = vpop.f32.mrf.mxu0
  %v661 = vadd.f32 0.0, %v660
  %v662 = vpop.f32.mrf.mxu0
  %663 = vdwg.mxu0
  %v664 = vadd.f32 %v590, %v661
  %v665 = vtanh.pop %v664
  %vm666 = vcmp.gt.s32.totalorder %v53, 6
  %v667 = vsel %vm666, 1, 0
  %668 = vset.pattern.permute.xlu0 0
  %669 = vperm.xlu0 %668, %v667
  %v670 = vpop.permute.xlu0 %669
  %vm671 = vcmp.eq.s32.totalorder %v670, 1
  %v672 = vsel %vm671, %v665, %v503
  %v673 = vsel %vm671, %v665, 0.0
  %674 = vst.msk [vmem:[#allocation5 + $0x30] sm:$0xff] %vm315, %v673
  %v675 = vld [vmem:[#allocation2 + $0x10] sm:$0xff]
  %v677 = vsel %vm315, %v587, 0
  %679 = vmatprep.subr.mxu0 0.0
  %680 = vmatpush1.msra.mxu0 0.0
  %681 = vmatprep.subr.mxu0 0.0
  %682 = vmatpush1.msra.mxu0 0.0
  %683 = vmatprep.subr.mxu0 0.0
  %684 = vmatpush1.msra.mxu0 0.0
  %685 = vmatprep.subr.mxu0 0.0
  %686 = vmatpush1.msra.mxu0 0.0
  %687 = vmatprep.subr.mxu0 0.0
  %688 = vmatpush1.msra.mxu0 0.0
  %689 = vmatprep.subr.mxu0 0.0
  %690 = vmatpush1.msra.mxu0 0.0
  %691 = vmatprep.subr.mxu0 0.0
  %692 = vmatpush1.msra.mxu0 0.0
  %693 = vmatprep.subr.mxu0 0.0
  %694 = vmatpush1.msra.mxu0 0.0
  %695 = vmatprep.subr.mxu0 0.0
  %696 = vmatpush1.msra.mxu0 0.0
  %697 = vmatprep.subr.mxu0 0.0
  %698 = vmatpush1.msra.mxu0 0.0
  %699 = vmatprep.subr.mxu0 0.0
  %700 = vmatpush1.msra.mxu0 0.0
  %701 = vmatprep.subr.mxu0 0.0
  %702 = vmatpush1.msra.mxu0 0.0
  %703 = vmatprep.subr.mxu0 0.0
  %704 = vmatpush1.msra.mxu0 %v335
  %705 = vmatprep.subr.mxu0 0.0
  %706 = vmatpush1.msra.mxu0 %v334
  %707 = vmatprep.subr.mxu0 0.0
  %708 = vmatpush1.msra.mxu0 %v333
  %709 = vmatprep.subr.mxu0 0.0
  %710 = vmatpush1.msra.mxu0 %v332
  %711 = vmatprep.subr.mxu0 0.0
  %712 = vmatpush2.msra.mxu0 0.0
  %713 = vmatprep.subr.mxu0 0.0
  %714 = vmatpush2.msra.mxu0 0.0
  %715 = vmatprep.subr.mxu0 0.0
  %716 = vmatpush2.msra.mxu0 0.0
  %717 = vmatprep.subr.mxu0 0.0
  %718 = vmatpush2.msra.mxu0 0.0
  %719 = vmatprep.subr.mxu0 0.0
  %720 = vmatpush2.msra.mxu0 0.0
  %721 = vmatprep.subr.mxu0 0.0
  %722 = vmatpush2.msra.mxu0 0.0
  %723 = vmatprep.subr.mxu0 0.0
  %724 = vmatpush2.msra.mxu0 0.0
  %725 = vmatprep.subr.mxu0 0.0
  %726 = vmatpush2.msra.mxu0 0.0
  %727 = vmatprep.subr.mxu0 0.0
  %728 = vmatpush2.msra.mxu0 0.0
  %729 = vmatprep.subr.mxu0 0.0
  %730 = vmatpush2.msra.mxu0 0.0
  %731 = vmatprep.subr.mxu0 0.0
  %732 = vmatpush2.msra.mxu0 0.0
  %733 = vmatprep.subr.mxu0 0.0
  %734 = vmatpush2.msra.mxu0 0.0
  %735 = vmatprep.subr.mxu0 0.0
  %736 = vmatpush2.msra.mxu0 0.0
  %737 = vmatprep.subr.mxu0 0.0
  %738 = vmatpush2.msra.mxu0 0.0
  %739 = vmatprep.subr.mxu0 0.0
  %740 = vmatpush2.msra.mxu0 0.0
  %741 = vmatprep.subr.mxu0 0.0
  %742 = vmatpush2.msra.mxu0 0.0
  %743 = vmatprep.mubr.f32.mxu0 0.0
  %744 = vmatmul.mubr.f32.gmra.mxu0 %v677
  %v745 = vpop.f32.mrf.mxu0
  %v746 = vadd.f32 0.0, %v745
  %v747 = vpop.f32.mrf.mxu0
  %748 = vdwg.mxu0
  %v749 = vadd.f32 %v675, %v746
  %v750 = vtanh.pop %v749
  %vm751 = vcmp.gt.s32.totalorder %v53, 2
  %v752 = vsel %vm751, 1, 0
  %753 = vset.pattern.permute.xlu0 0
  %754 = vperm.xlu0 %753, %v752
  %v755 = vpop.permute.xlu0 %754
  %vm756 = vcmp.eq.s32.totalorder %v755, 1
  %v757 = vsel %vm756, %v750, %v587
  %v758 = vsel %vm756, %v750, 0.0
  %759 = vst.msk [vmem:[#allocation4 + $0x10] sm:$0xff] %vm315, %v758
  %v760 = vld [vmem:[#allocation3 + $0x28] sm:$0xff]
  %v762 = vsel %vm315, %v672, 0
  %764 = vmatprep.subr.mxu0 0.0
  %765 = vmatpush1.msra.mxu0 0.0
  %766 = vmatprep.subr.mxu0 0.0
  %767 = vmatpush1.msra.mxu0 0.0
  %768 = vmatprep.subr.mxu0 0.0
  %769 = vmatpush1.msra.mxu0 0.0
  %770 = vmatprep.subr.mxu0 0.0
  %771 = vmatpush1.msra.mxu0 0.0
  %772 = vmatprep.subr.mxu0 0.0
  %773 = vmatpush1.msra.mxu0 0.0
  %774 = vmatprep.subr.mxu0 0.0
  %775 = vmatpush1.msra.mxu0 0.0
  %776 = vmatprep.subr.mxu0 0.0
  %777 = vmatpush1.msra.mxu0 0.0
  %778 = vmatprep.subr.mxu0 0.0
  %779 = vmatpush1.msra.mxu0 0.0
  %780 = vmatprep.subr.mxu0 0.0
  %781 = vmatpush1.msra.mxu0 0.0
  %782 = vmatprep.subr.mxu0 0.0
  %783 = vmatpush1.msra.mxu0 0.0
  %784 = vmatprep.subr.mxu0 0.0
  %785 = vmatpush1.msra.mxu0 0.0
  %786 = vmatprep.subr.mxu0 0.0
  %787 = vmatpush1.msra.mxu0 0.0
  %788 = vmatprep.subr.mxu0 0.0
  %789 = vmatpush1.msra.mxu0 %v339
  %790 = vmatprep.subr.mxu0 0.0
  %791 = vmatpush1.msra.mxu0 %v338
  %792 = vmatprep.subr.mxu0 0.0
  %793 = vmatpush1.msra.mxu0 %v337
  %794 = vmatprep.subr.mxu0 0.0
  %795 = vmatpush1.msra.mxu0 %v336
  %796 = vmatprep.subr.mxu0 0.0
  %797 = vmatpush2.msra.mxu0 0.0
  %798 = vmatprep.subr.mxu0 0.0
  %799 = vmatpush2.msra.mxu0 0.0
  %800 = vmatprep.subr.mxu0 0.0
  %801 = vmatpush2.msra.mxu0 0.0
  %802 = vmatprep.subr.mxu0 0.0
  %803 = vmatpush2.msra.mxu0 0.0
  %804 = vmatprep.subr.mxu0 0.0
  %805 = vmatpush2.msra.mxu0 0.0
  %806 = vmatprep.subr.mxu0 0.0
  %807 = vmatpush2.msra.mxu0 0.0
  %808 = vmatprep.subr.mxu0 0.0
  %809 = vmatpush2.msra.mxu0 0.0
  %810 = vmatprep.subr.mxu0 0.0
  %811 = vmatpush2.msra.mxu0 0.0
  %812 = vmatprep.subr.mxu0 0.0
  %813 = vmatpush2.msra.mxu0 0.0
  %814 = vmatprep.subr.mxu0 0.0
  %815 = vmatpush2.msra.mxu0 0.0
  %816 = vmatprep.subr.mxu0 0.0
  %817 = vmatpush2.msra.mxu0 0.0
  %818 = vmatprep.subr.mxu0 0.0
  %819 = vmatpush2.msra.mxu0 0.0
  %820 = vmatprep.subr.mxu0 0.0
  %821 = vmatpush2.msra.mxu0 0.0
  %822 = vmatprep.subr.mxu0 0.0
  %823 = vmatpush2.msra.mxu0 0.0
  %824 = vmatprep.subr.mxu0 0.0
  %825 = vmatpush2.msra.mxu0 0.0
  %826 = vmatprep.subr.mxu0 0.0
  %827 = vmatpush2.msra.mxu0 0.0
  %828 = vmatprep.mubr.f32.mxu0 0.0
  %829 = vmatmul.mubr.f32.gmra.mxu0 %v762
  %v830 = vpop.f32.mrf.mxu0
  %v831 = vadd.f32 0.0, %v830
  %v832 = vpop.f32.mrf.mxu0
  %833 = vdwg.mxu0
  %v834 = vadd.f32 %v760, %v831
  %v835 = vtanh.pop %v834
  %vm836 = vcmp.gt.s32.totalorder %v53, 5
  %v837 = vsel %vm836, 1, 0
  %838 = vset.pattern.permute.xlu0 0
  %839 = vperm.xlu0 %838, %v837
  %v840 = vpop.permute.xlu0 %839
  %vm841 = vcmp.eq.s32.totalorder %v840, 1
  %v842 = vsel %vm841, %v835, %v672
  %v843 = vsel %vm841, %v835, 0.0
  %844 = vst.msk [vmem:[#allocation5 + $0x28] sm:$0xff] %vm315, %v843
  %v845 = vld [vmem:[#allocation2 + $0x18] sm:$0xff]
  %v847 = vsel %vm315, %v757, 0
  %849 = vmatprep.subr.mxu0 0.0
  %850 = vmatpush1.msra.mxu0 0.0
  %851 = vmatprep.subr.mxu0 0.0
  %852 = vmatpush1.msra.mxu0 0.0
  %853 = vmatprep.subr.mxu0 0.0
  %854 = vmatpush1.msra.mxu0 0.0
  %855 = vmatprep.subr.mxu0 0.0
  %856 = vmatpush1.msra.mxu0 0.0
  %857 = vmatprep.subr.mxu0 0.0
  %858 = vmatpush1.msra.mxu0 0.0
  %859 = vmatprep.subr.mxu0 0.0
  %860 = vmatpush1.msra.mxu0 0.0
  %861 = vmatprep.subr.mxu0 0.0
  %862 = vmatpush1.msra.mxu0 0.0
  %863 = vmatprep.subr.mxu0 0.0
  %864 = vmatpush1.msra.mxu0 0.0
  %865 = vmatprep.subr.mxu0 0.0
  %866 = vmatpush1.msra.mxu0 0.0
  %867 = vmatprep.subr.mxu0 0.0
  %868 = vmatpush1.msra.mxu0 0.0
  %869 = vmatprep.subr.mxu0 0.0
  %870 = vmatpush1.msra.mxu0 0.0
  %871 = vmatprep.subr.mxu0 0.0
  %872 = vmatpush1.msra.mxu0 0.0
  %873 = vmatprep.subr.mxu0 0.0
  %874 = vmatpush1.msra.mxu0 %v335
  %875 = vmatprep.subr.mxu0 0.0
  %876 = vmatpush1.msra.mxu0 %v334
  %877 = vmatprep.subr.mxu0 0.0
  %878 = vmatpush1.msra.mxu0 %v333
  %879 = vmatprep.subr.mxu0 0.0
  %880 = vmatpush1.msra.mxu0 %v332
  %881 = vmatprep.subr.mxu0 0.0
  %882 = vmatpush2.msra.mxu0 0.0
  %883 = vmatprep.subr.mxu0 0.0
  %884 = vmatpush2.msra.mxu0 0.0
  %885 = vmatprep.subr.mxu0 0.0
  %886 = vmatpush2.msra.mxu0 0.0
  %887 = vmatprep.subr.mxu0 0.0
  %888 = vmatpush2.msra.mxu0 0.0
  %889 = vmatprep.subr.mxu0 0.0
  %890 = vmatpush2.msra.mxu0 0.0
  %891 = vmatprep.subr.mxu0 0.0
  %892 = vmatpush2.msra.mxu0 0.0
  %893 = vmatprep.subr.mxu0 0.0
  %894 = vmatpush2.msra.mxu0 0.0
  %895 = vmatprep.subr.mxu0 0.0
  %896 = vmatpush2.msra.mxu0 0.0
  %897 = vmatprep.subr.mxu0 0.0
  %898 = vmatpush2.msra.mxu0 0.0
  %899 = vmatprep.subr.mxu0 0.0
  %900 = vmatpush2.msra.mxu0 0.0
  %901 = vmatprep.subr.mxu0 0.0
  %902 = vmatpush2.msra.mxu0 0.0
  %903 = vmatprep.subr.mxu0 0.0
  %904 = vmatpush2.msra.mxu0 0.0
  %905 = vmatprep.subr.mxu0 0.0
  %906 = vmatpush2.msra.mxu0 0.0
  %907 = vmatprep.subr.mxu0 0.0
  %908 = vmatpush2.msra.mxu0 0.0
  %909 = vmatprep.subr.mxu0 0.0
  %910 = vmatpush2.msra.mxu0 0.0
  %911 = vmatprep.subr.mxu0 0.0
  %912 = vmatpush2.msra.mxu0 0.0
  %913 = vmatprep.mubr.f32.mxu0 0.0
  %914 = vmatmul.mubr.f32.gmra.mxu0 %v847
  %v915 = vpop.f32.mrf.mxu0
  %v916 = vadd.f32 0.0, %v915
  %v917 = vpop.f32.mrf.mxu0
  %918 = vdwg.mxu0
  %v919 = vadd.f32 %v845, %v916
  %v920 = vtanh.pop %v919
  %vm921 = vcmp.gt.s32.totalorder %v53, 3
  %v922 = vsel %vm921, 1, 0
  %923 = vset.pattern.permute.xlu0 0
  %924 = vperm.xlu0 %923, %v922
  %v925 = vpop.permute.xlu0 %924
  %vm926 = vcmp.eq.s32.totalorder %v925, 1
  %v927 = vsel %vm926, %v920, %v757
  %v928 = vsel %vm926, %v920, 0.0
  %929 = vst.msk [vmem:[#allocation4 + $0x18] sm:$0xff] %vm315, %v928
  %v930 = vld [vmem:[#allocation3 + $0x20] sm:$0xff]
  %v932 = vsel %vm315, %v842, 0
  %934 = vmatprep.subr.mxu0 0.0
  %935 = vmatpush1.msra.mxu0 0.0
  %936 = vmatprep.subr.mxu0 0.0
  %937 = vmatpush1.msra.mxu0 0.0
  %938 = vmatprep.subr.mxu0 0.0
  %939 = vmatpush1.msra.mxu0 0.0
  %940 = vmatprep.subr.mxu0 0.0
  %941 = vmatpush1.msra.mxu0 0.0
  %942 = vmatprep.subr.mxu0 0.0
  %943 = vmatpush1.msra.mxu0 0.0
  %944 = vmatprep.subr.mxu0 0.0
  %945 = vmatpush1.msra.mxu0 0.0
  %946 = vmatprep.subr.mxu0 0.0
  %947 = vmatpush1.msra.mxu0 0.0
  %948 = vmatprep.subr.mxu0 0.0
  %949 = vmatpush1.msra.mxu0 0.0
  %950 = vmatprep.subr.mxu0 0.0
  %951 = vmatpush1.msra.mxu0 0.0
  %952 = vmatprep.subr.mxu0 0.0
  %953 = vmatpush1.msra.mxu0 0.0
  %954 = vmatprep.subr.mxu0 0.0
  %955 = vmatpush1.msra.mxu0 0.0
  %956 = vmatprep.subr.mxu0 0.0
  %957 = vmatpush1.msra.mxu0 0.0
  %958 = vmatprep.subr.mxu0 0.0
  %959 = vmatpush1.msra.mxu0 %v339
  %960 = vmatprep.subr.mxu0 0.0
  %961 = vmatpush1.msra.mxu0 %v338
  %962 = vmatprep.subr.mxu0 0.0
  %963 = vmatpush1.msra.mxu0 %v337
  %964 = vmatprep.subr.mxu0 0.0
  %965 = vmatpush1.msra.mxu0 %v336
  %966 = vmatprep.subr.mxu0 0.0
  %967 = vmatpush2.msra.mxu0 0.0
  %968 = vmatprep.subr.mxu0 0.0
  %969 = vmatpush2.msra.mxu0 0.0
  %970 = vmatprep.subr.mxu0 0.0
  %971 = vmatpush2.msra.mxu0 0.0
  %972 = vmatprep.subr.mxu0 0.0
  %973 = vmatpush2.msra.mxu0 0.0
  %974 = vmatprep.subr.mxu0 0.0
  %975 = vmatpush2.msra.mxu0 0.0
  %976 = vmatprep.subr.mxu0 0.0
  %977 = vmatpush2.msra.mxu0 0.0
  %978 = vmatprep.subr.mxu0 0.0
  %979 = vmatpush2.msra.mxu0 0.0
  %980 = vmatprep.subr.mxu0 0.0
  %981 = vmatpush2.msra.mxu0 0.0
  %982 = vmatprep.subr.mxu0 0.0
  %983 = vmatpush2.msra.mxu0 0.0
  %984 = vmatprep.subr.mxu0 0.0
  %985 = vmatpush2.msra.mxu0 0.0
  %986 = vmatprep.subr.mxu0 0.0
  %987 = vmatpush2.msra.mxu0 0.0
  %988 = vmatprep.subr.mxu0 0.0
  %989 = vmatpush2.msra.mxu0 0.0
  %990 = vmatprep.subr.mxu0 0.0
  %991 = vmatpush2.msra.mxu0 0.0
  %992 = vmatprep.subr.mxu0 0.0
  %993 = vmatpush2.msra.mxu0 0.0
  %994 = vmatprep.subr.mxu0 0.0
  %995 = vmatpush2.msra.mxu0 0.0
  %996 = vmatprep.subr.mxu0 0.0
  %997 = vmatpush2.msra.mxu0 0.0
  %998 = vmatprep.mubr.f32.mxu0 0.0
  %999 = vmatmul.mubr.f32.gmra.mxu0 %v932
  %v1000 = vpop.f32.mrf.mxu0
  %v1001 = vadd.f32 0.0, %v1000
  %v1002 = vpop.f32.mrf.mxu0
  %1003 = vdwg.mxu0
  %v1004 = vadd.f32 %v930, %v1001
  %v1005 = vtanh.pop %v1004
  %vm1006 = vcmp.gt.s32.totalorder %v53, 4
  %v1007 = vsel %vm1006, 1, 0
  %1008 = vset.pattern.permute.xlu0 0
  %1009 = vperm.xlu0 %1008, %v1007
  %v1010 = vpop.permute.xlu0 %1009
  %vm1011 = vcmp.eq.s32.totalorder %v1010, 1
  %v1012 = vsel %vm1011, %v1005, %v842
  %v1013 = vsel %vm1011, %v1005, 0.0
  %1014 = vst.msk [vmem:[#allocation5 + $0x20] sm:$0xff] %vm315, %v1013
  %v1015 = vld [vmem:[#allocation2 + $0x20] sm:$0xff]
  %v1017 = vsel %vm315, %v927, 0
  %1019 = vmatprep.subr.mxu0 0.0
  %1020 = vmatpush1.msra.mxu0 0.0
  %1021 = vmatprep.subr.mxu0 0.0
  %1022 = vmatpush1.msra.mxu0 0.0
  %1023 = vmatprep.subr.mxu0 0.0
  %1024 = vmatpush1.msra.mxu0 0.0
  %1025 = vmatprep.subr.mxu0 0.0
  %1026 = vmatpush1.msra.mxu0 0.0
  %1027 = vmatprep.subr.mxu0 0.0
  %1028 = vmatpush1.msra.mxu0 0.0
  %1029 = vmatprep.subr.mxu0 0.0
  %1030 = vmatpush1.msra.mxu0 0.0
  %1031 = vmatprep.subr.mxu0 0.0
  %1032 = vmatpush1.msra.mxu0 0.0
  %1033 = vmatprep.subr.mxu0 0.0
  %1034 = vmatpush1.msra.mxu0 0.0
  %1035 = vmatprep.subr.mxu0 0.0
  %1036 = vmatpush1.msra.mxu0 0.0
  %1037 = vmatprep.subr.mxu0 0.0
  %1038 = vmatpush1.msra.mxu0 0.0
  %1039 = vmatprep.subr.mxu0 0.0
  %1040 = vmatpush1.msra.mxu0 0.0
  %1041 = vmatprep.subr.mxu0 0.0
  %1042 = vmatpush1.msra.mxu0 0.0
  %1043 = vmatprep.subr.mxu0 0.0
  %1044 = vmatpush1.msra.mxu0 %v335
  %1045 = vmatprep.subr.mxu0 0.0
  %1046 = vmatpush1.msra.mxu0 %v334
  %1047 = vmatprep.subr.mxu0 0.0
  %1048 = vmatpush1.msra.mxu0 %v333
  %1049 = vmatprep.subr.mxu0 0.0
  %1050 = vmatpush1.msra.mxu0 %v332
  %1051 = vmatprep.subr.mxu0 0.0
  %1052 = vmatpush2.msra.mxu0 0.0
  %1053 = vmatprep.subr.mxu0 0.0
  %1054 = vmatpush2.msra.mxu0 0.0
  %1055 = vmatprep.subr.mxu0 0.0
  %1056 = vmatpush2.msra.mxu0 0.0
  %1057 = vmatprep.subr.mxu0 0.0
  %1058 = vmatpush2.msra.mxu0 0.0
  %1059 = vmatprep.subr.mxu0 0.0
  %1060 = vmatpush2.msra.mxu0 0.0
  %1061 = vmatprep.subr.mxu0 0.0
  %1062 = vmatpush2.msra.mxu0 0.0
  %1063 = vmatprep.subr.mxu0 0.0
  %1064 = vmatpush2.msra.mxu0 0.0
  %1065 = vmatprep.subr.mxu0 0.0
  %1066 = vmatpush2.msra.mxu0 0.0
  %1067 = vmatprep.subr.mxu0 0.0
  %1068 = vmatpush2.msra.mxu0 0.0
  %1069 = vmatprep.subr.mxu0 0.0
  %1070 = vmatpush2.msra.mxu0 0.0
  %1071 = vmatprep.subr.mxu0 0.0
  %1072 = vmatpush2.msra.mxu0 0.0
  %1073 = vmatprep.subr.mxu0 0.0
  %1074 = vmatpush2.msra.mxu0 0.0
  %1075 = vmatprep.subr.mxu0 0.0
  %1076 = vmatpush2.msra.mxu0 0.0
  %1077 = vmatprep.subr.mxu0 0.0
  %1078 = vmatpush2.msra.mxu0 0.0
  %1079 = vmatprep.subr.mxu0 0.0
  %1080 = vmatpush2.msra.mxu0 0.0
  %1081 = vmatprep.subr.mxu0 0.0
  %1082 = vmatpush2.msra.mxu0 0.0
  %1083 = vmatprep.mubr.f32.mxu0 0.0
  %1084 = vmatmul.mubr.f32.gmra.mxu0 %v1017
  %v1085 = vpop.f32.mrf.mxu0
  %v1086 = vadd.f32 0.0, %v1085
  %v1087 = vpop.f32.mrf.mxu0
  %1088 = vdwg.mxu0
  %v1089 = vadd.f32 %v1015, %v1086
  %v1090 = vtanh.pop %v1089
  %v1091 = vsel %vm1011, %v1090, %v927
  %v1092 = vsel %vm1011, %v1090, 0.0
  %1093 = vst.msk [vmem:[#allocation4 + $0x20] sm:$0xff] %vm315, %v1092
  %v1094 = vld [vmem:[#allocation3 + $0x18] sm:$0xff]
  %v1096 = vsel %vm315, %v1012, 0
  %1098 = vmatprep.subr.mxu0 0.0
  %1099 = vmatpush1.msra.mxu0 0.0
  %1100 = vmatprep.subr.mxu0 0.0
  %1101 = vmatpush1.msra.mxu0 0.0
  %1102 = vmatprep.subr.mxu0 0.0
  %1103 = vmatpush1.msra.mxu0 0.0
  %1104 = vmatprep.subr.mxu0 0.0
  %1105 = vmatpush1.msra.mxu0 0.0
  %1106 = vmatprep.subr.mxu0 0.0
  %1107 = vmatpush1.msra.mxu0 0.0
  %1108 = vmatprep.subr.mxu0 0.0
  %1109 = vmatpush1.msra.mxu0 0.0
  %1110 = vmatprep.subr.mxu0 0.0
  %1111 = vmatpush1.msra.mxu0 0.0
  %1112 = vmatprep.subr.mxu0 0.0
  %1113 = vmatpush1.msra.mxu0 0.0
  %1114 = vmatprep.subr.mxu0 0.0
  %1115 = vmatpush1.msra.mxu0 0.0
  %1116 = vmatprep.subr.mxu0 0.0
  %1117 = vmatpush1.msra.mxu0 0.0
  %1118 = vmatprep.subr.mxu0 0.0
  %1119 = vmatpush1.msra.mxu0 0.0
  %1120 = vmatprep.subr.mxu0 0.0
  %1121 = vmatpush1.msra.mxu0 0.0
  %1122 = vmatprep.subr.mxu0 0.0
  %1123 = vmatpush1.msra.mxu0 %v339
  %1124 = vmatprep.subr.mxu0 0.0
  %1125 = vmatpush1.msra.mxu0 %v338
  %1126 = vmatprep.subr.mxu0 0.0
  %1127 = vmatpush1.msra.mxu0 %v337
  %1128 = vmatprep.subr.mxu0 0.0
  %1129 = vmatpush1.msra.mxu0 %v336
  %1130 = vmatprep.subr.mxu0 0.0
  %1131 = vmatpush2.msra.mxu0 0.0
  %1132 = vmatprep.subr.mxu0 0.0
  %1133 = vmatpush2.msra.mxu0 0.0
  %1134 = vmatprep.subr.mxu0 0.0
  %1135 = vmatpush2.msra.mxu0 0.0
  %1136 = vmatprep.subr.mxu0 0.0
  %1137 = vmatpush2.msra.mxu0 0.0
  %1138 = vmatprep.subr.mxu0 0.0
  %1139 = vmatpush2.msra.mxu0 0.0
  %1140 = vmatprep.subr.mxu0 0.0
  %1141 = vmatpush2.msra.mxu0 0.0
  %1142 = vmatprep.subr.mxu0 0.0
  %1143 = vmatpush2.msra.mxu0 0.0
  %1144 = vmatprep.subr.mxu0 0.0
  %1145 = vmatpush2.msra.mxu0 0.0
  %1146 = vmatprep.subr.mxu0 0.0
  %1147 = vmatpush2.msra.mxu0 0.0
  %1148 = vmatprep.subr.mxu0 0.0
  %1149 = vmatpush2.msra.mxu0 0.0
  %1150 = vmatprep.subr.mxu0 0.0
  %1151 = vmatpush2.msra.mxu0 0.0
  %1152 = vmatprep.subr.mxu0 0.0
  %1153 = vmatpush2.msra.mxu0 0.0
  %1154 = vmatprep.subr.mxu0 0.0
  %1155 = vmatpush2.msra.mxu0 0.0
  %1156 = vmatprep.subr.mxu0 0.0
  %1157 = vmatpush2.msra.mxu0 0.0
  %1158 = vmatprep.subr.mxu0 0.0
  %1159 = vmatpush2.msra.mxu0 0.0
  %1160 = vmatprep.subr.mxu0 0.0
  %1161 = vmatpush2.msra.mxu0 0.0
  %1162 = vmatprep.mubr.f32.mxu0 0.0
  %1163 = vmatmul.mubr.f32.gmra.mxu0 %v1096
  %v1164 = vpop.f32.mrf.mxu0
  %v1165 = vadd.f32 0.0, %v1164
  %v1166 = vpop.f32.mrf.mxu0
  %1167 = vdwg.mxu0
  %v1168 = vadd.f32 %v1094, %v1165
  %v1169 = vtanh.pop %v1168
  %v1170 = vsel %vm926, %v1169, %v1012
  %v1171 = vsel %vm926, %v1169, 0.0
  %1172 = vst.msk [vmem:[#allocation5 + $0x18] sm:$0xff] %vm315, %v1171
  %v1173 = vld [vmem:[#allocation2 + $0x28] sm:$0xff]
  %v1175 = vsel %vm315, %v1091, 0
  %1177 = vmatprep.subr.mxu0 0.0
  %1178 = vmatpush1.msra.mxu0 0.0
  %1179 = vmatprep.subr.mxu0 0.0
  %1180 = vmatpush1.msra.mxu0 0.0
  %1181 = vmatprep.subr.mxu0 0.0
  %1182 = vmatpush1.msra.mxu0 0.0
  %1183 = vmatprep.subr.mxu0 0.0
  %1184 = vmatpush1.msra.mxu0 0.0
  %1185 = vmatprep.subr.mxu0 0.0
  %1186 = vmatpush1.msra.mxu0 0.0
  %1187 = vmatprep.subr.mxu0 0.0
  %1188 = vmatpush1.msra.mxu0 0.0
  %1189 = vmatprep.subr.mxu0 0.0
  %1190 = vmatpush1.msra.mxu0 0.0
  %1191 = vmatprep.subr.mxu0 0.0
  %1192 = vmatpush1.msra.mxu0 0.0
  %1193 = vmatprep.subr.mxu0 0.0
  %1194 = vmatpush1.msra.mxu0 0.0
  %1195 = vmatprep.subr.mxu0 0.0
  %1196 = vmatpush1.msra.mxu0 0.0
  %1197 = vmatprep.subr.mxu0 0.0
  %1198 = vmatpush1.msra.mxu0 0.0
  %1199 = vmatprep.subr.mxu0 0.0
  %1200 = vmatpush1.msra.mxu0 0.0
  %1201 = vmatprep.subr.mxu0 0.0
  %1202 = vmatpush1.msra.mxu0 %v335
  %1203 = vmatprep.subr.mxu0 0.0
  %1204 = vmatpush1.msra.mxu0 %v334
  %1205 = vmatprep.subr.mxu0 0.0
  %1206 = vmatpush1.msra.mxu0 %v333
  %1207 = vmatprep.subr.mxu0 0.0
  %1208 = vmatpush1.msra.mxu0 %v332
  %1209 = vmatprep.subr.mxu0 0.0
  %1210 = vmatpush2.msra.mxu0 0.0
  %1211 = vmatprep.subr.mxu0 0.0
  %1212 = vmatpush2.msra.mxu0 0.0
  %1213 = vmatprep.subr.mxu0 0.0
  %1214 = vmatpush2.msra.mxu0 0.0
  %1215 = vmatprep.subr.mxu0 0.0
  %1216 = vmatpush2.msra.mxu0 0.0
  %1217 = vmatprep.subr.mxu0 0.0
  %1218 = vmatpush2.msra.mxu0 0.0
  %1219 = vmatprep.subr.mxu0 0.0
  %1220 = vmatpush2.msra.mxu0 0.0
  %1221 = vmatprep.subr.mxu0 0.0
  %1222 = vmatpush2.msra.mxu0 0.0
  %1223 = vmatprep.subr.mxu0 0.0
  %1224 = vmatpush2.msra.mxu0 0.0
  %1225 = vmatprep.subr.mxu0 0.0
  %1226 = vmatpush2.msra.mxu0 0.0
  %1227 = vmatprep.subr.mxu0 0.0
  %1228 = vmatpush2.msra.mxu0 0.0
  %1229 = vmatprep.subr.mxu0 0.0
  %1230 = vmatpush2.msra.mxu0 0.0
  %1231 = vmatprep.subr.mxu0 0.0
  %1232 = vmatpush2.msra.mxu0 0.0
  %1233 = vmatprep.subr.mxu0 0.0
  %1234 = vmatpush2.msra.mxu0 0.0
  %1235 = vmatprep.subr.mxu0 0.0
  %1236 = vmatpush2.msra.mxu0 0.0
  %1237 = vmatprep.subr.mxu0 0.0
  %1238 = vmatpush2.msra.mxu0 0.0
  %1239 = vmatprep.subr.mxu0 0.0
  %1240 = vmatpush2.msra.mxu0 0.0
  %1241 = vmatprep.mubr.f32.mxu0 0.0
  %1242 = vmatmul.mubr.f32.gmra.mxu0 %v1175
  %v1243 = vpop.f32.mrf.mxu0
  %v1244 = vadd.f32 0.0, %v1243
  %v1245 = vpop.f32.mrf.mxu0
  %1246 = vdwg.mxu0
  %v1247 = vadd.f32 %v1173, %v1244
  %v1248 = vtanh.pop %v1247
  %v1249 = vsel %vm841, %v1248, %v1091
  %v1250 = vsel %vm841, %v1248, 0.0
  %1251 = vst.msk [vmem:[#allocation4 + $0x28] sm:$0xff] %vm315, %v1250
  %v1252 = vld [vmem:[#allocation3 + $0x10] sm:$0xff]
  %v1254 = vsel %vm315, %v1170, 0
  %1256 = vmatprep.subr.mxu0 0.0
  %1257 = vmatpush1.msra.mxu0 0.0
  %1258 = vmatprep.subr.mxu0 0.0
  %1259 = vmatpush1.msra.mxu0 0.0
  %1260 = vmatprep.subr.mxu0 0.0
  %1261 = vmatpush1.msra.mxu0 0.0
  %1262 = vmatprep.subr.mxu0 0.0
  %1263 = vmatpush1.msra.mxu0 0.0
  %1264 = vmatprep.subr.mxu0 0.0
  %1265 = vmatpush1.msra.mxu0 0.0
  %1266 = vmatprep.subr.mxu0 0.0
  %1267 = vmatpush1.msra.mxu0 0.0
  %1268 = vmatprep.subr.mxu0 0.0
  %1269 = vmatpush1.msra.mxu0 0.0
  %1270 = vmatprep.subr.mxu0 0.0
  %1271 = vmatpush1.msra.mxu0 0.0
  %1272 = vmatprep.subr.mxu0 0.0
  %1273 = vmatpush1.msra.mxu0 0.0
  %1274 = vmatprep.subr.mxu0 0.0
  %1275 = vmatpush1.msra.mxu0 0.0
  %1276 = vmatprep.subr.mxu0 0.0
  %1277 = vmatpush1.msra.mxu0 0.0
  %1278 = vmatprep.subr.mxu0 0.0
  %1279 = vmatpush1.msra.mxu0 0.0
  %1280 = vmatprep.subr.mxu0 0.0
  %1281 = vmatpush1.msra.mxu0 %v339
  %1282 = vmatprep.subr.mxu0 0.0
  %1283 = vmatpush1.msra.mxu0 %v338
  %1284 = vmatprep.subr.mxu0 0.0
  %1285 = vmatpush1.msra.mxu0 %v337
  %1286 = vmatprep.subr.mxu0 0.0
  %1287 = vmatpush1.msra.mxu0 %v336
  %1288 = vmatprep.subr.mxu0 0.0
  %1289 = vmatpush2.msra.mxu0 0.0
  %1290 = vmatprep.subr.mxu0 0.0
  %1291 = vmatpush2.msra.mxu0 0.0
  %1292 = vmatprep.subr.mxu0 0.0
  %1293 = vmatpush2.msra.mxu0 0.0
  %1294 = vmatprep.subr.mxu0 0.0
  %1295 = vmatpush2.msra.mxu0 0.0
  %1296 = vmatprep.subr.mxu0 0.0
  %1297 = vmatpush2.msra.mxu0 0.0
  %1298 = vmatprep.subr.mxu0 0.0
  %1299 = vmatpush2.msra.mxu0 0.0
  %1300 = vmatprep.subr.mxu0 0.0
  %1301 = vmatpush2.msra.mxu0 0.0
  %1302 = vmatprep.subr.mxu0 0.0
  %1303 = vmatpush2.msra.mxu0 0.0
  %1304 = vmatprep.subr.mxu0 0.0
  %1305 = vmatpush2.msra.mxu0 0.0
  %1306 = vmatprep.subr.mxu0 0.0
  %1307 = vmatpush2.msra.mxu0 0.0
  %1308 = vmatprep.subr.mxu0 0.0
  %1309 = vmatpush2.msra.mxu0 0.0
  %1310 = vmatprep.subr.mxu0 0.0
  %1311 = vmatpush2.msra.mxu0 0.0
  %1312 = vmatprep.subr.mxu0 0.0
  %1313 = vmatpush2.msra.mxu0 0.0
  %1314 = vmatprep.subr.mxu0 0.0
  %1315 = vmatpush2.msra.mxu0 0.0
  %1316 = vmatprep.subr.mxu0 0.0
  %1317 = vmatpush2.msra.mxu0 0.0
  %1318 = vmatprep.subr.mxu0 0.0
  %1319 = vmatpush2.msra.mxu0 0.0
  %1320 = vmatprep.mubr.f32.mxu0 0.0
  %1321 = vmatmul.mubr.f32.gmra.mxu0 %v1254
  %v1322 = vpop.f32.mrf.mxu0
  %v1323 = vadd.f32 0.0, %v1322
  %v1324 = vpop.f32.mrf.mxu0
  %1325 = vdwg.mxu0
  %v1326 = vadd.f32 %v1252, %v1323
  %v1327 = vtanh.pop %v1326
  %v1328 = vsel %vm756, %v1327, %v1170
  %v1329 = vsel %vm756, %v1327, 0.0
  %1330 = vst.msk [vmem:[#allocation5 + $0x10] sm:$0xff] %vm315, %v1329
  %v1331 = vld [vmem:[#allocation2 + $0x30] sm:$0xff]
  %v1333 = vsel %vm315, %v1249, 0
  %1335 = vmatprep.subr.mxu0 0.0
  %1336 = vmatpush1.msra.mxu0 0.0
  %1337 = vmatprep.subr.mxu0 0.0
  %1338 = vmatpush1.msra.mxu0 0.0
  %1339 = vmatprep.subr.mxu0 0.0
  %1340 = vmatpush1.msra.mxu0 0.0
  %1341 = vmatprep.subr.mxu0 0.0
  %1342 = vmatpush1.msra.mxu0 0.0
  %1343 = vmatprep.subr.mxu0 0.0
  %1344 = vmatpush1.msra.mxu0 0.0
  %1345 = vmatprep.subr.mxu0 0.0
  %1346 = vmatpush1.msra.mxu0 0.0
  %1347 = vmatprep.subr.mxu0 0.0
  %1348 = vmatpush1.msra.mxu0 0.0
  %1349 = vmatprep.subr.mxu0 0.0
  %1350 = vmatpush1.msra.mxu0 0.0
  %1351 = vmatprep.subr.mxu0 0.0
  %1352 = vmatpush1.msra.mxu0 0.0
  %1353 = vmatprep.subr.mxu0 0.0
  %1354 = vmatpush1.msra.mxu0 0.0
  %1355 = vmatprep.subr.mxu0 0.0
  %1356 = vmatpush1.msra.mxu0 0.0
  %1357 = vmatprep.subr.mxu0 0.0
  %1358 = vmatpush1.msra.mxu0 0.0
  %1359 = vmatprep.subr.mxu0 0.0
  %1360 = vmatpush1.msra.mxu0 %v335
  %1361 = vmatprep.subr.mxu0 0.0
  %1362 = vmatpush1.msra.mxu0 %v334
  %1363 = vmatprep.subr.mxu0 0.0
  %1364 = vmatpush1.msra.mxu0 %v333
  %1365 = vmatprep.subr.mxu0 0.0
  %1366 = vmatpush1.msra.mxu0 %v332
  %1367 = vmatprep.subr.mxu0 0.0
  %1368 = vmatpush2.msra.mxu0 0.0
  %1369 = vmatprep.subr.mxu0 0.0
  %1370 = vmatpush2.msra.mxu0 0.0
  %1371 = vmatprep.subr.mxu0 0.0
  %1372 = vmatpush2.msra.mxu0 0.0
  %1373 = vmatprep.subr.mxu0 0.0
  %1374 = vmatpush2.msra.mxu0 0.0
  %1375 = vmatprep.subr.mxu0 0.0
  %1376 = vmatpush2.msra.mxu0 0.0
  %1377 = vmatprep.subr.mxu0 0.0
  %1378 = vmatpush2.msra.mxu0 0.0
  %1379 = vmatprep.subr.mxu0 0.0
  %1380 = vmatpush2.msra.mxu0 0.0
  %1381 = vmatprep.subr.mxu0 0.0
  %1382 = vmatpush2.msra.mxu0 0.0
  %1383 = vmatprep.subr.mxu0 0.0
  %1384 = vmatpush2.msra.mxu0 0.0
  %1385 = vmatprep.subr.mxu0 0.0
  %1386 = vmatpush2.msra.mxu0 0.0
  %1387 = vmatprep.subr.mxu0 0.0
  %1388 = vmatpush2.msra.mxu0 0.0
  %1389 = vmatprep.subr.mxu0 0.0
  %1390 = vmatpush2.msra.mxu0 0.0
  %1391 = vmatprep.subr.mxu0 0.0
  %1392 = vmatpush2.msra.mxu0 0.0
  %1393 = vmatprep.subr.mxu0 0.0
  %1394 = vmatpush2.msra.mxu0 0.0
  %1395 = vmatprep.subr.mxu0 0.0
  %1396 = vmatpush2.msra.mxu0 0.0
  %1397 = vmatprep.subr.mxu0 0.0
  %1398 = vmatpush2.msra.mxu0 0.0
  %1399 = vmatprep.mubr.f32.mxu0 0.0
  %1400 = vmatmul.mubr.f32.gmra.mxu0 %v1333
  %v1401 = vpop.f32.mrf.mxu0
  %v1402 = vadd.f32 0.0, %v1401
  %v1403 = vpop.f32.mrf.mxu0
  %1404 = vdwg.mxu0
  %v1405 = vadd.f32 %v1331, %v1402
  %v1406 = vtanh.pop %v1405
  %v1407 = vsel %vm671, %v1406, %v1249
  %v1408 = vsel %vm671, %v1406, 0.0
  %1409 = vst.msk [vmem:[#allocation4 + $0x30] sm:$0xff] %vm315, %v1408
  %v1410 = vld [vmem:[#allocation3 + $0x8] sm:$0xff]
  %v1412 = vsel %vm315, %v1328, 0
  %1414 = vmatprep.subr.mxu0 0.0
  %1415 = vmatpush1.msra.mxu0 0.0
  %1416 = vmatprep.subr.mxu0 0.0
  %1417 = vmatpush1.msra.mxu0 0.0
  %1418 = vmatprep.subr.mxu0 0.0
  %1419 = vmatpush1.msra.mxu0 0.0
  %1420 = vmatprep.subr.mxu0 0.0
  %1421 = vmatpush1.msra.mxu0 0.0
  %1422 = vmatprep.subr.mxu0 0.0
  %1423 = vmatpush1.msra.mxu0 0.0
  %1424 = vmatprep.subr.mxu0 0.0
  %1425 = vmatpush1.msra.mxu0 0.0
  %1426 = vmatprep.subr.mxu0 0.0
  %1427 = vmatpush1.msra.mxu0 0.0
  %1428 = vmatprep.subr.mxu0 0.0
  %1429 = vmatpush1.msra.mxu0 0.0
  %1430 = vmatprep.subr.mxu0 0.0
  %1431 = vmatpush1.msra.mxu0 0.0
  %1432 = vmatprep.subr.mxu0 0.0
  %1433 = vmatpush1.msra.mxu0 0.0
  %1434 = vmatprep.subr.mxu0 0.0
  %1435 = vmatpush1.msra.mxu0 0.0
  %1436 = vmatprep.subr.mxu0 0.0
  %1437 = vmatpush1.msra.mxu0 0.0
  %1438 = vmatprep.subr.mxu0 0.0
  %1439 = vmatpush1.msra.mxu0 %v339
  %1440 = vmatprep.subr.mxu0 0.0
  %1441 = vmatpush1.msra.mxu0 %v338
  %1442 = vmatprep.subr.mxu0 0.0
  %1443 = vmatpush1.msra.mxu0 %v337
  %1444 = vmatprep.subr.mxu0 0.0
  %1445 = vmatpush1.msra.mxu0 %v336
  %1446 = vmatprep.subr.mxu0 0.0
  %1447 = vmatpush2.msra.mxu0 0.0
  %1448 = vmatprep.subr.mxu0 0.0
  %1449 = vmatpush2.msra.mxu0 0.0
  %1450 = vmatprep.subr.mxu0 0.0
  %1451 = vmatpush2.msra.mxu0 0.0
  %1452 = vmatprep.subr.mxu0 0.0
  %1453 = vmatpush2.msra.mxu0 0.0
  %1454 = vmatprep.subr.mxu0 0.0
  %1455 = vmatpush2.msra.mxu0 0.0
  %1456 = vmatprep.subr.mxu0 0.0
  %1457 = vmatpush2.msra.mxu0 0.0
  %1458 = vmatprep.subr.mxu0 0.0
  %1459 = vmatpush2.msra.mxu0 0.0
  %1460 = vmatprep.subr.mxu0 0.0
  %1461 = vmatpush2.msra.mxu0 0.0
  %1462 = vmatprep.subr.mxu0 0.0
  %1463 = vmatpush2.msra.mxu0 0.0
  %1464 = vmatprep.subr.mxu0 0.0
  %1465 = vmatpush2.msra.mxu0 0.0
  %1466 = vmatprep.subr.mxu0 0.0
  %1467 = vmatpush2.msra.mxu0 0.0
  %1468 = vmatprep.subr.mxu0 0.0
  %1469 = vmatpush2.msra.mxu0 0.0
  %1470 = vmatprep.subr.mxu0 0.0
  %1471 = vmatpush2.msra.mxu0 0.0
  %1472 = vmatprep.subr.mxu0 0.0
  %1473 = vmatpush2.msra.mxu0 0.0
  %1474 = vmatprep.subr.mxu0 0.0
  %1475 = vmatpush2.msra.mxu0 0.0
  %1476 = vmatprep.subr.mxu0 0.0
  %1477 = vmatpush2.msra.mxu0 0.0
  %1478 = vmatprep.mubr.f32.mxu0 0.0
  %1479 = vmatmul.mubr.f32.gmra.mxu0 %v1412
  %v1480 = vpop.f32.mrf.mxu0
  %v1481 = vadd.f32 0.0, %v1480
  %v1482 = vpop.f32.mrf.mxu0
  %1483 = vdwg.mxu0
  %v1484 = vadd.f32 %v1410, %v1481
  %v1485 = vtanh.pop %v1484
  %v1486 = vsel %vm586, %v1485, %v1328
  %v1487 = vsel %vm586, %v1485, 0.0
  %1488 = vst.msk [vmem:[#allocation5 + $0x8] sm:$0xff] %vm315, %v1487
  %v1489 = vld [vmem:[#allocation2 + $0x38] sm:$0xff]
  %v1491 = vsel %vm315, %v1407, 0
  %1493 = vmatprep.subr.mxu0 0.0
  %1494 = vmatpush1.msra.mxu0 0.0
  %1495 = vmatprep.subr.mxu0 0.0
  %1496 = vmatpush1.msra.mxu0 0.0
  %1497 = vmatprep.subr.mxu0 0.0
  %1498 = vmatpush1.msra.mxu0 0.0
  %1499 = vmatprep.subr.mxu0 0.0
  %1500 = vmatpush1.msra.mxu0 0.0
  %1501 = vmatprep.subr.mxu0 0.0
  %1502 = vmatpush1.msra.mxu0 0.0
  %1503 = vmatprep.subr.mxu0 0.0
  %1504 = vmatpush1.msra.mxu0 0.0
  %1505 = vmatprep.subr.mxu0 0.0
  %1506 = vmatpush1.msra.mxu0 0.0
  %1507 = vmatprep.subr.mxu0 0.0
  %1508 = vmatpush1.msra.mxu0 0.0
  %1509 = vmatprep.subr.mxu0 0.0
  %1510 = vmatpush1.msra.mxu0 0.0
  %1511 = vmatprep.subr.mxu0 0.0
  %1512 = vmatpush1.msra.mxu0 0.0
  %1513 = vmatprep.subr.mxu0 0.0
  %1514 = vmatpush1.msra.mxu0 0.0
  %1515 = vmatprep.subr.mxu0 0.0
  %1516 = vmatpush1.msra.mxu0 0.0
  %1517 = vmatprep.subr.mxu0 0.0
  %1518 = vmatpush1.msra.mxu0 %v335
  %1519 = vmatprep.subr.mxu0 0.0
  %1520 = vmatpush1.msra.mxu0 %v334
  %1521 = vmatprep.subr.mxu0 0.0
  %1522 = vmatpush1.msra.mxu0 %v333
  %1523 = vmatprep.subr.mxu0 0.0
  %1524 = vmatpush1.msra.mxu0 %v332
  %1525 = vmatprep.subr.mxu0 0.0
  %1526 = vmatpush2.msra.mxu0 0.0
  %1527 = vmatprep.subr.mxu0 0.0
  %1528 = vmatpush2.msra.mxu0 0.0
  %1529 = vmatprep.subr.mxu0 0.0
  %1530 = vmatpush2.msra.mxu0 0.0
  %1531 = vmatprep.subr.mxu0 0.0
  %1532 = vmatpush2.msra.mxu0 0.0
  %1533 = vmatprep.subr.mxu0 0.0
  %1534 = vmatpush2.msra.mxu0 0.0
  %1535 = vmatprep.subr.mxu0 0.0
  %1536 = vmatpush2.msra.mxu0 0.0
  %1537 = vmatprep.subr.mxu0 0.0
  %1538 = vmatpush2.msra.mxu0 0.0
  %1539 = vmatprep.subr.mxu0 0.0
  %1540 = vmatpush2.msra.mxu0 0.0
  %1541 = vmatprep.subr.mxu0 0.0
  %1542 = vmatpush2.msra.mxu0 0.0
  %1543 = vmatprep.subr.mxu0 0.0
  %1544 = vmatpush2.msra.mxu0 0.0
  %1545 = vmatprep.subr.mxu0 0.0
  %1546 = vmatpush2.msra.mxu0 0.0
  %1547 = vmatprep.subr.mxu0 0.0
  %1548 = vmatpush2.msra.mxu0 0.0
  %1549 = vmatprep.subr.mxu0 0.0
  %1550 = vmatpush2.msra.mxu0 0.0
  %1551 = vmatprep.subr.mxu0 0.0
  %1552 = vmatpush2.msra.mxu0 0.0
  %1553 = vmatprep.subr.mxu0 0.0
  %1554 = vmatpush2.msra.mxu0 0.0
  %1555 = vmatprep.subr.mxu0 0.0
  %1556 = vmatpush2.msra.mxu0 0.0
  %1557 = vmatprep.mubr.f32.mxu0 0.0
  %1558 = vmatmul.mubr.f32.gmra.mxu0 %v1491
  %v1559 = vpop.f32.mrf.mxu0
  %v1560 = vadd.f32 0.0, %v1559
  %v1561 = vpop.f32.mrf.mxu0
  %1562 = vdwg.mxu0
  %v1563 = vadd.f32 %v1489, %v1560
  %v1564 = vtanh.pop %v1563
  %v1565 = vsel %vm502, %v1564, 0.0
  %1566 = vst.msk [vmem:[#allocation4 + $0x38] sm:$0xff] %vm315, %v1565
  %v1567 = vld [vmem:[#allocation3] sm:$0xff]
  %v1569 = vsel %vm315, %v1486, 0
  %1571 = vmatprep.subr.mxu0 0.0
  %1572 = vmatpush1.msra.mxu0 0.0
  %1573 = vmatprep.subr.mxu0 0.0
  %1574 = vmatpush1.msra.mxu0 0.0
  %1575 = vmatprep.subr.mxu0 0.0
  %1576 = vmatpush1.msra.mxu0 0.0
  %1577 = vmatprep.subr.mxu0 0.0
  %1578 = vmatpush1.msra.mxu0 0.0
  %1579 = vmatprep.subr.mxu0 0.0
  %1580 = vmatpush1.msra.mxu0 0.0
  %1581 = vmatprep.subr.mxu0 0.0
  %1582 = vmatpush1.msra.mxu0 0.0
  %1583 = vmatprep.subr.mxu0 0.0
  %1584 = vmatpush1.msra.mxu0 0.0
  %1585 = vmatprep.subr.mxu0 0.0
  %1586 = vmatpush1.msra.mxu0 0.0
  %1587 = vmatprep.subr.mxu0 0.0
  %1588 = vmatpush1.msra.mxu0 0.0
  %1589 = vmatprep.subr.mxu0 0.0
  %1590 = vmatpush1.msra.mxu0 0.0
  %1591 = vmatprep.subr.mxu0 0.0
  %1592 = vmatpush1.msra.mxu0 0.0
  %1593 = vmatprep.subr.mxu0 0.0
  %1594 = vmatpush1.msra.mxu0 0.0
  %1595 = vmatprep.subr.mxu0 0.0
  %1596 = vmatpush1.msra.mxu0 %v339
  %1597 = vmatprep.subr.mxu0 0.0
  %1598 = vmatpush1.msra.mxu0 %v338
  %1599 = vmatprep.subr.mxu0 0.0
  %1600 = vmatpush1.msra.mxu0 %v337
  %1601 = vmatprep.subr.mxu0 0.0
  %1602 = vmatpush1.msra.mxu0 %v336
  %1603 = vmatprep.subr.mxu0 0.0
  %1604 = vmatpush2.msra.mxu0 0.0
  %1605 = vmatprep.subr.mxu0 0.0
  %1606 = vmatpush2.msra.mxu0 0.0
  %1607 = vmatprep.subr.mxu0 0.0
  %1608 = vmatpush2.msra.mxu0 0.0
  %1609 = vmatprep.subr.mxu0 0.0
  %1610 = vmatpush2.msra.mxu0 0.0
  %1611 = vmatprep.subr.mxu0 0.0
  %1612 = vmatpush2.msra.mxu0 0.0
  %1613 = vmatprep.subr.mxu0 0.0
  %1614 = vmatpush2.msra.mxu0 0.0
  %1615 = vmatprep.subr.mxu0 0.0
  %1616 = vmatpush2.msra.mxu0 0.0
  %1617 = vmatprep.subr.mxu0 0.0
  %1618 = vmatpush2.msra.mxu0 0.0
  %1619 = vmatprep.subr.mxu0 0.0
  %1620 = vmatpush2.msra.mxu0 0.0
  %1621 = vmatprep.subr.mxu0 0.0
  %1622 = vmatpush2.msra.mxu0 0.0
  %1623 = vmatprep.subr.mxu0 0.0
  %1624 = vmatpush2.msra.mxu0 0.0
  %1625 = vmatprep.subr.mxu0 0.0
  %1626 = vmatpush2.msra.mxu0 0.0
  %1627 = vmatprep.subr.mxu0 0.0
  %1628 = vmatpush2.msra.mxu0 0.0
  %1629 = vmatprep.subr.mxu0 0.0
  %1630 = vmatpush2.msra.mxu0 0.0
  %1631 = vmatprep.subr.mxu0 0.0
  %1632 = vmatpush2.msra.mxu0 0.0
  %1633 = vmatprep.subr.mxu0 0.0
  %1634 = vmatpush2.msra.mxu0 0.0
  %1635 = vmatprep.mubr.f32.mxu0 0.0
  %1636 = vmatmul.mubr.f32.gmra.mxu0 %v1569
  %v1637 = vpop.f32.mrf.mxu0
  %v1638 = vadd.f32 0.0, %v1637
  %v1639 = vpop.f32.mrf.mxu0
  %1640 = vdwg.mxu0
  %v1641 = vadd.f32 %v1567, %v1638
  %v1642 = vtanh.pop %v1641
  %v1643 = vsel %vm421, %v1642, 0.0
  %1644 = vst.msk [vmem:[#allocation5] sm:$0xff] %vm315, %v1643
  %v1645 = vld [vmem:[#allocation4] sm:$0xff]
  %v1646 = vld [vmem:[#allocation4 + $0x8] sm:$0xff]
  %v1647 = vld [vmem:[#allocation4 + $0x10] sm:$0xff]
  %v1648 = vld [vmem:[#allocation4 + $0x18] sm:$0xff]
  %v1649 = vld [vmem:[#allocation4 + $0x20] sm:$0xff]
  %v1650 = vld [vmem:[#allocation4 + $0x28] sm:$0xff]
  %v1651 = vld [vmem:[#allocation4 + $0x30] sm:$0xff]
  %v1652 = vld [vmem:[#allocation4 + $0x38] sm:$0xff]
  %v1653 = vld [vmem:[#allocation5] sm:$0xff]
  %v1654 = vld [vmem:[#allocation5 + $0x8] sm:$0xff]
  %v1655 = vld [vmem:[#allocation5 + $0x10] sm:$0xff]
  %v1656 = vld [vmem:[#allocation5 + $0x18] sm:$0xff]
  %v1657 = vld [vmem:[#allocation5 + $0x20] sm:$0xff]
  %v1658 = vld [vmem:[#allocation5 + $0x28] sm:$0xff]
  %v1659 = vld [vmem:[#allocation5 + $0x30] sm:$0xff]
  %v1660 = vld [vmem:[#allocation5 + $0x38] sm:$0xff]
  %v1661 = vld [vmem:[%s8] sm:$0xff]
  %v1662 = vld [vmem:[%s8 + $0x8] sm:$0xff]
  %v1663 = vld [vmem:[%s8 + $0x10] sm:$0xff]
  %v1664 = vld [vmem:[%s8 + $0x18] sm:$0xff]
  %v1665 = vld [vmem:[%s8 + $0x20] sm:$0xff]
  %v1666 = vld [vmem:[%s8 + $0x28] sm:$0xff]
  %v1667 = vld [vmem:[%s8 + $0x30] sm:$0xff]
  %v1668 = vld [vmem:[%s8 + $0x38] sm:$0xff]
  %v1670 = vsel %vm315, %v1653, 0
  %v1673 = vsel %vm315, %v1654, 0
  %v1676 = vsel %vm315, %v1655, 0
  %v1679 = vsel %vm315, %v1656, 0
  %v1682 = vsel %vm315, %v1657, 0
  %v1685 = vsel %vm315, %v1658, 0
  %v1688 = vsel %vm315, %v1659, 0
  %v1691 = vsel %vm315, %v1660, 0
  %1693 = vmatprep.subr.mxu0 0.0
  %1694 = vmatpush1.msra.mxu0 0.0
  %1695 = vmatprep.subr.mxu0 0.0
  %1696 = vmatpush1.msra.mxu0 0.0
  %1697 = vmatprep.subr.mxu0 0.0
  %1698 = vmatpush1.msra.mxu0 0.0
  %1699 = vmatprep.subr.mxu0 0.0
  %1700 = vmatpush1.msra.mxu0 0.0
  %1701 = vmatprep.subr.mxu0 0.0
  %1702 = vmatpush1.msra.mxu0 0.0
  %1703 = vmatprep.subr.mxu0 0.0
  %1704 = vmatpush1.msra.mxu0 0.0
  %1705 = vmatprep.subr.mxu0 0.0
  %1706 = vmatpush1.msra.mxu0 0.0
  %1707 = vmatprep.subr.mxu0 0.0
  %1708 = vmatpush1.msra.mxu0 0.0
  %1709 = vmatprep.subr.mxu0 0.0
  %1710 = vmatpush1.msra.mxu0 0.0
  %1711 = vmatprep.subr.mxu0 0.0
  %1712 = vmatpush1.msra.mxu0 0.0
  %1713 = vmatprep.subr.mxu0 0.0
  %1714 = vmatpush1.msra.mxu0 0.0
  %1715 = vmatprep.subr.mxu0 0.0
  %1716 = vmatpush1.msra.mxu0 0.0
  %1717 = vmatprep.subr.mxu0 0.0
  %1718 = vmatpush1.msra.mxu0 %v1668
  %1719 = vmatprep.subr.mxu0 0.0
  %1720 = vmatpush1.msra.mxu0 %v1667
  %1721 = vmatprep.subr.mxu0 0.0
  %1722 = vmatpush1.msra.mxu0 %v1666
  %1723 = vmatprep.subr.mxu0 0.0
  %1724 = vmatpush1.msra.mxu0 %v1665
  %1725 = vmatprep.subr.mxu0 0.0
  %1726 = vmatpush2.msra.mxu0 0.0
  %1727 = vmatprep.subr.mxu0 0.0
  %1728 = vmatpush2.msra.mxu0 0.0
  %1729 = vmatprep.subr.mxu0 0.0
  %1730 = vmatpush2.msra.mxu0 0.0
  %1731 = vmatprep.subr.mxu0 0.0
  %1732 = vmatpush2.msra.mxu0 0.0
  %1733 = vmatprep.subr.mxu0 0.0
  %1734 = vmatpush2.msra.mxu0 0.0
  %1735 = vmatprep.subr.mxu0 0.0
  %1736 = vmatpush2.msra.mxu0 0.0
  %1737 = vmatprep.subr.mxu0 0.0
  %1738 = vmatpush2.msra.mxu0 0.0
  %1739 = vmatprep.subr.mxu0 0.0
  %1740 = vmatpush2.msra.mxu0 0.0
  %1741 = vmatprep.subr.mxu0 0.0
  %1742 = vmatpush2.msra.mxu0 0.0
  %1743 = vmatprep.subr.mxu0 0.0
  %1744 = vmatpush2.msra.mxu0 0.0
  %1745 = vmatprep.subr.mxu0 0.0
  %1746 = vmatpush2.msra.mxu0 0.0
  %1747 = vmatprep.subr.mxu0 0.0
  %1748 = vmatpush2.msra.mxu0 0.0
  %1749 = vmatprep.subr.mxu0 0.0
  %1750 = vmatpush2.msra.mxu0 0.0
  %1751 = vmatprep.subr.mxu0 0.0
  %1752 = vmatpush2.msra.mxu0 0.0
  %1753 = vmatprep.subr.mxu0 0.0
  %1754 = vmatpush2.msra.mxu0 0.0
  %1755 = vmatprep.subr.mxu0 0.0
  %1756 = vmatpush2.msra.mxu0 0.0
  %1757 = vmatprep.mubr.f32.mxu0 0.0
  %1758 = vmatmul.mubr.f32.gmra.mxu0 %v1670
  %v1759 = vpop.f32.mrf.mxu0
  %v1760 = vadd.f32 0.0, %v1759
  %v1761 = vpop.f32.mrf.mxu0
  %1762 = vmatprep.mubr.f32.mxu0 0.0
  %1763 = vmatmul.mubr.f32.gmra.mxu0 %v1673
  %v1764 = vpop.f32.mrf.mxu0
  %v1765 = vadd.f32 0.0, %v1764
  %v1766 = vpop.f32.mrf.mxu0
  %1767 = vmatprep.mubr.f32.mxu0 0.0
  %1768 = vmatmul.mubr.f32.gmra.mxu0 %v1676
  %v1769 = vpop.f32.mrf.mxu0
  %v1770 = vadd.f32 0.0, %v1769
  %v1771 = vpop.f32.mrf.mxu0
  %1772 = vmatprep.mubr.f32.mxu0 0.0
  %1773 = vmatmul.mubr.f32.gmra.mxu0 %v1679
  %v1774 = vpop.f32.mrf.mxu0
  %v1775 = vadd.f32 0.0, %v1774
  %v1776 = vpop.f32.mrf.mxu0
  %1777 = vmatprep.mubr.f32.mxu0 0.0
  %1778 = vmatmul.mubr.f32.gmra.mxu0 %v1682
  %v1779 = vpop.f32.mrf.mxu0
  %v1780 = vadd.f32 0.0, %v1779
  %v1781 = vpop.f32.mrf.mxu0
  %1782 = vmatprep.mubr.f32.mxu0 0.0
  %1783 = vmatmul.mubr.f32.gmra.mxu0 %v1685
  %v1784 = vpop.f32.mrf.mxu0
  %v1785 = vadd.f32 0.0, %v1784
  %v1786 = vpop.f32.mrf.mxu0
  %1787 = vmatprep.mubr.f32.mxu0 0.0
  %1788 = vmatmul.mubr.f32.gmra.mxu0 %v1688
  %v1789 = vpop.f32.mrf.mxu0
  %v1790 = vadd.f32 0.0, %v1789
  %v1791 = vpop.f32.mrf.mxu0
  %1792 = vmatprep.mubr.f32.mxu0 0.0
  %1793 = vmatmul.mubr.f32.gmra.mxu0 %v1691
  %v1794 = vpop.f32.mrf.mxu0
  %v1795 = vadd.f32 0.0, %v1794
  %v1796 = vpop.f32.mrf.mxu0
  %1797 = vdwg.mxu0
  %v1799 = vsel %vm315, %v1645, 0
  %v1802 = vsel %vm315, %v1646, 0
  %v1805 = vsel %vm315, %v1647, 0
  %v1808 = vsel %vm315, %v1648, 0
  %v1811 = vsel %vm315, %v1649, 0
  %v1814 = vsel %vm315, %v1650, 0
  %v1817 = vsel %vm315, %v1651, 0
  %v1820 = vsel %vm315, %v1652, 0
  %1822 = vmatprep.subr.mxu0 0.0
  %1823 = vmatpush1.msra.mxu0 0.0
  %1824 = vmatprep.subr.mxu0 0.0
  %1825 = vmatpush1.msra.mxu0 0.0
  %1826 = vmatprep.subr.mxu0 0.0
  %1827 = vmatpush1.msra.mxu0 0.0
  %1828 = vmatprep.subr.mxu0 0.0
  %1829 = vmatpush1.msra.mxu0 0.0
  %1830 = vmatprep.subr.mxu0 0.0
  %1831 = vmatpush1.msra.mxu0 0.0
  %1832 = vmatprep.subr.mxu0 0.0
  %1833 = vmatpush1.msra.mxu0 0.0
  %1834 = vmatprep.subr.mxu0 0.0
  %1835 = vmatpush1.msra.mxu0 0.0
  %1836 = vmatprep.subr.mxu0 0.0
  %1837 = vmatpush1.msra.mxu0 0.0
  %1838 = vmatprep.subr.mxu0 0.0
  %1839 = vmatpush1.msra.mxu0 0.0
  %1840 = vmatprep.subr.mxu0 0.0
  %1841 = vmatpush1.msra.mxu0 0.0
  %1842 = vmatprep.subr.mxu0 0.0
  %1843 = vmatpush1.msra.mxu0 0.0
  %1844 = vmatprep.subr.mxu0 0.0
  %1845 = vmatpush1.msra.mxu0 0.0
  %1846 = vmatprep.subr.mxu0 0.0
  %1847 = vmatpush1.msra.mxu0 %v1664
  %1848 = vmatprep.subr.mxu0 0.0
  %1849 = vmatpush1.msra.mxu0 %v1663
  %1850 = vmatprep.subr.mxu0 0.0
  %1851 = vmatpush1.msra.mxu0 %v1662
  %1852 = vmatprep.subr.mxu0 0.0
  %1853 = vmatpush1.msra.mxu0 %v1661
  %1854 = vmatprep.subr.mxu0 0.0
  %1855 = vmatpush2.msra.mxu0 0.0
  %1856 = vmatprep.subr.mxu0 0.0
  %1857 = vmatpush2.msra.mxu0 0.0
  %1858 = vmatprep.subr.mxu0 0.0
  %1859 = vmatpush2.msra.mxu0 0.0
  %1860 = vmatprep.subr.mxu0 0.0
  %1861 = vmatpush2.msra.mxu0 0.0
  %1862 = vmatprep.subr.mxu0 0.0
  %1863 = vmatpush2.msra.mxu0 0.0
  %1864 = vmatprep.subr.mxu0 0.0
  %1865 = vmatpush2.msra.mxu0 0.0
  %1866 = vmatprep.subr.mxu0 0.0
  %1867 = vmatpush2.msra.mxu0 0.0
  %1868 = vmatprep.subr.mxu0 0.0
  %1869 = vmatpush2.msra.mxu0 0.0
  %1870 = vmatprep.subr.mxu0 0.0
  %1871 = vmatpush2.msra.mxu0 0.0
  %1872 = vmatprep.subr.mxu0 0.0
  %1873 = vmatpush2.msra.mxu0 0.0
  %1874 = vmatprep.subr.mxu0 0.0
  %1875 = vmatpush2.msra.mxu0 0.0
  %1876 = vmatprep.subr.mxu0 0.0
  %1877 = vmatpush2.msra.mxu0 0.0
  %1878 = vmatprep.subr.mxu0 0.0
  %1879 = vmatpush2.msra.mxu0 0.0
  %1880 = vmatprep.subr.mxu0 0.0
  %1881 = vmatpush2.msra.mxu0 0.0
  %1882 = vmatprep.subr.mxu0 0.0
  %1883 = vmatpush2.msra.mxu0 0.0
  %1884 = vmatprep.subr.mxu0 0.0
  %1885 = vmatpush2.msra.mxu0 0.0
  %1886 = vmatprep.mubr.f32.mxu0 0.0
  %1887 = vmatmul.mubr.f32.gmra.mxu0 %v1799
  %v1888 = vpop.f32.mrf.mxu0
  %v1889 = vadd.f32 %v1760, %v1888
  %v1890 = vpop.f32.mrf.mxu0
  %1891 = vmatprep.mubr.f32.mxu0 0.0
  %1892 = vmatmul.mubr.f32.gmra.mxu0 %v1802
  %v1893 = vpop.f32.mrf.mxu0
  %v1894 = vadd.f32 %v1765, %v1893
  %v1895 = vpop.f32.mrf.mxu0
  %1896 = vmatprep.mubr.f32.mxu0 0.0
  %1897 = vmatmul.mubr.f32.gmra.mxu0 %v1805
  %v1898 = vpop.f32.mrf.mxu0
  %v1899 = vadd.f32 %v1770, %v1898
  %v1900 = vpop.f32.mrf.mxu0
  %1901 = vmatprep.mubr.f32.mxu0 0.0
  %1902 = vmatmul.mubr.f32.gmra.mxu0 %v1808
  %v1903 = vpop.f32.mrf.mxu0
  %v1904 = vadd.f32 %v1775, %v1903
  %v1905 = vpop.f32.mrf.mxu0
  %1906 = vmatprep.mubr.f32.mxu0 0.0
  %1907 = vmatmul.mubr.f32.gmra.mxu0 %v1811
  %v1908 = vpop.f32.mrf.mxu0
  %v1909 = vadd.f32 %v1780, %v1908
  %v1910 = vpop.f32.mrf.mxu0
  %1911 = vmatprep.mubr.f32.mxu0 0.0
  %1912 = vmatmul.mubr.f32.gmra.mxu0 %v1814
  %v1913 = vpop.f32.mrf.mxu0
  %v1914 = vadd.f32 %v1785, %v1913
  %v1915 = vpop.f32.mrf.mxu0
  %1916 = vmatprep.mubr.f32.mxu0 0.0
  %1917 = vmatmul.mubr.f32.gmra.mxu0 %v1817
  %v1918 = vpop.f32.mrf.mxu0
  %v1919 = vadd.f32 %v1790, %v1918
  %v1920 = vpop.f32.mrf.mxu0
  %1921 = vmatprep.mubr.f32.mxu0 0.0
  %1922 = vmatmul.mubr.f32.gmra.mxu0 %v1820
  %v1923 = vpop.f32.mrf.mxu0
  %v1924 = vadd.f32 %v1795, %v1923
  %v1925 = vpop.f32.mrf.mxu0
  %1926 = vdwg.mxu0
  %v1927 = vld [vmem:[%s10] sm:$0x1]
  %v1929 = vlaneseq
  %v1930 = vshrl.u32 %v1929, 7
  %v1931 = vsub.s32 0, %v1930
  %v1932 = vrot.slane %v1927, %v1931
  %v1934 = vadd.f32 %v1889, %v1932
  %v1935 = vadd.f32 %v1894, %v1932
  %v1936 = vadd.f32 %v1899, %v1932
  %v1937 = vadd.f32 %v1904, %v1932
  %v1938 = vadd.f32 %v1909, %v1932
  %v1939 = vadd.f32 %v1914, %v1932
  %v1940 = vadd.f32 %v1919, %v1932
  %v1941 = vadd.f32 %v1924, %v1932
  %v1942 = vld [vmem:[%s11] sm:$0xff]
  %v1943 = vld [vmem:[%s11 + $0x8] sm:$0xff]
  %v1944 = vld [vmem:[%s11 + $0x10] sm:$0xff]
  %v1945 = vld [vmem:[%s11 + $0x18] sm:$0xff]
  %v1946 = vld [vmem:[%s11 + $0x20] sm:$0xff]
  %v1947 = vld [vmem:[%s11 + $0x28] sm:$0xff]
  %v1948 = vld [vmem:[%s11 + $0x30] sm:$0xff]
  %v1949 = vld [vmem:[%s11 + $0x38] sm:$0xff]
  %1950 = vmatprep.subr.mxu0 0.0
  %1951 = vmatpush1.msra.mxu0 0.0
  %1952 = vmatprep.subr.mxu0 0.0
  %1953 = vmatpush1.msra.mxu0 0.0
  %1954 = vmatprep.subr.mxu0 0.0
  %1955 = vmatpush1.msra.mxu0 0.0
  %1956 = vmatprep.subr.mxu0 0.0
  %1957 = vmatpush1.msra.mxu0 0.0
  %1958 = vmatprep.subr.mxu0 0.0
  %1959 = vmatpush1.msra.mxu0 0.0
  %1960 = vmatprep.subr.mxu0 0.0
  %1961 = vmatpush1.msra.mxu0 0.0
  %1962 = vmatprep.subr.mxu0 0.0
  %1963 = vmatpush1.msra.mxu0 0.0
  %1964 = vmatprep.subr.mxu0 0.0
  %1965 = vmatpush1.msra.mxu0 0.0
  %1966 = vmatprep.subr.mxu0 0.0
  %1967 = vmatpush1.msra.mxu0 0.0
  %1968 = vmatprep.subr.mxu0 0.0
  %1969 = vmatpush1.msra.mxu0 0.0
  %1970 = vmatprep.subr.mxu0 0.0
  %1971 = vmatpush1.msra.mxu0 0.0
  %1972 = vmatprep.subr.mxu0 0.0
  %1973 = vmatpush1.msra.mxu0 0.0
  %1974 = vmatprep.subr.mxu0 0.0
  %1975 = vmatpush1.msra.mxu0 %v1949
  %1976 = vmatprep.subr.mxu0 0.0
  %1977 = vmatpush1.msra.mxu0 %v1948
  %1978 = vmatprep.subr.mxu0 0.0
  %1979 = vmatpush1.msra.mxu0 %v1947
  %1980 = vmatprep.subr.mxu0 0.0
  %1981 = vmatpush1.msra.mxu0 %v1946
  %1982 = vmatprep.subr.mxu0 0.0
  %1983 = vmatpush2.msra.mxu0 0.0
  %1984 = vmatprep.subr.mxu0 0.0
  %1985 = vmatpush2.msra.mxu0 0.0
  %1986 = vmatprep.subr.mxu0 0.0
  %1987 = vmatpush2.msra.mxu0 0.0
  %1988 = vmatprep.subr.mxu0 0.0
  %1989 = vmatpush2.msra.mxu0 0.0
  %1990 = vmatprep.subr.mxu0 0.0
  %1991 = vmatpush2.msra.mxu0 0.0
  %1992 = vmatprep.subr.mxu0 0.0
  %1993 = vmatpush2.msra.mxu0 0.0
  %1994 = vmatprep.subr.mxu0 0.0
  %1995 = vmatpush2.msra.mxu0 0.0
  %1996 = vmatprep.subr.mxu0 0.0
  %1997 = vmatpush2.msra.mxu0 0.0
  %1998 = vmatprep.subr.mxu0 0.0
  %1999 = vmatpush2.msra.mxu0 0.0
  %2000 = vmatprep.subr.mxu0 0.0
  %2001 = vmatpush2.msra.mxu0 0.0
  %2002 = vmatprep.subr.mxu0 0.0
  %2003 = vmatpush2.msra.mxu0 0.0
  %2004 = vmatprep.subr.mxu0 0.0
  %2005 = vmatpush2.msra.mxu0 0.0
  %2006 = vmatprep.subr.mxu0 0.0
  %2007 = vmatpush2.msra.mxu0 0.0
  %2008 = vmatprep.subr.mxu0 0.0
  %2009 = vmatpush2.msra.mxu0 0.0
  %2010 = vmatprep.subr.mxu0 0.0
  %2011 = vmatpush2.msra.mxu0 0.0
  %2012 = vmatprep.subr.mxu0 0.0
  %2013 = vmatpush2.msra.mxu0 0.0
  %2014 = vmatprep.mubr.f32.mxu0 0.0
  %2015 = vmatmul.mubr.f32.gmra.mxu0 %v1670
  %v2016 = vpop.f32.mrf.mxu0
  %v2017 = vadd.f32 0.0, %v2016
  %v2018 = vpop.f32.mrf.mxu0
  %2019 = vmatprep.mubr.f32.mxu0 0.0
  %2020 = vmatmul.mubr.f32.gmra.mxu0 %v1673
  %v2021 = vpop.f32.mrf.mxu0
  %v2022 = vadd.f32 0.0, %v2021
  %v2023 = vpop.f32.mrf.mxu0
  %2024 = vmatprep.mubr.f32.mxu0 0.0
  %2025 = vmatmul.mubr.f32.gmra.mxu0 %v1676
  %v2026 = vpop.f32.mrf.mxu0
  %v2027 = vadd.f32 0.0, %v2026
  %v2028 = vpop.f32.mrf.mxu0
  %2029 = vmatprep.mubr.f32.mxu0 0.0
  %2030 = vmatmul.mubr.f32.gmra.mxu0 %v1679
  %v2031 = vpop.f32.mrf.mxu0
  %v2032 = vadd.f32 0.0, %v2031
  %v2033 = vpop.f32.mrf.mxu0
  %2034 = vmatprep.mubr.f32.mxu0 0.0
  %2035 = vmatmul.mubr.f32.gmra.mxu0 %v1682
  %v2036 = vpop.f32.mrf.mxu0
  %v2037 = vadd.f32 0.0, %v2036
  %v2038 = vpop.f32.mrf.mxu0
  %2039 = vmatprep.mubr.f32.mxu0 0.0
  %2040 = vmatmul.mubr.f32.gmra.mxu0 %v1685
  %v2041 = vpop.f32.mrf.mxu0
  %v2042 = vadd.f32 0.0, %v2041
  %v2043 = vpop.f32.mrf.mxu0
  %2044 = vmatprep.mubr.f32.mxu0 0.0
  %2045 = vmatmul.mubr.f32.gmra.mxu0 %v1688
  %v2046 = vpop.f32.mrf.mxu0
  %v2047 = vadd.f32 0.0, %v2046
  %v2048 = vpop.f32.mrf.mxu0
  %2049 = vmatprep.mubr.f32.mxu0 0.0
  %2050 = vmatmul.mubr.f32.gmra.mxu0 %v1691
  %v2051 = vpop.f32.mrf.mxu0
  %v2052 = vadd.f32 0.0, %v2051
  %v2053 = vpop.f32.mrf.mxu0
  %2054 = vdwg.mxu0
  %2055 = vmatprep.subr.mxu0 0.0
  %2056 = vmatpush1.msra.mxu0 0.0
  %2057 = vmatprep.subr.mxu0 0.0
  %2058 = vmatpush1.msra.mxu0 0.0
  %2059 = vmatprep.subr.mxu0 0.0
  %2060 = vmatpush1.msra.mxu0 0.0
  %2061 = vmatprep.subr.mxu0 0.0
  %2062 = vmatpush1.msra.mxu0 0.0
  %2063 = vmatprep.subr.mxu0 0.0
  %2064 = vmatpush1.msra.mxu0 0.0
  %2065 = vmatprep.subr.mxu0 0.0
  %2066 = vmatpush1.msra.mxu0 0.0
  %2067 = vmatprep.subr.mxu0 0.0
  %2068 = vmatpush1.msra.mxu0 0.0
  %2069 = vmatprep.subr.mxu0 0.0
  %2070 = vmatpush1.msra.mxu0 0.0
  %2071 = vmatprep.subr.mxu0 0.0
  %2072 = vmatpush1.msra.mxu0 0.0
  %2073 = vmatprep.subr.mxu0 0.0
  %2074 = vmatpush1.msra.mxu0 0.0
  %2075 = vmatprep.subr.mxu0 0.0
  %2076 = vmatpush1.msra.mxu0 0.0
  %2077 = vmatprep.subr.mxu0 0.0
  %2078 = vmatpush1.msra.mxu0 0.0
  %2079 = vmatprep.subr.mxu0 0.0
  %2080 = vmatpush1.msra.mxu0 %v1945
  %2081 = vmatprep.subr.mxu0 0.0
  %2082 = vmatpush1.msra.mxu0 %v1944
  %2083 = vmatprep.subr.mxu0 0.0
  %2084 = vmatpush1.msra.mxu0 %v1943
  %2085 = vmatprep.subr.mxu0 0.0
  %2086 = vmatpush1.msra.mxu0 %v1942
  %2087 = vmatprep.subr.mxu0 0.0
  %2088 = vmatpush2.msra.mxu0 0.0
  %2089 = vmatprep.subr.mxu0 0.0
  %2090 = vmatpush2.msra.mxu0 0.0
  %2091 = vmatprep.subr.mxu0 0.0
  %2092 = vmatpush2.msra.mxu0 0.0
  %2093 = vmatprep.subr.mxu0 0.0
  %2094 = vmatpush2.msra.mxu0 0.0
  %2095 = vmatprep.subr.mxu0 0.0
  %2096 = vmatpush2.msra.mxu0 0.0
  %2097 = vmatprep.subr.mxu0 0.0
  %2098 = vmatpush2.msra.mxu0 0.0
  %2099 = vmatprep.subr.mxu0 0.0
  %2100 = vmatpush2.msra.mxu0 0.0
  %2101 = vmatprep.subr.mxu0 0.0
  %2102 = vmatpush2.msra.mxu0 0.0
  %2103 = vmatprep.subr.mxu0 0.0
  %2104 = vmatpush2.msra.mxu0 0.0
  %2105 = vmatprep.subr.mxu0 0.0
  %2106 = vmatpush2.msra.mxu0 0.0
  %2107 = vmatprep.subr.mxu0 0.0
  %2108 = vmatpush2.msra.mxu0 0.0
  %2109 = vmatprep.subr.mxu0 0.0
  %2110 = vmatpush2.msra.mxu0 0.0
  %2111 = vmatprep.subr.mxu0 0.0
  %2112 = vmatpush2.msra.mxu0 0.0
  %2113 = vmatprep.subr.mxu0 0.0
  %2114 = vmatpush2.msra.mxu0 0.0
  %2115 = vmatprep.subr.mxu0 0.0
  %2116 = vmatpush2.msra.mxu0 0.0
  %2117 = vmatprep.subr.mxu0 0.0
  %2118 = vmatpush2.msra.mxu0 0.0
  %2119 = vmatprep.mubr.f32.mxu0 0.0
  %2120 = vmatmul.mubr.f32.gmra.mxu0 %v1799
  %v2121 = vpop.f32.mrf.mxu0
  %v2122 = vadd.f32 %v2017, %v2121
  %v2123 = vpop.f32.mrf.mxu0
  %2124 = vmatprep.mubr.f32.mxu0 0.0
  %2125 = vmatmul.mubr.f32.gmra.mxu0 %v1802
  %v2126 = vpop.f32.mrf.mxu0
  %v2127 = vadd.f32 %v2022, %v2126
  %v2128 = vpop.f32.mrf.mxu0
  %2129 = vmatprep.mubr.f32.mxu0 0.0
  %2130 = vmatmul.mubr.f32.gmra.mxu0 %v1805
  %v2131 = vpop.f32.mrf.mxu0
  %v2132 = vadd.f32 %v2027, %v2131
  %v2133 = vpop.f32.mrf.mxu0
  %2134 = vmatprep.mubr.f32.mxu0 0.0
  %2135 = vmatmul.mubr.f32.gmra.mxu0 %v1808
  %v2136 = vpop.f32.mrf.mxu0
  %v2137 = vadd.f32 %v2032, %v2136
  %v2138 = vpop.f32.mrf.mxu0
  %2139 = vmatprep.mubr.f32.mxu0 0.0
  %2140 = vmatmul.mubr.f32.gmra.mxu0 %v1811
  %v2141 = vpop.f32.mrf.mxu0
  %v2142 = vadd.f32 %v2037, %v2141
  %v2143 = vpop.f32.mrf.mxu0
  %2144 = vmatprep.mubr.f32.mxu0 0.0
  %2145 = vmatmul.mubr.f32.gmra.mxu0 %v1814
  %v2146 = vpop.f32.mrf.mxu0
  %v2147 = vadd.f32 %v2042, %v2146
  %v2148 = vpop.f32.mrf.mxu0
  %2149 = vmatprep.mubr.f32.mxu0 0.0
  %2150 = vmatmul.mubr.f32.gmra.mxu0 %v1817
  %v2151 = vpop.f32.mrf.mxu0
  %v2152 = vadd.f32 %v2047, %v2151
  %v2153 = vpop.f32.mrf.mxu0
  %2154 = vmatprep.mubr.f32.mxu0 0.0
  %2155 = vmatmul.mubr.f32.gmra.mxu0 %v1820
  %v2156 = vpop.f32.mrf.mxu0
  %v2157 = vadd.f32 %v2052, %v2156
  %v2158 = vpop.f32.mrf.mxu0
  %2159 = vdwg.mxu0
  %v2160 = vld [vmem:[%s13] sm:$0x1]
  %v2162 = vlaneseq
  %v2163 = vshrl.u32 %v2162, 7
  %v2164 = vsub.s32 0, %v2163
  %v2165 = vrot.slane %v2160, %v2164
  %v2167 = vadd.f32 %v2122, %v2165
  %v2168 = vadd.f32 %v2127, %v2165
  %v2169 = vadd.f32 %v2132, %v2165
  %v2170 = vadd.f32 %v2137, %v2165
  %v2171 = vadd.f32 %v2142, %v2165
  %v2172 = vadd.f32 %v2147, %v2165
  %v2173 = vadd.f32 %v2152, %v2165
  %v2174 = vadd.f32 %v2157, %v2165
  %2175 = vst.msk [vmem:[#allocation2] sm:$0xff] %vm315, %v1934
  %2176 = vst.msk [vmem:[#allocation2 + $0x8] sm:$0xff] %vm315, %v1935
  %2177 = vst.msk [vmem:[#allocation2 + $0x10] sm:$0xff] %vm315, %v1936
  %2178 = vst.msk [vmem:[#allocation2 + $0x18] sm:$0xff] %vm315, %v1937
  %2179 = vst.msk [vmem:[#allocation2 + $0x20] sm:$0xff] %vm315, %v1938
  %2180 = vst.msk [vmem:[#allocation2 + $0x28] sm:$0xff] %vm315, %v1939
  %2181 = vst.msk [vmem:[#allocation2 + $0x30] sm:$0xff] %vm315, %v1940
  %2182 = vst.msk [vmem:[#allocation2 + $0x38] sm:$0xff] %vm315, %v1941
  %2183 = vst.msk [vmem:[#allocation3] sm:$0xff] %vm315, %v2167
  %2184 = vst.msk [vmem:[#allocation3 + $0x8] sm:$0xff] %vm315, %v2168
  %2185 = vst.msk [vmem:[#allocation3 + $0x10] sm:$0xff] %vm315, %v2169
  %2186 = vst.msk [vmem:[#allocation3 + $0x18] sm:$0xff] %vm315, %v2170
  %2187 = vst.msk [vmem:[#allocation3 + $0x20] sm:$0xff] %vm315, %v2171
  %2188 = vst.msk [vmem:[#allocation3 + $0x28] sm:$0xff] %vm315, %v2172
  %2189 = vst.msk [vmem:[#allocation3 + $0x30] sm:$0xff] %vm315, %v2173
  %2190 = vst.msk [vmem:[#allocation3 + $0x38] sm:$0xff] %vm315, %v2174
  %v2191 = vld [vmem:[%s9] sm:$0xff]
  %v2192 = vld [vmem:[%s9 + $0x8] sm:$0xff]
  %v2193 = vld [vmem:[%s9 + $0x10] sm:$0xff]
  %v2194 = vld [vmem:[%s9 + $0x18] sm:$0xff]
  %v2195 = vld [vmem:[%s12] sm:$0xff]
  %v2196 = vld [vmem:[%s12 + $0x8] sm:$0xff]
  %v2197 = vld [vmem:[%s12 + $0x10] sm:$0xff]
  %v2198 = vld [vmem:[%s12 + $0x18] sm:$0xff]
  %v2199 = vld [vmem:[#allocation2] sm:$0xff]
  %2200 = vmatprep.subr.mxu0 0.0
  %2201 = vmatpush1.msra.mxu0 0.0
  %2202 = vmatprep.subr.mxu0 0.0
  %2203 = vmatpush1.msra.mxu0 0.0
  %2204 = vmatprep.subr.mxu0 0.0
  %2205 = vmatpush1.msra.mxu0 0.0
  %2206 = vmatprep.subr.mxu0 0.0
  %2207 = vmatpush1.msra.mxu0 0.0
  %2208 = vmatprep.subr.mxu0 0.0
  %2209 = vmatpush1.msra.mxu0 0.0
  %2210 = vmatprep.subr.mxu0 0.0
  %2211 = vmatpush1.msra.mxu0 0.0
  %2212 = vmatprep.subr.mxu0 0.0
  %2213 = vmatpush1.msra.mxu0 0.0
  %2214 = vmatprep.subr.mxu0 0.0
  %2215 = vmatpush1.msra.mxu0 0.0
  %2216 = vmatprep.subr.mxu0 0.0
  %2217 = vmatpush1.msra.mxu0 0.0
  %2218 = vmatprep.subr.mxu0 0.0
  %2219 = vmatpush1.msra.mxu0 0.0
  %2220 = vmatprep.subr.mxu0 0.0
  %2221 = vmatpush1.msra.mxu0 0.0
  %2222 = vmatprep.subr.mxu0 0.0
  %2223 = vmatpush1.msra.mxu0 0.0
  %2224 = vmatprep.subr.mxu0 0.0
  %2225 = vmatpush1.msra.mxu0 %v2194
  %2226 = vmatprep.subr.mxu0 0.0
  %2227 = vmatpush1.msra.mxu0 %v2193
  %2228 = vmatprep.subr.mxu0 0.0
  %2229 = vmatpush1.msra.mxu0 %v2192
  %2230 = vmatprep.subr.mxu0 0.0
  %2231 = vmatpush1.msra.mxu0 %v2191
  %2232 = vmatprep.subr.mxu0 0.0
  %2233 = vmatpush2.msra.mxu0 0.0
  %2234 = vmatprep.subr.mxu0 0.0
  %2235 = vmatpush2.msra.mxu0 0.0
  %2236 = vmatprep.subr.mxu0 0.0
  %2237 = vmatpush2.msra.mxu0 0.0
  %2238 = vmatprep.subr.mxu0 0.0
  %2239 = vmatpush2.msra.mxu0 0.0
  %2240 = vmatprep.subr.mxu0 0.0
  %2241 = vmatpush2.msra.mxu0 0.0
  %2242 = vmatprep.subr.mxu0 0.0
  %2243 = vmatpush2.msra.mxu0 0.0
  %2244 = vmatprep.subr.mxu0 0.0
  %2245 = vmatpush2.msra.mxu0 0.0
  %2246 = vmatprep.subr.mxu0 0.0
  %2247 = vmatpush2.msra.mxu0 0.0
  %2248 = vmatprep.subr.mxu0 0.0
  %2249 = vmatpush2.msra.mxu0 0.0
  %2250 = vmatprep.subr.mxu0 0.0
  %2251 = vmatpush2.msra.mxu0 0.0
  %2252 = vmatprep.subr.mxu0 0.0
  %2253 = vmatpush2.msra.mxu0 0.0
  %2254 = vmatprep.subr.mxu0 0.0
  %2255 = vmatpush2.msra.mxu0 0.0
  %2256 = vmatprep.subr.mxu0 0.0
  %2257 = vmatpush2.msra.mxu0 0.0
  %2258 = vmatprep.subr.mxu0 0.0
  %2259 = vmatpush2.msra.mxu0 0.0
  %2260 = vmatprep.subr.mxu0 0.0
  %2261 = vmatpush2.msra.mxu0 0.0
  %2262 = vmatprep.subr.mxu0 0.0
  %2263 = vmatpush2.msra.mxu0 0.0
  %2264 = vmatprep.mubr.f32.mxu0 0.0
  %2265 = vmatmul.mubr.f32.gmra.mxu0 %v342
  %v2266 = vpop.f32.mrf.mxu0
  %v2267 = vadd.f32 0.0, %v2266
  %v2268 = vpop.f32.mrf.mxu0
  %2269 = vdwg.mxu0
  %v2270 = vadd.f32 %v2199, %v2267
  %v2271 = vtanh.pop %v2270
  %v2272 = vsel %vm421, %v2271, 0.0
  %v2273 = vld [vmem:[#allocation3 + $0x38] sm:$0xff]
  %2274 = vmatprep.subr.mxu0 0.0
  %2275 = vmatpush1.msra.mxu0 0.0
  %2276 = vmatprep.subr.mxu0 0.0
  %2277 = vmatpush1.msra.mxu0 0.0
  %2278 = vmatprep.subr.mxu0 0.0
  %2279 = vmatpush1.msra.mxu0 0.0
  %2280 = vmatprep.subr.mxu0 0.0
  %2281 = vmatpush1.msra.mxu0 0.0
  %2282 = vmatprep.subr.mxu0 0.0
  %2283 = vmatpush1.msra.mxu0 0.0
  %2284 = vmatprep.subr.mxu0 0.0
  %2285 = vmatpush1.msra.mxu0 0.0
  %2286 = vmatprep.subr.mxu0 0.0
  %2287 = vmatpush1.msra.mxu0 0.0
  %2288 = vmatprep.subr.mxu0 0.0
  %2289 = vmatpush1.msra.mxu0 0.0
  %2290 = vmatprep.subr.mxu0 0.0
  %2291 = vmatpush1.msra.mxu0 0.0
  %2292 = vmatprep.subr.mxu0 0.0
  %2293 = vmatpush1.msra.mxu0 0.0
  %2294 = vmatprep.subr.mxu0 0.0
  %2295 = vmatpush1.msra.mxu0 0.0
  %2296 = vmatprep.subr.mxu0 0.0
  %2297 = vmatpush1.msra.mxu0 0.0
  %2298 = vmatprep.subr.mxu0 0.0
  %2299 = vmatpush1.msra.mxu0 %v2198
  %2300 = vmatprep.subr.mxu0 0.0
  %2301 = vmatpush1.msra.mxu0 %v2197
  %2302 = vmatprep.subr.mxu0 0.0
  %2303 = vmatpush1.msra.mxu0 %v2196
  %2304 = vmatprep.subr.mxu0 0.0
  %2305 = vmatpush1.msra.mxu0 %v2195
  %2306 = vmatprep.subr.mxu0 0.0
  %2307 = vmatpush2.msra.mxu0 0.0
  %2308 = vmatprep.subr.mxu0 0.0
  %2309 = vmatpush2.msra.mxu0 0.0
  %2310 = vmatprep.subr.mxu0 0.0
  %2311 = vmatpush2.msra.mxu0 0.0
  %2312 = vmatprep.subr.mxu0 0.0
  %2313 = vmatpush2.msra.mxu0 0.0
  %2314 = vmatprep.subr.mxu0 0.0
  %2315 = vmatpush2.msra.mxu0 0.0
  %2316 = vmatprep.subr.mxu0 0.0
  %2317 = vmatpush2.msra.mxu0 0.0
  %2318 = vmatprep.subr.mxu0 0.0
  %2319 = vmatpush2.msra.mxu0 0.0
  %2320 = vmatprep.subr.mxu0 0.0
  %2321 = vmatpush2.msra.mxu0 0.0
  %2322 = vmatprep.subr.mxu0 0.0
  %2323 = vmatpush2.msra.mxu0 0.0
  %2324 = vmatprep.subr.mxu0 0.0
  %2325 = vmatpush2.msra.mxu0 0.0
  %2326 = vmatprep.subr.mxu0 0.0
  %2327 = vmatpush2.msra.mxu0 0.0
  %2328 = vmatprep.subr.mxu0 0.0
  %2329 = vmatpush2.msra.mxu0 0.0
  %2330 = vmatprep.subr.mxu0 0.0
  %2331 = vmatpush2.msra.mxu0 0.0
  %2332 = vmatprep.subr.mxu0 0.0
  %2333 = vmatpush2.msra.mxu0 0.0
  %2334 = vmatprep.subr.mxu0 0.0
  %2335 = vmatpush2.msra.mxu0 0.0
  %2336 = vmatprep.subr.mxu0 0.0
  %2337 = vmatpush2.msra.mxu0 0.0
  %2338 = vmatprep.mubr.f32.mxu0 0.0
  %2339 = vmatmul.mubr.f32.gmra.mxu0 %v342
  %v2340 = vpop.f32.mrf.mxu0
  %v2341 = vadd.f32 0.0, %v2340
  %v2342 = vpop.f32.mrf.mxu0
  %2343 = vdwg.mxu0
  %v2344 = vadd.f32 %v2273, %v2341
  %v2345 = vtanh.pop %v2344
  %v2346 = vsel %vm502, %v2345, 0.0
  %v2347 = vld [vmem:[#allocation2 + $0x8] sm:$0xff]
  %v2349 = vsel %vm315, %v2272, 0
  %2351 = vmatprep.subr.mxu0 0.0
  %2352 = vmatpush1.msra.mxu0 0.0
  %2353 = vmatprep.subr.mxu0 0.0
  %2354 = vmatpush1.msra.mxu0 0.0
  %2355 = vmatprep.subr.mxu0 0.0
  %2356 = vmatpush1.msra.mxu0 0.0
  %2357 = vmatprep.subr.mxu0 0.0
  %2358 = vmatpush1.msra.mxu0 0.0
  %2359 = vmatprep.subr.mxu0 0.0
  %2360 = vmatpush1.msra.mxu0 0.0
  %2361 = vmatprep.subr.mxu0 0.0
  %2362 = vmatpush1.msra.mxu0 0.0
  %2363 = vmatprep.subr.mxu0 0.0
  %2364 = vmatpush1.msra.mxu0 0.0
  %2365 = vmatprep.subr.mxu0 0.0
  %2366 = vmatpush1.msra.mxu0 0.0
  %2367 = vmatprep.subr.mxu0 0.0
  %2368 = vmatpush1.msra.mxu0 0.0
  %2369 = vmatprep.subr.mxu0 0.0
  %2370 = vmatpush1.msra.mxu0 0.0
  %2371 = vmatprep.subr.mxu0 0.0
  %2372 = vmatpush1.msra.mxu0 0.0
  %2373 = vmatprep.subr.mxu0 0.0
  %2374 = vmatpush1.msra.mxu0 0.0
  %2375 = vmatprep.subr.mxu0 0.0
  %2376 = vmatpush1.msra.mxu0 %v2194
  %2377 = vmatprep.subr.mxu0 0.0
  %2378 = vmatpush1.msra.mxu0 %v2193
  %2379 = vmatprep.subr.mxu0 0.0
  %2380 = vmatpush1.msra.mxu0 %v2192
  %2381 = vmatprep.subr.mxu0 0.0
  %2382 = vmatpush1.msra.mxu0 %v2191
  %2383 = vmatprep.subr.mxu0 0.0
  %2384 = vmatpush2.msra.mxu0 0.0
  %2385 = vmatprep.subr.mxu0 0.0
  %2386 = vmatpush2.msra.mxu0 0.0
  %2387 = vmatprep.subr.mxu0 0.0
  %2388 = vmatpush2.msra.mxu0 0.0
  %2389 = vmatprep.subr.mxu0 0.0
  %2390 = vmatpush2.msra.mxu0 0.0
  %2391 = vmatprep.subr.mxu0 0.0
  %2392 = vmatpush2.msra.mxu0 0.0
  %2393 = vmatprep.subr.mxu0 0.0
  %2394 = vmatpush2.msra.mxu0 0.0
  %2395 = vmatprep.subr.mxu0 0.0
  %2396 = vmatpush2.msra.mxu0 0.0
  %2397 = vmatprep.subr.mxu0 0.0
  %2398 = vmatpush2.msra.mxu0 0.0
  %2399 = vmatprep.subr.mxu0 0.0
  %2400 = vmatpush2.msra.mxu0 0.0
  %2401 = vmatprep.subr.mxu0 0.0
  %2402 = vmatpush2.msra.mxu0 0.0
  %2403 = vmatprep.subr.mxu0 0.0
  %2404 = vmatpush2.msra.mxu0 0.0
  %2405 = vmatprep.subr.mxu0 0.0
  %2406 = vmatpush2.msra.mxu0 0.0
  %2407 = vmatprep.subr.mxu0 0.0
  %2408 = vmatpush2.msra.mxu0 0.0
  %2409 = vmatprep.subr.mxu0 0.0
  %2410 = vmatpush2.msra.mxu0 0.0
  %2411 = vmatprep.subr.mxu0 0.0
  %2412 = vmatpush2.msra.mxu0 0.0
  %2413 = vmatprep.subr.mxu0 0.0
  %2414 = vmatpush2.msra.mxu0 0.0
  %2415 = vmatprep.mubr.f32.mxu0 0.0
  %2416 = vmatmul.mubr.f32.gmra.mxu0 %v2349
  %v2417 = vpop.f32.mrf.mxu0
  %v2418 = vadd.f32 0.0, %v2417
  %v2419 = vpop.f32.mrf.mxu0
  %2420 = vdwg.mxu0
  %v2421 = vadd.f32 %v2347, %v2418
  %v2422 = vtanh.pop %v2421
  %v2423 = vsel %vm586, %v2422, %v2272
  %v2424 = vld [vmem:[#allocation3 + $0x30] sm:$0xff]
  %v2426 = vsel %vm315, %v2346, 0
  %2428 = vmatprep.subr.mxu0 0.0
  %2429 = vmatpush1.msra.mxu0 0.0
  %2430 = vmatprep.subr.mxu0 0.0
  %2431 = vmatpush1.msra.mxu0 0.0
  %2432 = vmatprep.subr.mxu0 0.0
  %2433 = vmatpush1.msra.mxu0 0.0
  %2434 = vmatprep.subr.mxu0 0.0
  %2435 = vmatpush1.msra.mxu0 0.0
  %2436 = vmatprep.subr.mxu0 0.0
  %2437 = vmatpush1.msra.mxu0 0.0
  %2438 = vmatprep.subr.mxu0 0.0
  %2439 = vmatpush1.msra.mxu0 0.0
  %2440 = vmatprep.subr.mxu0 0.0
  %2441 = vmatpush1.msra.mxu0 0.0
  %2442 = vmatprep.subr.mxu0 0.0
  %2443 = vmatpush1.msra.mxu0 0.0
  %2444 = vmatprep.subr.mxu0 0.0
  %2445 = vmatpush1.msra.mxu0 0.0
  %2446 = vmatprep.subr.mxu0 0.0
  %2447 = vmatpush1.msra.mxu0 0.0
  %2448 = vmatprep.subr.mxu0 0.0
  %2449 = vmatpush1.msra.mxu0 0.0
  %2450 = vmatprep.subr.mxu0 0.0
  %2451 = vmatpush1.msra.mxu0 0.0
  %2452 = vmatprep.subr.mxu0 0.0
  %2453 = vmatpush1.msra.mxu0 %v2198
  %2454 = vmatprep.subr.mxu0 0.0
  %2455 = vmatpush1.msra.mxu0 %v2197
  %2456 = vmatprep.subr.mxu0 0.0
  %2457 = vmatpush1.msra.mxu0 %v2196
  %2458 = vmatprep.subr.mxu0 0.0
  %2459 = vmatpush1.msra.mxu0 %v2195
  %2460 = vmatprep.subr.mxu0 0.0
  %2461 = vmatpush2.msra.mxu0 0.0
  %2462 = vmatprep.subr.mxu0 0.0
  %2463 = vmatpush2.msra.mxu0 0.0
  %2464 = vmatprep.subr.mxu0 0.0
  %2465 = vmatpush2.msra.mxu0 0.0
  %2466 = vmatprep.subr.mxu0 0.0
  %2467 = vmatpush2.msra.mxu0 0.0
  %2468 = vmatprep.subr.mxu0 0.0
  %2469 = vmatpush2.msra.mxu0 0.0
  %2470 = vmatprep.subr.mxu0 0.0
  %2471 = vmatpush2.msra.mxu0 0.0
  %2472 = vmatprep.subr.mxu0 0.0
  %2473 = vmatpush2.msra.mxu0 0.0
  %2474 = vmatprep.subr.mxu0 0.0
  %2475 = vmatpush2.msra.mxu0 0.0
  %2476 = vmatprep.subr.mxu0 0.0
  %2477 = vmatpush2.msra.mxu0 0.0
  %2478 = vmatprep.subr.mxu0 0.0
  %2479 = vmatpush2.msra.mxu0 0.0
  %2480 = vmatprep.subr.mxu0 0.0
  %2481 = vmatpush2.msra.mxu0 0.0
  %2482 = vmatprep.subr.mxu0 0.0
  %2483 = vmatpush2.msra.mxu0 0.0
  %2484 = vmatprep.subr.mxu0 0.0
  %2485 = vmatpush2.msra.mxu0 0.0
  %2486 = vmatprep.subr.mxu0 0.0
  %2487 = vmatpush2.msra.mxu0 0.0
  %2488 = vmatprep.subr.mxu0 0.0
  %2489 = vmatpush2.msra.mxu0 0.0
  %2490 = vmatprep.subr.mxu0 0.0
  %2491 = vmatpush2.msra.mxu0 0.0
  %2492 = vmatprep.mubr.f32.mxu0 0.0
  %2493 = vmatmul.mubr.f32.gmra.mxu0 %v2426
  %v2494 = vpop.f32.mrf.mxu0
  %v2495 = vadd.f32 0.0, %v2494
  %v2496 = vpop.f32.mrf.mxu0
  %2497 = vdwg.mxu0
  %v2498 = vadd.f32 %v2424, %v2495
  %v2499 = vtanh.pop %v2498
  %v2500 = vsel %vm671, %v2499, %v2346
  %v2501 = vld [vmem:[#allocation2 + $0x10] sm:$0xff]
  %v2503 = vsel %vm315, %v2423, 0
  %2505 = vmatprep.subr.mxu0 0.0
  %2506 = vmatpush1.msra.mxu0 0.0
  %2507 = vmatprep.subr.mxu0 0.0
  %2508 = vmatpush1.msra.mxu0 0.0
  %2509 = vmatprep.subr.mxu0 0.0
  %2510 = vmatpush1.msra.mxu0 0.0
  %2511 = vmatprep.subr.mxu0 0.0
  %2512 = vmatpush1.msra.mxu0 0.0
  %2513 = vmatprep.subr.mxu0 0.0
  %2514 = vmatpush1.msra.mxu0 0.0
  %2515 = vmatprep.subr.mxu0 0.0
  %2516 = vmatpush1.msra.mxu0 0.0
  %2517 = vmatprep.subr.mxu0 0.0
  %2518 = vmatpush1.msra.mxu0 0.0
  %2519 = vmatprep.subr.mxu0 0.0
  %2520 = vmatpush1.msra.mxu0 0.0
  %2521 = vmatprep.subr.mxu0 0.0
  %2522 = vmatpush1.msra.mxu0 0.0
  %2523 = vmatprep.subr.mxu0 0.0
  %2524 = vmatpush1.msra.mxu0 0.0
  %2525 = vmatprep.subr.mxu0 0.0
  %2526 = vmatpush1.msra.mxu0 0.0
  %2527 = vmatprep.subr.mxu0 0.0
  %2528 = vmatpush1.msra.mxu0 0.0
  %2529 = vmatprep.subr.mxu0 0.0
  %2530 = vmatpush1.msra.mxu0 %v2194
  %2531 = vmatprep.subr.mxu0 0.0
  %2532 = vmatpush1.msra.mxu0 %v2193
  %2533 = vmatprep.subr.mxu0 0.0
  %2534 = vmatpush1.msra.mxu0 %v2192
  %2535 = vmatprep.subr.mxu0 0.0
  %2536 = vmatpush1.msra.mxu0 %v2191
  %2537 = vmatprep.subr.mxu0 0.0
  %2538 = vmatpush2.msra.mxu0 0.0
  %2539 = vmatprep.subr.mxu0 0.0
  %2540 = vmatpush2.msra.mxu0 0.0
  %2541 = vmatprep.subr.mxu0 0.0
  %2542 = vmatpush2.msra.mxu0 0.0
  %2543 = vmatprep.subr.mxu0 0.0
  %2544 = vmatpush2.msra.mxu0 0.0
  %2545 = vmatprep.subr.mxu0 0.0
  %2546 = vmatpush2.msra.mxu0 0.0
  %2547 = vmatprep.subr.mxu0 0.0
  %2548 = vmatpush2.msra.mxu0 0.0
  %2549 = vmatprep.subr.mxu0 0.0
  %2550 = vmatpush2.msra.mxu0 0.0
  %2551 = vmatprep.subr.mxu0 0.0
  %2552 = vmatpush2.msra.mxu0 0.0
  %2553 = vmatprep.subr.mxu0 0.0
  %2554 = vmatpush2.msra.mxu0 0.0
  %2555 = vmatprep.subr.mxu0 0.0
  %2556 = vmatpush2.msra.mxu0 0.0
  %2557 = vmatprep.subr.mxu0 0.0
  %2558 = vmatpush2.msra.mxu0 0.0
  %2559 = vmatprep.subr.mxu0 0.0
  %2560 = vmatpush2.msra.mxu0 0.0
  %2561 = vmatprep.subr.mxu0 0.0
  %2562 = vmatpush2.msra.mxu0 0.0
  %2563 = vmatprep.subr.mxu0 0.0
  %2564 = vmatpush2.msra.mxu0 0.0
  %2565 = vmatprep.subr.mxu0 0.0
  %2566 = vmatpush2.msra.mxu0 0.0
  %2567 = vmatprep.subr.mxu0 0.0
  %2568 = vmatpush2.msra.mxu0 0.0
  %2569 = vmatprep.mubr.f32.mxu0 0.0
  %2570 = vmatmul.mubr.f32.gmra.mxu0 %v2503
  %v2571 = vpop.f32.mrf.mxu0
  %v2572 = vadd.f32 0.0, %v2571
  %v2573 = vpop.f32.mrf.mxu0
  %2574 = vdwg.mxu0
  %v2575 = vadd.f32 %v2501, %v2572
  %v2576 = vtanh.pop %v2575
  %v2577 = vsel %vm756, %v2576, %v2423
  %v2578 = vld [vmem:[#allocation3 + $0x28] sm:$0xff]
  %v2580 = vsel %vm315, %v2500, 0
  %2582 = vmatprep.subr.mxu0 0.0
  %2583 = vmatpush1.msra.mxu0 0.0
  %2584 = vmatprep.subr.mxu0 0.0
  %2585 = vmatpush1.msra.mxu0 0.0
  %2586 = vmatprep.subr.mxu0 0.0
  %2587 = vmatpush1.msra.mxu0 0.0
  %2588 = vmatprep.subr.mxu0 0.0
  %2589 = vmatpush1.msra.mxu0 0.0
  %2590 = vmatprep.subr.mxu0 0.0
  %2591 = vmatpush1.msra.mxu0 0.0
  %2592 = vmatprep.subr.mxu0 0.0
  %2593 = vmatpush1.msra.mxu0 0.0
  %2594 = vmatprep.subr.mxu0 0.0
  %2595 = vmatpush1.msra.mxu0 0.0
  %2596 = vmatprep.subr.mxu0 0.0
  %2597 = vmatpush1.msra.mxu0 0.0
  %2598 = vmatprep.subr.mxu0 0.0
  %2599 = vmatpush1.msra.mxu0 0.0
  %2600 = vmatprep.subr.mxu0 0.0
  %2601 = vmatpush1.msra.mxu0 0.0
  %2602 = vmatprep.subr.mxu0 0.0
  %2603 = vmatpush1.msra.mxu0 0.0
  %2604 = vmatprep.subr.mxu0 0.0
  %2605 = vmatpush1.msra.mxu0 0.0
  %2606 = vmatprep.subr.mxu0 0.0
  %2607 = vmatpush1.msra.mxu0 %v2198
  %2608 = vmatprep.subr.mxu0 0.0
  %2609 = vmatpush1.msra.mxu0 %v2197
  %2610 = vmatprep.subr.mxu0 0.0
  %2611 = vmatpush1.msra.mxu0 %v2196
  %2612 = vmatprep.subr.mxu0 0.0
  %2613 = vmatpush1.msra.mxu0 %v2195
  %2614 = vmatprep.subr.mxu0 0.0
  %2615 = vmatpush2.msra.mxu0 0.0
  %2616 = vmatprep.subr.mxu0 0.0
  %2617 = vmatpush2.msra.mxu0 0.0
  %2618 = vmatprep.subr.mxu0 0.0
  %2619 = vmatpush2.msra.mxu0 0.0
  %2620 = vmatprep.subr.mxu0 0.0
  %2621 = vmatpush2.msra.mxu0 0.0
  %2622 = vmatprep.subr.mxu0 0.0
  %2623 = vmatpush2.msra.mxu0 0.0
  %2624 = vmatprep.subr.mxu0 0.0
  %2625 = vmatpush2.msra.mxu0 0.0
  %2626 = vmatprep.subr.mxu0 0.0
  %2627 = vmatpush2.msra.mxu0 0.0
  %2628 = vmatprep.subr.mxu0 0.0
  %2629 = vmatpush2.msra.mxu0 0.0
  %2630 = vmatprep.subr.mxu0 0.0
  %2631 = vmatpush2.msra.mxu0 0.0
  %2632 = vmatprep.subr.mxu0 0.0
  %2633 = vmatpush2.msra.mxu0 0.0
  %2634 = vmatprep.subr.mxu0 0.0
  %2635 = vmatpush2.msra.mxu0 0.0
  %2636 = vmatprep.subr.mxu0 0.0
  %2637 = vmatpush2.msra.mxu0 0.0
  %2638 = vmatprep.subr.mxu0 0.0
  %2639 = vmatpush2.msra.mxu0 0.0
  %2640 = vmatprep.subr.mxu0 0.0
  %2641 = vmatpush2.msra.mxu0 0.0
  %2642 = vmatprep.subr.mxu0 0.0
  %2643 = vmatpush2.msra.mxu0 0.0
  %2644 = vmatprep.subr.mxu0 0.0
  %2645 = vmatpush2.msra.mxu0 0.0
  %2646 = vmatprep.mubr.f32.mxu0 0.0
  %2647 = vmatmul.mubr.f32.gmra.mxu0 %v2580
  %v2648 = vpop.f32.mrf.mxu0
  %v2649 = vadd.f32 0.0, %v2648
  %v2650 = vpop.f32.mrf.mxu0
  %2651 = vdwg.mxu0
  %v2652 = vadd.f32 %v2578, %v2649
  %v2653 = vtanh.pop %v2652
  %v2654 = vsel %vm841, %v2653, %v2500
  %v2655 = vld [vmem:[#allocation2 + $0x18] sm:$0xff]
  %v2657 = vsel %vm315, %v2577, 0
  %2659 = vmatprep.subr.mxu0 0.0
  %2660 = vmatpush1.msra.mxu0 0.0
  %2661 = vmatprep.subr.mxu0 0.0
  %2662 = vmatpush1.msra.mxu0 0.0
  %2663 = vmatprep.subr.mxu0 0.0
  %2664 = vmatpush1.msra.mxu0 0.0
  %2665 = vmatprep.subr.mxu0 0.0
  %2666 = vmatpush1.msra.mxu0 0.0
  %2667 = vmatprep.subr.mxu0 0.0
  %2668 = vmatpush1.msra.mxu0 0.0
  %2669 = vmatprep.subr.mxu0 0.0
  %2670 = vmatpush1.msra.mxu0 0.0
  %2671 = vmatprep.subr.mxu0 0.0
  %2672 = vmatpush1.msra.mxu0 0.0
  %2673 = vmatprep.subr.mxu0 0.0
  %2674 = vmatpush1.msra.mxu0 0.0
  %2675 = vmatprep.subr.mxu0 0.0
  %2676 = vmatpush1.msra.mxu0 0.0
  %2677 = vmatprep.subr.mxu0 0.0
  %2678 = vmatpush1.msra.mxu0 0.0
  %2679 = vmatprep.subr.mxu0 0.0
  %2680 = vmatpush1.msra.mxu0 0.0
  %2681 = vmatprep.subr.mxu0 0.0
  %2682 = vmatpush1.msra.mxu0 0.0
  %2683 = vmatprep.subr.mxu0 0.0
  %2684 = vmatpush1.msra.mxu0 %v2194
  %2685 = vmatprep.subr.mxu0 0.0
  %2686 = vmatpush1.msra.mxu0 %v2193
  %2687 = vmatprep.subr.mxu0 0.0
  %2688 = vmatpush1.msra.mxu0 %v2192
  %2689 = vmatprep.subr.mxu0 0.0
  %2690 = vmatpush1.msra.mxu0 %v2191
  %2691 = vmatprep.subr.mxu0 0.0
  %2692 = vmatpush2.msra.mxu0 0.0
  %2693 = vmatprep.subr.mxu0 0.0
  %2694 = vmatpush2.msra.mxu0 0.0
  %2695 = vmatprep.subr.mxu0 0.0
  %2696 = vmatpush2.msra.mxu0 0.0
  %2697 = vmatprep.subr.mxu0 0.0
  %2698 = vmatpush2.msra.mxu0 0.0
  %2699 = vmatprep.subr.mxu0 0.0
  %2700 = vmatpush2.msra.mxu0 0.0
  %2701 = vmatprep.subr.mxu0 0.0
  %2702 = vmatpush2.msra.mxu0 0.0
  %2703 = vmatprep.subr.mxu0 0.0
  %2704 = vmatpush2.msra.mxu0 0.0
  %2705 = vmatprep.subr.mxu0 0.0
  %2706 = vmatpush2.msra.mxu0 0.0
  %2707 = vmatprep.subr.mxu0 0.0
  %2708 = vmatpush2.msra.mxu0 0.0
  %2709 = vmatprep.subr.mxu0 0.0
  %2710 = vmatpush2.msra.mxu0 0.0
  %2711 = vmatprep.subr.mxu0 0.0
  %2712 = vmatpush2.msra.mxu0 0.0
  %2713 = vmatprep.subr.mxu0 0.0
  %2714 = vmatpush2.msra.mxu0 0.0
  %2715 = vmatprep.subr.mxu0 0.0
  %2716 = vmatpush2.msra.mxu0 0.0
  %2717 = vmatprep.subr.mxu0 0.0
  %2718 = vmatpush2.msra.mxu0 0.0
  %2719 = vmatprep.subr.mxu0 0.0
  %2720 = vmatpush2.msra.mxu0 0.0
  %2721 = vmatprep.subr.mxu0 0.0
  %2722 = vmatpush2.msra.mxu0 0.0
  %2723 = vmatprep.mubr.f32.mxu0 0.0
  %2724 = vmatmul.mubr.f32.gmra.mxu0 %v2657
  %v2725 = vpop.f32.mrf.mxu0
  %v2726 = vadd.f32 0.0, %v2725
  %v2727 = vpop.f32.mrf.mxu0
  %2728 = vdwg.mxu0
  %v2729 = vadd.f32 %v2655, %v2726
  %v2730 = vtanh.pop %v2729
  %v2731 = vsel %vm926, %v2730, %v2577
  %v2732 = vld [vmem:[#allocation3 + $0x20] sm:$0xff]
  %v2734 = vsel %vm315, %v2654, 0
  %2736 = vmatprep.subr.mxu0 0.0
  %2737 = vmatpush1.msra.mxu0 0.0
  %2738 = vmatprep.subr.mxu0 0.0
  %2739 = vmatpush1.msra.mxu0 0.0
  %2740 = vmatprep.subr.mxu0 0.0
  %2741 = vmatpush1.msra.mxu0 0.0
  %2742 = vmatprep.subr.mxu0 0.0
  %2743 = vmatpush1.msra.mxu0 0.0
  %2744 = vmatprep.subr.mxu0 0.0
  %2745 = vmatpush1.msra.mxu0 0.0
  %2746 = vmatprep.subr.mxu0 0.0
  %2747 = vmatpush1.msra.mxu0 0.0
  %2748 = vmatprep.subr.mxu0 0.0
  %2749 = vmatpush1.msra.mxu0 0.0
  %2750 = vmatprep.subr.mxu0 0.0
  %2751 = vmatpush1.msra.mxu0 0.0
  %2752 = vmatprep.subr.mxu0 0.0
  %2753 = vmatpush1.msra.mxu0 0.0
  %2754 = vmatprep.subr.mxu0 0.0
  %2755 = vmatpush1.msra.mxu0 0.0
  %2756 = vmatprep.subr.mxu0 0.0
  %2757 = vmatpush1.msra.mxu0 0.0
  %2758 = vmatprep.subr.mxu0 0.0
  %2759 = vmatpush1.msra.mxu0 0.0
  %2760 = vmatprep.subr.mxu0 0.0
  %2761 = vmatpush1.msra.mxu0 %v2198
  %2762 = vmatprep.subr.mxu0 0.0
  %2763 = vmatpush1.msra.mxu0 %v2197
  %2764 = vmatprep.subr.mxu0 0.0
  %2765 = vmatpush1.msra.mxu0 %v2196
  %2766 = vmatprep.subr.mxu0 0.0
  %2767 = vmatpush1.msra.mxu0 %v2195
  %2768 = vmatprep.subr.mxu0 0.0
  %2769 = vmatpush2.msra.mxu0 0.0
  %2770 = vmatprep.subr.mxu0 0.0
  %2771 = vmatpush2.msra.mxu0 0.0
  %2772 = vmatprep.subr.mxu0 0.0
  %2773 = vmatpush2.msra.mxu0 0.0
  %2774 = vmatprep.subr.mxu0 0.0
  %2775 = vmatpush2.msra.mxu0 0.0
  %2776 = vmatprep.subr.mxu0 0.0
  %2777 = vmatpush2.msra.mxu0 0.0
  %2778 = vmatprep.subr.mxu0 0.0
  %2779 = vmatpush2.msra.mxu0 0.0
  %2780 = vmatprep.subr.mxu0 0.0
  %2781 = vmatpush2.msra.mxu0 0.0
  %2782 = vmatprep.subr.mxu0 0.0
  %2783 = vmatpush2.msra.mxu0 0.0
  %2784 = vmatprep.subr.mxu0 0.0
  %2785 = vmatpush2.msra.mxu0 0.0
  %2786 = vmatprep.subr.mxu0 0.0
  %2787 = vmatpush2.msra.mxu0 0.0
  %2788 = vmatprep.subr.mxu0 0.0
  %2789 = vmatpush2.msra.mxu0 0.0
  %2790 = vmatprep.subr.mxu0 0.0
  %2791 = vmatpush2.msra.mxu0 0.0
  %2792 = vmatprep.subr.mxu0 0.0
  %2793 = vmatpush2.msra.mxu0 0.0
  %2794 = vmatprep.subr.mxu0 0.0
  %2795 = vmatpush2.msra.mxu0 0.0
  %2796 = vmatprep.subr.mxu0 0.0
  %2797 = vmatpush2.msra.mxu0 0.0
  %2798 = vmatprep.subr.mxu0 0.0
  %2799 = vmatpush2.msra.mxu0 0.0
  %2800 = vmatprep.mubr.f32.mxu0 0.0
  %2801 = vmatmul.mubr.f32.gmra.mxu0 %v2734
  %v2802 = vpop.f32.mrf.mxu0
  %v2803 = vadd.f32 0.0, %v2802
  %v2804 = vpop.f32.mrf.mxu0
  %2805 = vdwg.mxu0
  %v2806 = vadd.f32 %v2732, %v2803
  %v2807 = vtanh.pop %v2806
  %v2808 = vsel %vm1011, %v2807, %v2654
  %v2809 = vld [vmem:[#allocation2 + $0x20] sm:$0xff]
  %v2811 = vsel %vm315, %v2731, 0
  %2813 = vmatprep.subr.mxu0 0.0
  %2814 = vmatpush1.msra.mxu0 0.0
  %2815 = vmatprep.subr.mxu0 0.0
  %2816 = vmatpush1.msra.mxu0 0.0
  %2817 = vmatprep.subr.mxu0 0.0
  %2818 = vmatpush1.msra.mxu0 0.0
  %2819 = vmatprep.subr.mxu0 0.0
  %2820 = vmatpush1.msra.mxu0 0.0
  %2821 = vmatprep.subr.mxu0 0.0
  %2822 = vmatpush1.msra.mxu0 0.0
  %2823 = vmatprep.subr.mxu0 0.0
  %2824 = vmatpush1.msra.mxu0 0.0
  %2825 = vmatprep.subr.mxu0 0.0
  %2826 = vmatpush1.msra.mxu0 0.0
  %2827 = vmatprep.subr.mxu0 0.0
  %2828 = vmatpush1.msra.mxu0 0.0
  %2829 = vmatprep.subr.mxu0 0.0
  %2830 = vmatpush1.msra.mxu0 0.0
  %2831 = vmatprep.subr.mxu0 0.0
  %2832 = vmatpush1.msra.mxu0 0.0
  %2833 = vmatprep.subr.mxu0 0.0
  %2834 = vmatpush1.msra.mxu0 0.0
  %2835 = vmatprep.subr.mxu0 0.0
  %2836 = vmatpush1.msra.mxu0 0.0
  %2837 = vmatprep.subr.mxu0 0.0
  %2838 = vmatpush1.msra.mxu0 %v2194
  %2839 = vmatprep.subr.mxu0 0.0
  %2840 = vmatpush1.msra.mxu0 %v2193
  %2841 = vmatprep.subr.mxu0 0.0
  %2842 = vmatpush1.msra.mxu0 %v2192
  %2843 = vmatprep.subr.mxu0 0.0
  %2844 = vmatpush1.msra.mxu0 %v2191
  %2845 = vmatprep.subr.mxu0 0.0
  %2846 = vmatpush2.msra.mxu0 0.0
  %2847 = vmatprep.subr.mxu0 0.0
  %2848 = vmatpush2.msra.mxu0 0.0
  %2849 = vmatprep.subr.mxu0 0.0
  %2850 = vmatpush2.msra.mxu0 0.0
  %2851 = vmatprep.subr.mxu0 0.0
  %2852 = vmatpush2.msra.mxu0 0.0
  %2853 = vmatprep.subr.mxu0 0.0
  %2854 = vmatpush2.msra.mxu0 0.0
  %2855 = vmatprep.subr.mxu0 0.0
  %2856 = vmatpush2.msra.mxu0 0.0
  %2857 = vmatprep.subr.mxu0 0.0
  %2858 = vmatpush2.msra.mxu0 0.0
  %2859 = vmatprep.subr.mxu0 0.0
  %2860 = vmatpush2.msra.mxu0 0.0
  %2861 = vmatprep.subr.mxu0 0.0
  %2862 = vmatpush2.msra.mxu0 0.0
  %2863 = vmatprep.subr.mxu0 0.0
  %2864 = vmatpush2.msra.mxu0 0.0
  %2865 = vmatprep.subr.mxu0 0.0
  %2866 = vmatpush2.msra.mxu0 0.0
  %2867 = vmatprep.subr.mxu0 0.0
  %2868 = vmatpush2.msra.mxu0 0.0
  %2869 = vmatprep.subr.mxu0 0.0
  %2870 = vmatpush2.msra.mxu0 0.0
  %2871 = vmatprep.subr.mxu0 0.0
  %2872 = vmatpush2.msra.mxu0 0.0
  %2873 = vmatprep.subr.mxu0 0.0
  %2874 = vmatpush2.msra.mxu0 0.0
  %2875 = vmatprep.subr.mxu0 0.0
  %2876 = vmatpush2.msra.mxu0 0.0
  %2877 = vmatprep.mubr.f32.mxu0 0.0
  %2878 = vmatmul.mubr.f32.gmra.mxu0 %v2811
  %v2879 = vpop.f32.mrf.mxu0
  %v2880 = vadd.f32 0.0, %v2879
  %v2881 = vpop.f32.mrf.mxu0
  %2882 = vdwg.mxu0
  %v2883 = vadd.f32 %v2809, %v2880
  %v2884 = vtanh.pop %v2883
  %v2885 = vsel %vm1011, %v2884, %v2731
  %v2886 = vld [vmem:[#allocation3 + $0x18] sm:$0xff]
  %v2888 = vsel %vm315, %v2808, 0
  %2890 = vmatprep.subr.mxu0 0.0
  %2891 = vmatpush1.msra.mxu0 0.0
  %2892 = vmatprep.subr.mxu0 0.0
  %2893 = vmatpush1.msra.mxu0 0.0
  %2894 = vmatprep.subr.mxu0 0.0
  %2895 = vmatpush1.msra.mxu0 0.0
  %2896 = vmatprep.subr.mxu0 0.0
  %2897 = vmatpush1.msra.mxu0 0.0
  %2898 = vmatprep.subr.mxu0 0.0
  %2899 = vmatpush1.msra.mxu0 0.0
  %2900 = vmatprep.subr.mxu0 0.0
  %2901 = vmatpush1.msra.mxu0 0.0
  %2902 = vmatprep.subr.mxu0 0.0
  %2903 = vmatpush1.msra.mxu0 0.0
  %2904 = vmatprep.subr.mxu0 0.0
  %2905 = vmatpush1.msra.mxu0 0.0
  %2906 = vmatprep.subr.mxu0 0.0
  %2907 = vmatpush1.msra.mxu0 0.0
  %2908 = vmatprep.subr.mxu0 0.0
  %2909 = vmatpush1.msra.mxu0 0.0
  %2910 = vmatprep.subr.mxu0 0.0
  %2911 = vmatpush1.msra.mxu0 0.0
  %2912 = vmatprep.subr.mxu0 0.0
  %2913 = vmatpush1.msra.mxu0 0.0
  %2914 = vmatprep.subr.mxu0 0.0
  %2915 = vmatpush1.msra.mxu0 %v2198
  %2916 = vmatprep.subr.mxu0 0.0
  %2917 = vmatpush1.msra.mxu0 %v2197
  %2918 = vmatprep.subr.mxu0 0.0
  %2919 = vmatpush1.msra.mxu0 %v2196
  %2920 = vmatprep.subr.mxu0 0.0
  %2921 = vmatpush1.msra.mxu0 %v2195
  %2922 = vmatprep.subr.mxu0 0.0
  %2923 = vmatpush2.msra.mxu0 0.0
  %2924 = vmatprep.subr.mxu0 0.0
  %2925 = vmatpush2.msra.mxu0 0.0
  %2926 = vmatprep.subr.mxu0 0.0
  %2927 = vmatpush2.msra.mxu0 0.0
  %2928 = vmatprep.subr.mxu0 0.0
  %2929 = vmatpush2.msra.mxu0 0.0
  %2930 = vmatprep.subr.mxu0 0.0
  %2931 = vmatpush2.msra.mxu0 0.0
  %2932 = vmatprep.subr.mxu0 0.0
  %2933 = vmatpush2.msra.mxu0 0.0
  %2934 = vmatprep.subr.mxu0 0.0
  %2935 = vmatpush2.msra.mxu0 0.0
  %2936 = vmatprep.subr.mxu0 0.0
  %2937 = vmatpush2.msra.mxu0 0.0
  %2938 = vmatprep.subr.mxu0 0.0
  %2939 = vmatpush2.msra.mxu0 0.0
  %2940 = vmatprep.subr.mxu0 0.0
  %2941 = vmatpush2.msra.mxu0 0.0
  %2942 = vmatprep.subr.mxu0 0.0
  %2943 = vmatpush2.msra.mxu0 0.0
  %2944 = vmatprep.subr.mxu0 0.0
  %2945 = vmatpush2.msra.mxu0 0.0
  %2946 = vmatprep.subr.mxu0 0.0
  %2947 = vmatpush2.msra.mxu0 0.0
  %2948 = vmatprep.subr.mxu0 0.0
  %2949 = vmatpush2.msra.mxu0 0.0
  %2950 = vmatprep.subr.mxu0 0.0
  %2951 = vmatpush2.msra.mxu0 0.0
  %2952 = vmatprep.subr.mxu0 0.0
  %2953 = vmatpush2.msra.mxu0 0.0
  %2954 = vmatprep.mubr.f32.mxu0 0.0
  %2955 = vmatmul.mubr.f32.gmra.mxu0 %v2888
  %v2956 = vpop.f32.mrf.mxu0
  %v2957 = vadd.f32 0.0, %v2956
  %v2958 = vpop.f32.mrf.mxu0
  %2959 = vdwg.mxu0
  %v2960 = vadd.f32 %v2886, %v2957
  %v2961 = vtanh.pop %v2960
  %v2962 = vsel %vm926, %v2961, %v2808
  %v2963 = vld [vmem:[#allocation2 + $0x28] sm:$0xff]
  %v2965 = vsel %vm315, %v2885, 0
  %2967 = vmatprep.subr.mxu0 0.0
  %2968 = vmatpush1.msra.mxu0 0.0
  %2969 = vmatprep.subr.mxu0 0.0
  %2970 = vmatpush1.msra.mxu0 0.0
  %2971 = vmatprep.subr.mxu0 0.0
  %2972 = vmatpush1.msra.mxu0 0.0
  %2973 = vmatprep.subr.mxu0 0.0
  %2974 = vmatpush1.msra.mxu0 0.0
  %2975 = vmatprep.subr.mxu0 0.0
  %2976 = vmatpush1.msra.mxu0 0.0
  %2977 = vmatprep.subr.mxu0 0.0
  %2978 = vmatpush1.msra.mxu0 0.0
  %2979 = vmatprep.subr.mxu0 0.0
  %2980 = vmatpush1.msra.mxu0 0.0
  %2981 = vmatprep.subr.mxu0 0.0
  %2982 = vmatpush1.msra.mxu0 0.0
  %2983 = vmatprep.subr.mxu0 0.0
  %2984 = vmatpush1.msra.mxu0 0.0
  %2985 = vmatprep.subr.mxu0 0.0
  %2986 = vmatpush1.msra.mxu0 0.0
  %2987 = vmatprep.subr.mxu0 0.0
  %2988 = vmatpush1.msra.mxu0 0.0
  %2989 = vmatprep.subr.mxu0 0.0
  %2990 = vmatpush1.msra.mxu0 0.0
  %2991 = vmatprep.subr.mxu0 0.0
  %2992 = vmatpush1.msra.mxu0 %v2194
  %2993 = vmatprep.subr.mxu0 0.0
  %2994 = vmatpush1.msra.mxu0 %v2193
  %2995 = vmatprep.subr.mxu0 0.0
  %2996 = vmatpush1.msra.mxu0 %v2192
  %2997 = vmatprep.subr.mxu0 0.0
  %2998 = vmatpush1.msra.mxu0 %v2191
  %2999 = vmatprep.subr.mxu0 0.0
  %3000 = vmatpush2.msra.mxu0 0.0
  %3001 = vmatprep.subr.mxu0 0.0
  %3002 = vmatpush2.msra.mxu0 0.0
  %3003 = vmatprep.subr.mxu0 0.0
  %3004 = vmatpush2.msra.mxu0 0.0
  %3005 = vmatprep.subr.mxu0 0.0
  %3006 = vmatpush2.msra.mxu0 0.0
  %3007 = vmatprep.subr.mxu0 0.0
  %3008 = vmatpush2.msra.mxu0 0.0
  %3009 = vmatprep.subr.mxu0 0.0
  %3010 = vmatpush2.msra.mxu0 0.0
  %3011 = vmatprep.subr.mxu0 0.0
  %3012 = vmatpush2.msra.mxu0 0.0
  %3013 = vmatprep.subr.mxu0 0.0
  %3014 = vmatpush2.msra.mxu0 0.0
  %3015 = vmatprep.subr.mxu0 0.0
  %3016 = vmatpush2.msra.mxu0 0.0
  %3017 = vmatprep.subr.mxu0 0.0
  %3018 = vmatpush2.msra.mxu0 0.0
  %3019 = vmatprep.subr.mxu0 0.0
  %3020 = vmatpush2.msra.mxu0 0.0
  %3021 = vmatprep.subr.mxu0 0.0
  %3022 = vmatpush2.msra.mxu0 0.0
  %3023 = vmatprep.subr.mxu0 0.0
  %3024 = vmatpush2.msra.mxu0 0.0
  %3025 = vmatprep.subr.mxu0 0.0
  %3026 = vmatpush2.msra.mxu0 0.0
  %3027 = vmatprep.subr.mxu0 0.0
  %3028 = vmatpush2.msra.mxu0 0.0
  %3029 = vmatprep.subr.mxu0 0.0
  %3030 = vmatpush2.msra.mxu0 0.0
  %3031 = vmatprep.mubr.f32.mxu0 0.0
  %3032 = vmatmul.mubr.f32.gmra.mxu0 %v2965
  %v3033 = vpop.f32.mrf.mxu0
  %v3034 = vadd.f32 0.0, %v3033
  %v3035 = vpop.f32.mrf.mxu0
  %3036 = vdwg.mxu0
  %v3037 = vadd.f32 %v2963, %v3034
  %v3038 = vtanh.pop %v3037
  %v3039 = vsel %vm841, %v3038, %v2885
  %v3040 = vld [vmem:[#allocation3 + $0x10] sm:$0xff]
  %v3042 = vsel %vm315, %v2962, 0
  %3044 = vmatprep.subr.mxu0 0.0
  %3045 = vmatpush1.msra.mxu0 0.0
  %3046 = vmatprep.subr.mxu0 0.0
  %3047 = vmatpush1.msra.mxu0 0.0
  %3048 = vmatprep.subr.mxu0 0.0
  %3049 = vmatpush1.msra.mxu0 0.0
  %3050 = vmatprep.subr.mxu0 0.0
  %3051 = vmatpush1.msra.mxu0 0.0
  %3052 = vmatprep.subr.mxu0 0.0
  %3053 = vmatpush1.msra.mxu0 0.0
  %3054 = vmatprep.subr.mxu0 0.0
  %3055 = vmatpush1.msra.mxu0 0.0
  %3056 = vmatprep.subr.mxu0 0.0
  %3057 = vmatpush1.msra.mxu0 0.0
  %3058 = vmatprep.subr.mxu0 0.0
  %3059 = vmatpush1.msra.mxu0 0.0
  %3060 = vmatprep.subr.mxu0 0.0
  %3061 = vmatpush1.msra.mxu0 0.0
  %3062 = vmatprep.subr.mxu0 0.0
  %3063 = vmatpush1.msra.mxu0 0.0
  %3064 = vmatprep.subr.mxu0 0.0
  %3065 = vmatpush1.msra.mxu0 0.0
  %3066 = vmatprep.subr.mxu0 0.0
  %3067 = vmatpush1.msra.mxu0 0.0
  %3068 = vmatprep.subr.mxu0 0.0
  %3069 = vmatpush1.msra.mxu0 %v2198
  %3070 = vmatprep.subr.mxu0 0.0
  %3071 = vmatpush1.msra.mxu0 %v2197
  %3072 = vmatprep.subr.mxu0 0.0
  %3073 = vmatpush1.msra.mxu0 %v2196
  %3074 = vmatprep.subr.mxu0 0.0
  %3075 = vmatpush1.msra.mxu0 %v2195
  %3076 = vmatprep.subr.mxu0 0.0
  %3077 = vmatpush2.msra.mxu0 0.0
  %3078 = vmatprep.subr.mxu0 0.0
  %3079 = vmatpush2.msra.mxu0 0.0
  %3080 = vmatprep.subr.mxu0 0.0
  %3081 = vmatpush2.msra.mxu0 0.0
  %3082 = vmatprep.subr.mxu0 0.0
  %3083 = vmatpush2.msra.mxu0 0.0
  %3084 = vmatprep.subr.mxu0 0.0
  %3085 = vmatpush2.msra.mxu0 0.0
  %3086 = vmatprep.subr.mxu0 0.0
  %3087 = vmatpush2.msra.mxu0 0.0
  %3088 = vmatprep.subr.mxu0 0.0
  %3089 = vmatpush2.msra.mxu0 0.0
  %3090 = vmatprep.subr.mxu0 0.0
  %3091 = vmatpush2.msra.mxu0 0.0
  %3092 = vmatprep.subr.mxu0 0.0
  %3093 = vmatpush2.msra.mxu0 0.0
  %3094 = vmatprep.subr.mxu0 0.0
  %3095 = vmatpush2.msra.mxu0 0.0
  %3096 = vmatprep.subr.mxu0 0.0
  %3097 = vmatpush2.msra.mxu0 0.0
  %3098 = vmatprep.subr.mxu0 0.0
  %3099 = vmatpush2.msra.mxu0 0.0
  %3100 = vmatprep.subr.mxu0 0.0
  %3101 = vmatpush2.msra.mxu0 0.0
  %3102 = vmatprep.subr.mxu0 0.0
  %3103 = vmatpush2.msra.mxu0 0.0
  %3104 = vmatprep.subr.mxu0 0.0
  %3105 = vmatpush2.msra.mxu0 0.0
  %3106 = vmatprep.subr.mxu0 0.0
  %3107 = vmatpush2.msra.mxu0 0.0
  %3108 = vmatprep.mubr.f32.mxu0 0.0
  %3109 = vmatmul.mubr.f32.gmra.mxu0 %v3042
  %v3110 = vpop.f32.mrf.mxu0
  %v3111 = vadd.f32 0.0, %v3110
  %v3112 = vpop.f32.mrf.mxu0
  %3113 = vdwg.mxu0
  %v3114 = vadd.f32 %v3040, %v3111
  %v3115 = vtanh.pop %v3114
  %v3116 = vsel %vm756, %v3115, %v2962
  %v3117 = vld [vmem:[#allocation2 + $0x30] sm:$0xff]
  %v3119 = vsel %vm315, %v3039, 0
  %3121 = vmatprep.subr.mxu0 0.0
  %3122 = vmatpush1.msra.mxu0 0.0
  %3123 = vmatprep.subr.mxu0 0.0
  %3124 = vmatpush1.msra.mxu0 0.0
  %3125 = vmatprep.subr.mxu0 0.0
  %3126 = vmatpush1.msra.mxu0 0.0
  %3127 = vmatprep.subr.mxu0 0.0
  %3128 = vmatpush1.msra.mxu0 0.0
  %3129 = vmatprep.subr.mxu0 0.0
  %3130 = vmatpush1.msra.mxu0 0.0
  %3131 = vmatprep.subr.mxu0 0.0
  %3132 = vmatpush1.msra.mxu0 0.0
  %3133 = vmatprep.subr.mxu0 0.0
  %3134 = vmatpush1.msra.mxu0 0.0
  %3135 = vmatprep.subr.mxu0 0.0
  %3136 = vmatpush1.msra.mxu0 0.0
  %3137 = vmatprep.subr.mxu0 0.0
  %3138 = vmatpush1.msra.mxu0 0.0
  %3139 = vmatprep.subr.mxu0 0.0
  %3140 = vmatpush1.msra.mxu0 0.0
  %3141 = vmatprep.subr.mxu0 0.0
  %3142 = vmatpush1.msra.mxu0 0.0
  %3143 = vmatprep.subr.mxu0 0.0
  %3144 = vmatpush1.msra.mxu0 0.0
  %3145 = vmatprep.subr.mxu0 0.0
  %3146 = vmatpush1.msra.mxu0 %v2194
  %3147 = vmatprep.subr.mxu0 0.0
  %3148 = vmatpush1.msra.mxu0 %v2193
  %3149 = vmatprep.subr.mxu0 0.0
  %3150 = vmatpush1.msra.mxu0 %v2192
  %3151 = vmatprep.subr.mxu0 0.0
  %3152 = vmatpush1.msra.mxu0 %v2191
  %3153 = vmatprep.subr.mxu0 0.0
  %3154 = vmatpush2.msra.mxu0 0.0
  %3155 = vmatprep.subr.mxu0 0.0
  %3156 = vmatpush2.msra.mxu0 0.0
  %3157 = vmatprep.subr.mxu0 0.0
  %3158 = vmatpush2.msra.mxu0 0.0
  %3159 = vmatprep.subr.mxu0 0.0
  %3160 = vmatpush2.msra.mxu0 0.0
  %3161 = vmatprep.subr.mxu0 0.0
  %3162 = vmatpush2.msra.mxu0 0.0
  %3163 = vmatprep.subr.mxu0 0.0
  %3164 = vmatpush2.msra.mxu0 0.0
  %3165 = vmatprep.subr.mxu0 0.0
  %3166 = vmatpush2.msra.mxu0 0.0
  %3167 = vmatprep.subr.mxu0 0.0
  %3168 = vmatpush2.msra.mxu0 0.0
  %3169 = vmatprep.subr.mxu0 0.0
  %3170 = vmatpush2.msra.mxu0 0.0
  %3171 = vmatprep.subr.mxu0 0.0
  %3172 = vmatpush2.msra.mxu0 0.0
  %3173 = vmatprep.subr.mxu0 0.0
  %3174 = vmatpush2.msra.mxu0 0.0
  %3175 = vmatprep.subr.mxu0 0.0
  %3176 = vmatpush2.msra.mxu0 0.0
  %3177 = vmatprep.subr.mxu0 0.0
  %3178 = vmatpush2.msra.mxu0 0.0
  %3179 = vmatprep.subr.mxu0 0.0
  %3180 = vmatpush2.msra.mxu0 0.0
  %3181 = vmatprep.subr.mxu0 0.0
  %3182 = vmatpush2.msra.mxu0 0.0
  %3183 = vmatprep.subr.mxu0 0.0
  %3184 = vmatpush2.msra.mxu0 0.0
  %3185 = vmatprep.mubr.f32.mxu0 0.0
  %3186 = vmatmul.mubr.f32.gmra.mxu0 %v3119
  %v3187 = vpop.f32.mrf.mxu0
  %v3188 = vadd.f32 0.0, %v3187
  %v3189 = vpop.f32.mrf.mxu0
  %3190 = vdwg.mxu0
  %v3191 = vadd.f32 %v3117, %v3188
  %v3192 = vtanh.pop %v3191
  %v3193 = vsel %vm671, %v3192, %v3039
  %v3194 = vld [vmem:[#allocation3 + $0x8] sm:$0xff]
  %v3196 = vsel %vm315, %v3116, 0
  %3198 = vmatprep.subr.mxu0 0.0
  %3199 = vmatpush1.msra.mxu0 0.0
  %3200 = vmatprep.subr.mxu0 0.0
  %3201 = vmatpush1.msra.mxu0 0.0
  %3202 = vmatprep.subr.mxu0 0.0
  %3203 = vmatpush1.msra.mxu0 0.0
  %3204 = vmatprep.subr.mxu0 0.0
  %3205 = vmatpush1.msra.mxu0 0.0
  %3206 = vmatprep.subr.mxu0 0.0
  %3207 = vmatpush1.msra.mxu0 0.0
  %3208 = vmatprep.subr.mxu0 0.0
  %3209 = vmatpush1.msra.mxu0 0.0
  %3210 = vmatprep.subr.mxu0 0.0
  %3211 = vmatpush1.msra.mxu0 0.0
  %3212 = vmatprep.subr.mxu0 0.0
  %3213 = vmatpush1.msra.mxu0 0.0
  %3214 = vmatprep.subr.mxu0 0.0
  %3215 = vmatpush1.msra.mxu0 0.0
  %3216 = vmatprep.subr.mxu0 0.0
  %3217 = vmatpush1.msra.mxu0 0.0
  %3218 = vmatprep.subr.mxu0 0.0
  %3219 = vmatpush1.msra.mxu0 0.0
  %3220 = vmatprep.subr.mxu0 0.0
  %3221 = vmatpush1.msra.mxu0 0.0
  %3222 = vmatprep.subr.mxu0 0.0
  %3223 = vmatpush1.msra.mxu0 %v2198
  %3224 = vmatprep.subr.mxu0 0.0
  %3225 = vmatpush1.msra.mxu0 %v2197
  %3226 = vmatprep.subr.mxu0 0.0
  %3227 = vmatpush1.msra.mxu0 %v2196
  %3228 = vmatprep.subr.mxu0 0.0
  %3229 = vmatpush1.msra.mxu0 %v2195
  %3230 = vmatprep.subr.mxu0 0.0
  %3231 = vmatpush2.msra.mxu0 0.0
  %3232 = vmatprep.subr.mxu0 0.0
  %3233 = vmatpush2.msra.mxu0 0.0
  %3234 = vmatprep.subr.mxu0 0.0
  %3235 = vmatpush2.msra.mxu0 0.0
  %3236 = vmatprep.subr.mxu0 0.0
  %3237 = vmatpush2.msra.mxu0 0.0
  %3238 = vmatprep.subr.mxu0 0.0
  %3239 = vmatpush2.msra.mxu0 0.0
  %3240 = vmatprep.subr.mxu0 0.0
  %3241 = vmatpush2.msra.mxu0 0.0
  %3242 = vmatprep.subr.mxu0 0.0
  %3243 = vmatpush2.msra.mxu0 0.0
  %3244 = vmatprep.subr.mxu0 0.0
  %3245 = vmatpush2.msra.mxu0 0.0
  %3246 = vmatprep.subr.mxu0 0.0
  %3247 = vmatpush2.msra.mxu0 0.0
  %3248 = vmatprep.subr.mxu0 0.0
  %3249 = vmatpush2.msra.mxu0 0.0
  %3250 = vmatprep.subr.mxu0 0.0
  %3251 = vmatpush2.msra.mxu0 0.0
  %3252 = vmatprep.subr.mxu0 0.0
  %3253 = vmatpush2.msra.mxu0 0.0
  %3254 = vmatprep.subr.mxu0 0.0
  %3255 = vmatpush2.msra.mxu0 0.0
  %3256 = vmatprep.subr.mxu0 0.0
  %3257 = vmatpush2.msra.mxu0 0.0
  %3258 = vmatprep.subr.mxu0 0.0
  %3259 = vmatpush2.msra.mxu0 0.0
  %3260 = vmatprep.subr.mxu0 0.0
  %3261 = vmatpush2.msra.mxu0 0.0
  %3262 = vmatprep.mubr.f32.mxu0 0.0
  %3263 = vmatmul.mubr.f32.gmra.mxu0 %v3196
  %v3264 = vpop.f32.mrf.mxu0
  %v3265 = vadd.f32 0.0, %v3264
  %v3266 = vpop.f32.mrf.mxu0
  %3267 = vdwg.mxu0
  %v3268 = vadd.f32 %v3194, %v3265
  %v3269 = vtanh.pop %v3268
  %v3270 = vsel %vm586, %v3269, %v3116
  %v3271 = vld [vmem:[#allocation2 + $0x38] sm:$0xff]
  %v3273 = vsel %vm315, %v3193, 0
  %3275 = vmatprep.subr.mxu0 0.0
  %3276 = vmatpush1.msra.mxu0 0.0
  %3277 = vmatprep.subr.mxu0 0.0
  %3278 = vmatpush1.msra.mxu0 0.0
  %3279 = vmatprep.subr.mxu0 0.0
  %3280 = vmatpush1.msra.mxu0 0.0
  %3281 = vmatprep.subr.mxu0 0.0
  %3282 = vmatpush1.msra.mxu0 0.0
  %3283 = vmatprep.subr.mxu0 0.0
  %3284 = vmatpush1.msra.mxu0 0.0
  %3285 = vmatprep.subr.mxu0 0.0
  %3286 = vmatpush1.msra.mxu0 0.0
  %3287 = vmatprep.subr.mxu0 0.0
  %3288 = vmatpush1.msra.mxu0 0.0
  %3289 = vmatprep.subr.mxu0 0.0
  %3290 = vmatpush1.msra.mxu0 0.0
  %3291 = vmatprep.subr.mxu0 0.0
  %3292 = vmatpush1.msra.mxu0 0.0
  %3293 = vmatprep.subr.mxu0 0.0
  %3294 = vmatpush1.msra.mxu0 0.0
  %3295 = vmatprep.subr.mxu0 0.0
  %3296 = vmatpush1.msra.mxu0 0.0
  %3297 = vmatprep.subr.mxu0 0.0
  %3298 = vmatpush1.msra.mxu0 0.0
  %3299 = vmatprep.subr.mxu0 0.0
  %3300 = vmatpush1.msra.mxu0 %v2194
  %3301 = vmatprep.subr.mxu0 0.0
  %3302 = vmatpush1.msra.mxu0 %v2193
  %3303 = vmatprep.subr.mxu0 0.0
  %3304 = vmatpush1.msra.mxu0 %v2192
  %3305 = vmatprep.subr.mxu0 0.0
  %3306 = vmatpush1.msra.mxu0 %v2191
  %3307 = vmatprep.subr.mxu0 0.0
  %3308 = vmatpush2.msra.mxu0 0.0
  %3309 = vmatprep.subr.mxu0 0.0
  %3310 = vmatpush2.msra.mxu0 0.0
  %3311 = vmatprep.subr.mxu0 0.0
  %3312 = vmatpush2.msra.mxu0 0.0
  %3313 = vmatprep.subr.mxu0 0.0
  %3314 = vmatpush2.msra.mxu0 0.0
  %3315 = vmatprep.subr.mxu0 0.0
  %3316 = vmatpush2.msra.mxu0 0.0
  %3317 = vmatprep.subr.mxu0 0.0
  %3318 = vmatpush2.msra.mxu0 0.0
  %3319 = vmatprep.subr.mxu0 0.0
  %3320 = vmatpush2.msra.mxu0 0.0
  %3321 = vmatprep.subr.mxu0 0.0
  %3322 = vmatpush2.msra.mxu0 0.0
  %3323 = vmatprep.subr.mxu0 0.0
  %3324 = vmatpush2.msra.mxu0 0.0
  %3325 = vmatprep.subr.mxu0 0.0
  %3326 = vmatpush2.msra.mxu0 0.0
  %3327 = vmatprep.subr.mxu0 0.0
  %3328 = vmatpush2.msra.mxu0 0.0
  %3329 = vmatprep.subr.mxu0 0.0
  %3330 = vmatpush2.msra.mxu0 0.0
  %3331 = vmatprep.subr.mxu0 0.0
  %3332 = vmatpush2.msra.mxu0 0.0
  %3333 = vmatprep.subr.mxu0 0.0
  %3334 = vmatpush2.msra.mxu0 0.0
  %3335 = vmatprep.subr.mxu0 0.0
  %3336 = vmatpush2.msra.mxu0 0.0
  %3337 = vmatprep.subr.mxu0 0.0
  %3338 = vmatpush2.msra.mxu0 0.0
  %3339 = vmatprep.mubr.f32.mxu0 0.0
  %3340 = vmatmul.mubr.f32.gmra.mxu0 %v3273
  %v3341 = vpop.f32.mrf.mxu0
  %v3342 = vadd.f32 0.0, %v3341
  %v3343 = vpop.f32.mrf.mxu0
  %3344 = vdwg.mxu0
  %v3345 = vadd.f32 %v3271, %v3342
  %v3346 = vtanh.pop %v3345
  %v3347 = vsel %vm502, %v3346, %v3193
  %v3348 = vld [vmem:[#allocation3] sm:$0xff]
  %v3350 = vsel %vm315, %v3270, 0
  %3352 = vmatprep.subr.mxu0 0.0
  %3353 = vmatpush1.msra.mxu0 0.0
  %3354 = vmatprep.subr.mxu0 0.0
  %3355 = vmatpush1.msra.mxu0 0.0
  %3356 = vmatprep.subr.mxu0 0.0
  %3357 = vmatpush1.msra.mxu0 0.0
  %3358 = vmatprep.subr.mxu0 0.0
  %3359 = vmatpush1.msra.mxu0 0.0
  %3360 = vmatprep.subr.mxu0 0.0
  %3361 = vmatpush1.msra.mxu0 0.0
  %3362 = vmatprep.subr.mxu0 0.0
  %3363 = vmatpush1.msra.mxu0 0.0
  %3364 = vmatprep.subr.mxu0 0.0
  %3365 = vmatpush1.msra.mxu0 0.0
  %3366 = vmatprep.subr.mxu0 0.0
  %3367 = vmatpush1.msra.mxu0 0.0
  %3368 = vmatprep.subr.mxu0 0.0
  %3369 = vmatpush1.msra.mxu0 0.0
  %3370 = vmatprep.subr.mxu0 0.0
  %3371 = vmatpush1.msra.mxu0 0.0
  %3372 = vmatprep.subr.mxu0 0.0
  %3373 = vmatpush1.msra.mxu0 0.0
  %3374 = vmatprep.subr.mxu0 0.0
  %3375 = vmatpush1.msra.mxu0 0.0
  %3376 = vmatprep.subr.mxu0 0.0
  %3377 = vmatpush1.msra.mxu0 %v2198
  %3378 = vmatprep.subr.mxu0 0.0
  %3379 = vmatpush1.msra.mxu0 %v2197
  %3380 = vmatprep.subr.mxu0 0.0
  %3381 = vmatpush1.msra.mxu0 %v2196
  %3382 = vmatprep.subr.mxu0 0.0
  %3383 = vmatpush1.msra.mxu0 %v2195
  %3384 = vmatprep.subr.mxu0 0.0
  %3385 = vmatpush2.msra.mxu0 0.0
  %3386 = vmatprep.subr.mxu0 0.0
  %3387 = vmatpush2.msra.mxu0 0.0
  %3388 = vmatprep.subr.mxu0 0.0
  %3389 = vmatpush2.msra.mxu0 0.0
  %3390 = vmatprep.subr.mxu0 0.0
  %3391 = vmatpush2.msra.mxu0 0.0
  %3392 = vmatprep.subr.mxu0 0.0
  %3393 = vmatpush2.msra.mxu0 0.0
  %3394 = vmatprep.subr.mxu0 0.0
  %3395 = vmatpush2.msra.mxu0 0.0
  %3396 = vmatprep.subr.mxu0 0.0
  %3397 = vmatpush2.msra.mxu0 0.0
  %3398 = vmatprep.subr.mxu0 0.0
  %3399 = vmatpush2.msra.mxu0 0.0
  %3400 = vmatprep.subr.mxu0 0.0
  %3401 = vmatpush2.msra.mxu0 0.0
  %3402 = vmatprep.subr.mxu0 0.0
  %3403 = vmatpush2.msra.mxu0 0.0
  %3404 = vmatprep.subr.mxu0 0.0
  %3405 = vmatpush2.msra.mxu0 0.0
  %3406 = vmatprep.subr.mxu0 0.0
  %3407 = vmatpush2.msra.mxu0 0.0
  %3408 = vmatprep.subr.mxu0 0.0
  %3409 = vmatpush2.msra.mxu0 0.0
  %3410 = vmatprep.subr.mxu0 0.0
  %3411 = vmatpush2.msra.mxu0 0.0
  %3412 = vmatprep.subr.mxu0 0.0
  %3413 = vmatpush2.msra.mxu0 0.0
  %3414 = vmatprep.subr.mxu0 0.0
  %3415 = vmatpush2.msra.mxu0 0.0
  %3416 = vmatprep.mubr.f32.mxu0 0.0
  %3417 = vmatmul.mubr.f32.gmra.mxu0 %v3350
  %v3418 = vpop.f32.mrf.mxu0
  %v3419 = vadd.f32 0.0, %v3418
  %v3420 = vpop.f32.mrf.mxu0
  %3421 = vdwg.mxu0
  %v3422 = vadd.f32 %v3348, %v3419
  %v3423 = vtanh.pop %v3422
  %v3424 = vsel %vm421, %v3423, %v3270
  %v3425 = vld [vmem:[%s14] sm:$0xff]
  %v3426 = vld [vmem:[%s14 + $0x8] sm:$0xff]
  %v3427 = vld [vmem:[%s14 + $0x10] sm:$0xff]
  %v3428 = vld [vmem:[%s14 + $0x18] sm:$0xff]
  %v3429 = vld [vmem:[%s15] sm:$0x1]
  %v3431 = vlaneseq
  %v3432 = vshrl.u32 %v3431, 7
  %v3433 = vsub.s32 0, %v3432
  %v3434 = vrot.slane %v3429, %v3433
  %v3437 = vsel %vm315, %v3347, 0
  %3439 = vmatprep.subr.mxu0 0.0
  %3440 = vmatpush1.msra.mxu0 0.0
  %3441 = vmatprep.subr.mxu0 0.0
  %3442 = vmatpush1.msra.mxu0 0.0
  %3443 = vmatprep.subr.mxu0 0.0
  %3444 = vmatpush1.msra.mxu0 0.0
  %3445 = vmatprep.subr.mxu0 0.0
  %3446 = vmatpush1.msra.mxu0 0.0
  %3447 = vmatprep.subr.mxu0 0.0
  %3448 = vmatpush1.msra.mxu0 0.0
  %3449 = vmatprep.subr.mxu0 0.0
  %3450 = vmatpush1.msra.mxu0 0.0
  %3451 = vmatprep.subr.mxu0 0.0
  %3452 = vmatpush1.msra.mxu0 0.0
  %3453 = vmatprep.subr.mxu0 0.0
  %3454 = vmatpush1.msra.mxu0 0.0
  %3455 = vmatprep.subr.mxu0 0.0
  %3456 = vmatpush1.msra.mxu0 0.0
  %3457 = vmatprep.subr.mxu0 0.0
  %3458 = vmatpush1.msra.mxu0 0.0
  %3459 = vmatprep.subr.mxu0 0.0
  %3460 = vmatpush1.msra.mxu0 0.0
  %3461 = vmatprep.subr.mxu0 0.0
  %3462 = vmatpush1.msra.mxu0 0.0
  %3463 = vmatprep.subr.mxu0 0.0
  %3464 = vmatpush1.msra.mxu0 %v3428
  %3465 = vmatprep.subr.mxu0 0.0
  %3466 = vmatpush1.msra.mxu0 %v3427
  %3467 = vmatprep.subr.mxu0 0.0
  %3468 = vmatpush1.msra.mxu0 %v3426
  %3469 = vmatprep.subr.mxu0 0.0
  %3470 = vmatpush1.msra.mxu0 %v3425
  %3471 = vmatprep.subr.mxu0 0.0
  %3472 = vmatpush2.msra.mxu0 0.0
  %3473 = vmatprep.subr.mxu0 0.0
  %3474 = vmatpush2.msra.mxu0 0.0
  %3475 = vmatprep.subr.mxu0 0.0
  %3476 = vmatpush2.msra.mxu0 0.0
  %3477 = vmatprep.subr.mxu0 0.0
  %3478 = vmatpush2.msra.mxu0 0.0
  %3479 = vmatprep.subr.mxu0 0.0
  %3480 = vmatpush2.msra.mxu0 0.0
  %3481 = vmatprep.subr.mxu0 0.0
  %3482 = vmatpush2.msra.mxu0 0.0
  %3483 = vmatprep.subr.mxu0 0.0
  %3484 = vmatpush2.msra.mxu0 0.0
  %3485 = vmatprep.subr.mxu0 0.0
  %3486 = vmatpush2.msra.mxu0 0.0
  %3487 = vmatprep.subr.mxu0 0.0
  %3488 = vmatpush2.msra.mxu0 0.0
  %3489 = vmatprep.subr.mxu0 0.0
  %3490 = vmatpush2.msra.mxu0 0.0
  %3491 = vmatprep.subr.mxu0 0.0
  %3492 = vmatpush2.msra.mxu0 0.0
  %3493 = vmatprep.subr.mxu0 0.0
  %3494 = vmatpush2.msra.mxu0 0.0
  %3495 = vmatprep.subr.mxu0 0.0
  %3496 = vmatpush2.msra.mxu0 0.0
  %3497 = vmatprep.subr.mxu0 0.0
  %3498 = vmatpush2.msra.mxu0 0.0
  %3499 = vmatprep.subr.mxu0 0.0
  %3500 = vmatpush2.msra.mxu0 0.0
  %3501 = vmatprep.subr.mxu0 0.0
  %3502 = vmatpush2.msra.mxu0 0.0
  %3503 = vmatprep.mubr.f32.mxu0 0.0
  %3504 = vmatmul.mubr.f32.gmra.mxu0 %v3437
  %v3505 = vpop.f32.mrf.mxu0
  %v3506 = vadd.f32 %v3434, %v3505
  %v3507 = vpop.f32.mrf.mxu0
  %3508 = vdwg.mxu0
  %v3509 = vld [vmem:[%s14 + $0x20] sm:$0xff]
  %v3510 = vld [vmem:[%s14 + $0x28] sm:$0xff]
  %v3511 = vld [vmem:[%s14 + $0x30] sm:$0xff]
  %v3512 = vld [vmem:[%s14 + $0x38] sm:$0xff]
  %v3514 = vsel %vm315, %v3424, 0
  %3516 = vmatprep.subr.mxu0 0.0
  %3517 = vmatpush1.msra.mxu0 0.0
  %3518 = vmatprep.subr.mxu0 0.0
  %3519 = vmatpush1.msra.mxu0 0.0
  %3520 = vmatprep.subr.mxu0 0.0
  %3521 = vmatpush1.msra.mxu0 0.0
  %3522 = vmatprep.subr.mxu0 0.0
  %3523 = vmatpush1.msra.mxu0 0.0
  %3524 = vmatprep.subr.mxu0 0.0
  %3525 = vmatpush1.msra.mxu0 0.0
  %3526 = vmatprep.subr.mxu0 0.0
  %3527 = vmatpush1.msra.mxu0 0.0
  %3528 = vmatprep.subr.mxu0 0.0
  %3529 = vmatpush1.msra.mxu0 0.0
  %3530 = vmatprep.subr.mxu0 0.0
  %3531 = vmatpush1.msra.mxu0 0.0
  %3532 = vmatprep.subr.mxu0 0.0
  %3533 = vmatpush1.msra.mxu0 0.0
  %3534 = vmatprep.subr.mxu0 0.0
  %3535 = vmatpush1.msra.mxu0 0.0
  %3536 = vmatprep.subr.mxu0 0.0
  %3537 = vmatpush1.msra.mxu0 0.0
  %3538 = vmatprep.subr.mxu0 0.0
  %3539 = vmatpush1.msra.mxu0 0.0
  %3540 = vmatprep.subr.mxu0 0.0
  %3541 = vmatpush1.msra.mxu0 %v3512
  %3542 = vmatprep.subr.mxu0 0.0
  %3543 = vmatpush1.msra.mxu0 %v3511
  %3544 = vmatprep.subr.mxu0 0.0
  %3545 = vmatpush1.msra.mxu0 %v3510
  %3546 = vmatprep.subr.mxu0 0.0
  %3547 = vmatpush1.msra.mxu0 %v3509
  %3548 = vmatprep.subr.mxu0 0.0
  %3549 = vmatpush2.msra.mxu0 0.0
  %3550 = vmatprep.subr.mxu0 0.0
  %3551 = vmatpush2.msra.mxu0 0.0
  %3552 = vmatprep.subr.mxu0 0.0
  %3553 = vmatpush2.msra.mxu0 0.0
  %3554 = vmatprep.subr.mxu0 0.0
  %3555 = vmatpush2.msra.mxu0 0.0
  %3556 = vmatprep.subr.mxu0 0.0
  %3557 = vmatpush2.msra.mxu0 0.0
  %3558 = vmatprep.subr.mxu0 0.0
  %3559 = vmatpush2.msra.mxu0 0.0
  %3560 = vmatprep.subr.mxu0 0.0
  %3561 = vmatpush2.msra.mxu0 0.0
  %3562 = vmatprep.subr.mxu0 0.0
  %3563 = vmatpush2.msra.mxu0 0.0
  %3564 = vmatprep.subr.mxu0 0.0
  %3565 = vmatpush2.msra.mxu0 0.0
  %3566 = vmatprep.subr.mxu0 0.0
  %3567 = vmatpush2.msra.mxu0 0.0
  %3568 = vmatprep.subr.mxu0 0.0
  %3569 = vmatpush2.msra.mxu0 0.0
  %3570 = vmatprep.subr.mxu0 0.0
  %3571 = vmatpush2.msra.mxu0 0.0
  %3572 = vmatprep.subr.mxu0 0.0
  %3573 = vmatpush2.msra.mxu0 0.0
  %3574 = vmatprep.subr.mxu0 0.0
  %3575 = vmatpush2.msra.mxu0 0.0
  %3576 = vmatprep.subr.mxu0 0.0
  %3577 = vmatpush2.msra.mxu0 0.0
  %3578 = vmatprep.subr.mxu0 0.0
  %3579 = vmatpush2.msra.mxu0 0.0
  %3580 = vmatprep.mubr.f32.mxu0 0.0
  %3581 = vmatmul.mubr.f32.gmra.mxu0 %v3514
  %v3582 = vpop.f32.mrf.mxu0
  %v3583 = vadd.f32 0.0, %v3582
  %v3584 = vpop.f32.mrf.mxu0
  %3585 = vdwg.mxu0
  %v3586 = vadd.f32 %v3506, %v3583
  %vm3587 = vcmask 31744
  %3588 = vst.msk [vmem:[%s16] sm:$0xff] %vm3587, %v3586
  // Predicated region
  $region66: #{tpu_custom_call.1} parent=0 // pred_check
    _
  $region67: #{tpu_custom_call.1} parent=0 // pred_check_branch
    %3590 = sbr.rel (0) target = $region69
  $region68: #{tpu_custom_call.1} parent=0 // pred_region
    _
  $region69: #{tpu_custom_call.1} parent=0 // pred_fallthru
    _
  // Predicated region
  $region70: #{tpu_custom_call.1} parent=0 // pred_check
    _
  $region71: #{tpu_custom_call.1} parent=0 // pred_check_branch
    %3592 = sbr.rel (0) target = $region73
  $region72: #{tpu_custom_call.1} parent=0 // pred_region
    _
  $region73: #{tpu_custom_call.1} parent=0 // pred_fallthru
    _

</llo_original>
